<compile_context>
chip_gen: v7x
topology: tpu7x:2x2x1
jax: 0.10.0
libtpu: 0.0.40
codegen_flags: <defaults>
</compile_context>

<pallas_src>
import functools
import math

import jax
import jax.numpy as jnp
from jax.experimental import pallas as pl
from jax.experimental.pallas import tpu as pltpu

LN_EPS = 1e-5   # nn.LayerNorm default
BN_EPS = 1e-5   # nn.BatchNorm1d default


# ----------------------------------------------------------------------------
# In-kernel helpers (f32 elementwise math)
# ----------------------------------------------------------------------------
def _layer_norm(x, g, b):
    mu = jnp.mean(x, axis=-1, keepdims=True)
    var = jnp.mean((x - mu) ** 2, axis=-1, keepdims=True)
    return (x - mu) * jax.lax.rsqrt(var + LN_EPS) * g + b


def _elu(x):
    # alpha = 1.0 (nn.ELU default); exp(x)-1 instead of expm1 for Mosaic safety
    return jnp.where(x > 0, x, jnp.exp(x) - 1.0)


# ----------------------------------------------------------------------------
# Fused kernel: DEPTH x TransformerEncoderLayer + encoder head + L1 energy.
# One grid step per batch element; full-array weight blocks stay VMEM-resident.
# ----------------------------------------------------------------------------
def _fused_kernel(x_ref, xxt_ref, mask_ref,
                  wqkv_ref, bqkv_ref, wo_ref, bo_ref, ln1g_ref, ln1b_ref,
                  w1_ref, b1_ref, w2_ref, b2_ref, ln2g_ref, ln2b_ref,
                  w1h_ref, b1h_ref, w2ht_ref, b2ht_ref,
                  out_ref):
    x = x_ref[0]                                    # [N, D] f32 tokens
    depth = wqkv_ref.shape[0]                       # static
    d = x.shape[-1]                                 # static (d_model)
    mask = mask_ref[...]                            # [N, N] additive mask, f32

    bf16 = jnp.bfloat16
    h = x
    for l in range(depth):                          # static unroll (small depth)
        # fused QKV projection (1/sqrt(d) pre-folded into the q weight/bias)
        hb = h.astype(bf16)
        qkv = jnp.dot(hb, wqkv_ref[l],
                      preferred_element_type=jnp.float32) + bqkv_ref[l]   # [N,3D]
        q = qkv[:, :d]
        k = qkv[:, d:2 * d]
        v = qkv[:, 2 * d:]

        # single-head scaled-dot-product attention with additive mask
        scores = jax.lax.dot_general(
            q.astype(bf16), k.astype(bf16),
            (((1,), (1,)), ((), ())),               # q @ k^T
            preferred_element_type=jnp.float32)                           # [N,N]
        scores = scores + mask
        scores = scores - jnp.max(scores, axis=-1, keepdims=True)
        p = jnp.exp(scores)
        attn = p * pl.reciprocal(jnp.sum(p, axis=-1, keepdims=True), approx=True)
        ctx = jnp.dot(attn.astype(bf16), v.astype(bf16),
                      preferred_element_type=jnp.float32)                 # [N,D]
        attn_out = jnp.dot(ctx.astype(bf16), wo_ref[l],
                           preferred_element_type=jnp.float32) + bo_ref[l]

        # post-norm residual blocks (PyTorch default norm_first=False)
        y = _layer_norm(h + attn_out, ln1g_ref[l], ln1b_ref[l])
        ff = jnp.maximum(
            jnp.dot(y.astype(bf16), w1_ref[l],
                    preferred_element_type=jnp.float32) + b1_ref[l], 0.0)
        ff = jnp.dot(ff.astype(bf16), w2_ref[l],
                     preferred_element_type=jnp.float32) + b2_ref[l]
        h = _layer_norm(y + ff, ln2g_ref[l], ln2b_ref[l])

    # encoder head: Linear->BN->ELU->Linear->BN->ELU (BN folded into Linear).
    # Second linear is computed directly in transposed form -> [C, N] so the
    # output store is lane-dense (N = 128 lanes) instead of C=4-wide masked.
    hh = _elu(jnp.dot(h.astype(bf16), w1h_ref[...],
                      preferred_element_type=jnp.float32) + b1h_ref[...])  # [N,D2]
    yh_t = jax.lax.dot_general(
        w2ht_ref[...], hh.astype(bf16),
        (((1,), (1,)), ((), ())),                    # w2ht @ hh^T
        preferred_element_type=jnp.float32) + b2ht_ref[...]                # [C,N]
    yh_t = _elu(yh_t)
    e_t = jnp.abs(yh_t - xxt_ref[0])                 # L1Loss(reduction='none')
    out_ref[0] = jnp.concatenate([yh_t, e_t], axis=0)                      # [2C,N]


# ----------------------------------------------------------------------------
# Full forward pass (glue in plain JAX: reshapes, one-hots, mask transform).
# ----------------------------------------------------------------------------
def spatio_temporal_discriminator_forward(x, mask, params, *, state_size,
                                          state_channels, max_sequence_length):
    assert mask.dtype == jnp.bool_, "mask has to be of type bool"
    assert x.ndim == 3, "input shape should be [B, S, Z]"
    assert x.shape[1] <= max_sequence_length

    B, S, _ = x.shape
    Z, C, L = state_size, state_channels, max_sequence_length
    D = Z + C + L
    N = S * Z

    x4 = x.reshape(B, S, Z, C).astype(jnp.float32)

    # (mask * -inf).nan_to_num(0.0): True -> float32 min, False -> 0.0
    add_mask = jnp.where(mask, jnp.finfo(jnp.float32).min, 0.0).astype(jnp.float32)

    # temporal / spatial one-hot index features
    tmp = jnp.eye(L, dtype=jnp.float32)[:S]                          # [S, L]
    tmp_ind = jnp.broadcast_to(tmp[None, :, None, :], (B, S, Z, L))
    spt = jnp.eye(Z, dtype=jnp.float32)
    spt_ind = jnp.broadcast_to(spt[None, None, :, :], (B, S, Z, Z))
    tokens = jnp.concatenate([x4, tmp_ind, spt_ind], axis=-1).reshape(B, N, D)

    # L1-energy target, pre-transposed to [B, C, N] so the kernel never
    # transposes activations.
    xx_t = x4.reshape(B, N, C).transpose(0, 2, 1)

    def full(arr):
        s = arr.shape
        return pl.BlockSpec(s, lambda b, _n=len(s): (0,) * _n)

    p = params
    weight_args = (p["wqkv"], p["bqkv"], p["wo"], p["bo"], p["ln1g"], p["ln1b"],
                   p["w1"], p["b1"], p["w2"], p["b2"], p["ln2g"], p["ln2b"],
                   p["w1h"], p["b1h"], p["w2ht"], p["b2ht"])

    in_specs = ([pl.BlockSpec((1, N, D), lambda b: (b, 0, 0)),
                 pl.BlockSpec((1, C, N), lambda b: (b, 0, 0)),
                 full(add_mask)]
                + [full(w) for w in weight_args])

    out = pl.pallas_call(
        _fused_kernel,
        out_shape=jax.ShapeDtypeStruct((B, 2 * C, N), jnp.float32),
        grid_spec=pltpu.PrefetchScalarGridSpec(
            num_scalar_prefetch=0, grid=(B,),
            in_specs=in_specs,
            out_specs=pl.BlockSpec((1, 2 * C, N), lambda b: (b, 0, 0))),
        compiler_params=pltpu.CompilerParams(
            dimension_semantics=("parallel",)),   # v7x: one batch elem per TC
    )(tokens, xx_t, add_mask, *weight_args)

    y = out[:, :C, :].transpose(0, 2, 1).reshape(B, S, Z, C)
    e = out[:, C:, :].transpose(0, 2, 1).reshape(B, S, Z, C)
    return y, e


# ----------------------------------------------------------------------------
# Deterministic parameter initialization (synthetic, no checkpoint).
# Weights are stored pre-transposed for x @ W (PyTorch stores W.T).
# ----------------------------------------------------------------------------
def _nrm(key, shape, scale=0.1):
    return jax.random.normal(key, shape, jnp.float32) * scale


def init_layer_params(key, d, f):
    ks = jax.random.split(key, 10)
    return dict(
        wq=_nrm(ks[0], (d, d)), wk=_nrm(ks[1], (d, d)), wv=_nrm(ks[2], (d, d)),
        bq=_nrm(ks[3], (1, d), 0.01), bk=_nrm(ks[4], (1, d), 0.01),
        bv=_nrm(ks[5], (1, d), 0.01),
        wo=_nrm(ks[6], (d, d)), bo=_nrm(ks[7], (1, d), 0.01),
        ln1g=jnp.ones((1, d), jnp.float32), ln1b=jnp.zeros((1, d), jnp.float32),
        w1=_nrm(ks[8], (d, f)), b1=jnp.zeros((1, f), jnp.float32),
        w2=_nrm(ks[9], (f, d)), b2=jnp.zeros((1, d), jnp.float32),
        ln2g=jnp.ones((1, d), jnp.float32), ln2b=jnp.zeros((1, d), jnp.float32),
    )


def init_head_params(key, d, c):
    d2 = d // 2
    ks = jax.random.split(key, 4)
    return dict(
        w1=_nrm(ks[0], (d, d2)), b1=_nrm(ks[1], (1, d2), 0.01),
        g1=jnp.ones((1, d2), jnp.float32), be1=jnp.zeros((1, d2), jnp.float32),
        m1=jnp.zeros((1, d2), jnp.float32), v1=jnp.ones((1, d2), jnp.float32),
        w2=_nrm(ks[2], (d2, c)), b2=_nrm(ks[3], (1, c), 0.01),
        g2=jnp.ones((1, c), jnp.float32), be2=jnp.zeros((1, c), jnp.float32),
        m2=jnp.zeros((1, c), jnp.float32), v2=jnp.ones((1, c), jnp.float32),
    )


def pack_params(layer_params, head_params, d):
    """Stack per-layer params, fuse QKV (+fold 1/sqrt(d) into q), fold eval-mode
    BatchNorm into the head Linears, and cast matmul weights to bf16."""
    scale = 1.0 / math.sqrt(d)

    def stack(fn):
        return jnp.stack([fn(lp) for lp in layer_params], axis=0)

    wqkv = stack(lambda lp: jnp.concatenate(
        [lp["wq"] * scale, lp["wk"], lp["wv"]], axis=1))            # [depth, D, 3D]
    bqkv = stack(lambda lp: jnp.concatenate(
        [lp["bq"] * scale, lp["bk"], lp["bv"]], axis=1))            # [depth, 1, 3D]

    hp = head_params
    s1 = hp["g1"] * jax.lax.rsqrt(hp["v1"] + BN_EPS)                # [1, D2]
    w1h = hp["w1"] * s1
    b1h = (hp["b1"] - hp["m1"]) * s1 + hp["be1"]
    s2 = hp["g2"] * jax.lax.rsqrt(hp["v2"] + BN_EPS)                # [1, C]
    w2ht = (hp["w2"] * s2).T                                        # [C, D2]
    b2h = (hp["b2"] - hp["m2"]) * s2 + hp["be2"]                    # [1, C]

    bf = jnp.bfloat16
    return dict(
        wqkv=wqkv.astype(bf), bqkv=bqkv,
        wo=stack(lambda lp: lp["wo"]).astype(bf),
        bo=stack(lambda lp: lp["bo"]),
        ln1g=stack(lambda lp: lp["ln1g"]), ln1b=stack(lambda lp: lp["ln1b"]),
        w1=stack(lambda lp: lp["w1"]).astype(bf), b1=stack(lambda lp: lp["b1"]),
        w2=stack(lambda lp: lp["w2"]).astype(bf), b2=stack(lambda lp: lp["b2"]),
        ln2g=stack(lambda lp: lp["ln2g"]), ln2b=stack(lambda lp: lp["ln2b"]),
        w1h=w1h.astype(bf), b1h=b1h,
        w2ht=w2ht.astype(bf), b2ht=b2h.reshape(-1, 1),              # [C, 1]
    )


if __name__ == "__main__":
    # module hyper-parameters
    STATE_SIZE = 16        # Z
    STATE_CHANNELS = 4     # C
    MAX_SEQ = 8            # L
    LATENT = 32            # transformer feed-forward size
    DEPTH = 2              # transformer depth

    B, S = 2, 8            # batch, sequence length (S <= MAX_SEQ)
    Z, C, L = STATE_SIZE, STATE_CHANNELS, MAX_SEQ
    D = Z + C + L          # encoder d_model = 28
    N = S * Z              # 128 tokens

    key = jax.random.PRNGKey(0)
    k_x, k_m, k_p = jax.random.split(key, 3)

    x = jax.random.normal(k_x, (B, S, Z * C), jnp.float32)
    mask = jax.random.bernoulli(k_m, 0.1, (N, N))                    # bool [N, N]

    layer_keys = jax.random.split(k_p, DEPTH + 1)
    layer_params = [init_layer_params(layer_keys[i], D, LATENT) for i in range(DEPTH)]
    head_params = init_head_params(layer_keys[DEPTH], D, C)
    params = pack_params(layer_params, head_params, D)

    fwd = jax.jit(functools.partial(
        spatio_temporal_discriminator_forward,
        state_size=Z, state_channels=C, max_sequence_length=L))
    y, e = fwd(x, mask, params)
    jax.block_until_ready((y, e))

    assert y.shape == (B, S, Z, C) and e.shape == (B, S, Z, C)
    assert bool(jnp.all(jnp.isfinite(y))) and bool(jnp.all(e >= 0.0))
    print("KERNEL_OK")
</pallas_src>

<mosaic_0001>
module attributes {stable_mosaic.version = 11 : i64} {
  func.func @_fused_kernel(%arg0: i32, %arg1: memref<1x128x28xf32, #tpu.memory_space<vmem>>, %arg2: memref<1x4x128xf32, #tpu.memory_space<vmem>>, %arg3: memref<128x128xf32, #tpu.memory_space<vmem>>, %arg4: memref<2x28x84xbf16, #tpu.memory_space<vmem>>, %arg5: memref<2x1x84xf32, #tpu.memory_space<vmem>>, %arg6: memref<2x28x28xbf16, #tpu.memory_space<vmem>>, %arg7: memref<2x1x28xf32, #tpu.memory_space<vmem>>, %arg8: memref<2x1x28xf32, #tpu.memory_space<vmem>>, %arg9: memref<2x1x28xf32, #tpu.memory_space<vmem>>, %arg10: memref<2x28x32xbf16, #tpu.memory_space<vmem>>, %arg11: memref<2x1x32xf32, #tpu.memory_space<vmem>>, %arg12: memref<2x32x28xbf16, #tpu.memory_space<vmem>>, %arg13: memref<2x1x28xf32, #tpu.memory_space<vmem>>, %arg14: memref<2x1x28xf32, #tpu.memory_space<vmem>>, %arg15: memref<2x1x28xf32, #tpu.memory_space<vmem>>, %arg16: memref<28x14xbf16, #tpu.memory_space<vmem>>, %arg17: memref<1x14xf32, #tpu.memory_space<vmem>>, %arg18: memref<4x14xbf16, #tpu.memory_space<vmem>>, %arg19: memref<4x1xf32, #tpu.memory_space<vmem>>, %arg20: memref<1x8x128xf32, #tpu.memory_space<vmem>>) attributes {dimension_semantics = [#tpu.dimension_semantics<parallel>], iteration_bounds = array<i64: 2>, scalar_prefetch = 0 : i64, scratch_operands = 0 : i64, tpu.core_type = #tpu.core_type<tc>, window_params = [{transform_indices = @transform_0, window_bounds = array<i64: 1, 128, 28>}, {transform_indices = @transform_1, window_bounds = array<i64: 1, 4, 128>}, {pipeline_mode = #tpu.pipeline_mode<synchronous>, transform_indices = @transform_2, window_bounds = array<i64: 128, 128>}, {pipeline_mode = #tpu.pipeline_mode<synchronous>, transform_indices = @transform_3, window_bounds = array<i64: 2, 28, 84>}, {pipeline_mode = #tpu.pipeline_mode<synchronous>, transform_indices = @transform_4, window_bounds = array<i64: 2, 1, 84>}, {pipeline_mode = #tpu.pipeline_mode<synchronous>, transform_indices = @transform_5, window_bounds = array<i64: 2, 28, 28>}, {pipeline_mode = #tpu.pipeline_mode<synchronous>, transform_indices = @transform_6, window_bounds = array<i64: 2, 1, 28>}, {pipeline_mode = #tpu.pipeline_mode<synchronous>, transform_indices = @transform_7, window_bounds = array<i64: 2, 1, 28>}, {pipeline_mode = #tpu.pipeline_mode<synchronous>, transform_indices = @transform_8, window_bounds = array<i64: 2, 1, 28>}, {pipeline_mode = #tpu.pipeline_mode<synchronous>, transform_indices = @transform_9, window_bounds = array<i64: 2, 28, 32>}, {pipeline_mode = #tpu.pipeline_mode<synchronous>, transform_indices = @transform_10, window_bounds = array<i64: 2, 1, 32>}, {pipeline_mode = #tpu.pipeline_mode<synchronous>, transform_indices = @transform_11, window_bounds = array<i64: 2, 32, 28>}, {pipeline_mode = #tpu.pipeline_mode<synchronous>, transform_indices = @transform_12, window_bounds = array<i64: 2, 1, 28>}, {pipeline_mode = #tpu.pipeline_mode<synchronous>, transform_indices = @transform_13, window_bounds = array<i64: 2, 1, 28>}, {pipeline_mode = #tpu.pipeline_mode<synchronous>, transform_indices = @transform_14, window_bounds = array<i64: 2, 1, 28>}, {pipeline_mode = #tpu.pipeline_mode<synchronous>, transform_indices = @transform_15, window_bounds = array<i64: 28, 14>}, {pipeline_mode = #tpu.pipeline_mode<synchronous>, transform_indices = @transform_16, window_bounds = array<i64: 1, 14>}, {pipeline_mode = #tpu.pipeline_mode<synchronous>, transform_indices = @transform_17, window_bounds = array<i64: 4, 14>}, {pipeline_mode = #tpu.pipeline_mode<synchronous>, transform_indices = @transform_18, window_bounds = array<i64: 4, 1>}, {transform_indices = @transform_19, window_bounds = array<i64: 1, 8, 128>}]} {
    %c0 = arith.constant 0 : index
    %c0_0 = arith.constant 0 : index
    %c0_1 = arith.constant 0 : index
    %0 = vector.load %arg1[%c0, %c0_0, %c0_1] : memref<1x128x28xf32, #tpu.memory_space<vmem>>, vector<1x128x28xf32>
    %1 = vector.shape_cast %0 : vector<1x128x28xf32> to vector<128x28xf32>
    %c0_2 = arith.constant 0 : index
    %c0_3 = arith.constant 0 : index
    %2 = vector.load %arg3[%c0_2, %c0_3] : memref<128x128xf32, #tpu.memory_space<vmem>>, vector<128x128xf32>
    %3 = arith.truncf %1 : vector<128x28xf32> to vector<128x28xbf16>
    %c0_4 = arith.constant 0 : index
    %c0_5 = arith.constant 0 : index
    %c0_6 = arith.constant 0 : index
    %4 = vector.load %arg4[%c0_4, %c0_5, %c0_6] : memref<2x28x84xbf16, #tpu.memory_space<vmem>>, vector<1x28x84xbf16>
    %5 = vector.shape_cast %4 : vector<1x28x84xbf16> to vector<28x84xbf16>
    %cst = arith.constant dense<0.000000e+00> : vector<128x84xf32>
    %6 = tpu.matmul %3, %5, %cst {dimension_numbers = #tpu.dot_dimension_numbers<[1], [0], [0], [1], [0, 0, 1, 1], [], []>} : vector<128x28xbf16>, vector<28x84xbf16>, vector<128x84xf32> -> vector<128x84xf32>
    %c0_7 = arith.constant 0 : index
    %c0_8 = arith.constant 0 : index
    %c0_9 = arith.constant 0 : index
    %7 = vector.load %arg5[%c0_7, %c0_8, %c0_9] : memref<2x1x84xf32, #tpu.memory_space<vmem>>, vector<1x1x84xf32>
    %8 = vector.shape_cast %7 : vector<1x1x84xf32> to vector<1x84xf32>
    %9 = vector.broadcast %8 : vector<1x84xf32> to vector<128x84xf32>
    %10 = arith.addf %6, %9 : vector<128x84xf32>
    %11 = vector.extract_strided_slice %10 {offsets = [0, 0], sizes = [128, 28], strides = [1, 1]} : vector<128x84xf32> to vector<128x28xf32>
    %12 = vector.extract_strided_slice %10 {offsets = [0, 28], sizes = [128, 28], strides = [1, 1]} : vector<128x84xf32> to vector<128x28xf32>
    %13 = vector.extract_strided_slice %10 {offsets = [0, 56], sizes = [128, 28], strides = [1, 1]} : vector<128x84xf32> to vector<128x28xf32>
    %14 = arith.truncf %11 : vector<128x28xf32> to vector<128x28xbf16>
    %15 = arith.truncf %12 : vector<128x28xf32> to vector<128x28xbf16>
    %cst_10 = arith.constant dense<0.000000e+00> : vector<128x128xf32>
    %16 = tpu.matmul %14, %15, %cst_10 {dimension_numbers = #tpu.dot_dimension_numbers<[1], [1], [0], [0], [0, 0, 1, 0], [], []>} : vector<128x28xbf16>, vector<128x28xbf16>, vector<128x128xf32> -> vector<128x128xf32>
    %17 = arith.addf %16, %2 : vector<128x128xf32>
    %cst_11 = arith.constant dense<0xFF800000> : vector<128xf32>
    %18 = vector.multi_reduction <maximumf>, %17, %cst_11 [1] : vector<128x128xf32> to vector<128xf32>
    %19 = vector.shape_cast %18 : vector<128xf32> to vector<128x1xf32>
    %20 = vector.broadcast %19 : vector<128x1xf32> to vector<128x128xf32>
    %21 = arith.subf %17, %20 : vector<128x128xf32>
    %22 = math.exp %21 : vector<128x128xf32>
    %cst_12 = arith.constant dense<0.000000e+00> : vector<128xf32>
    %23 = vector.multi_reduction <add>, %22, %cst_12 [1] : vector<128x128xf32> to vector<128xf32>
    %24 = vector.shape_cast %23 : vector<128xf32> to vector<128x1xf32>
    %25 = tpu.reciprocal %24 {approx = true} : vector<128x1xf32> -> vector<128x1xf32>
    %26 = vector.broadcast %25 : vector<128x1xf32> to vector<128x128xf32>
    %27 = arith.mulf %22, %26 : vector<128x128xf32>
    %28 = arith.truncf %27 : vector<128x128xf32> to vector<128x128xbf16>
    %29 = arith.truncf %13 : vector<128x28xf32> to vector<128x28xbf16>
    %cst_13 = arith.constant dense<0.000000e+00> : vector<128x28xf32>
    %30 = tpu.matmul %28, %29, %cst_13 {dimension_numbers = #tpu.dot_dimension_numbers<[1], [0], [0], [1], [0, 0, 1, 1], [], []>} : vector<128x128xbf16>, vector<128x28xbf16>, vector<128x28xf32> -> vector<128x28xf32>
    %31 = arith.truncf %30 : vector<128x28xf32> to vector<128x28xbf16>
    %c0_14 = arith.constant 0 : index
    %c0_15 = arith.constant 0 : index
    %c0_16 = arith.constant 0 : index
    %32 = vector.load %arg6[%c0_14, %c0_15, %c0_16] : memref<2x28x28xbf16, #tpu.memory_space<vmem>>, vector<1x28x28xbf16>
    %33 = vector.shape_cast %32 : vector<1x28x28xbf16> to vector<28x28xbf16>
    %cst_17 = arith.constant dense<0.000000e+00> : vector<128x28xf32>
    %34 = tpu.matmul %31, %33, %cst_17 {dimension_numbers = #tpu.dot_dimension_numbers<[1], [0], [0], [1], [0, 0, 1, 1], [], []>} : vector<128x28xbf16>, vector<28x28xbf16>, vector<128x28xf32> -> vector<128x28xf32>
    %c0_18 = arith.constant 0 : index
    %c0_19 = arith.constant 0 : index
    %c0_20 = arith.constant 0 : index
    %35 = vector.load %arg7[%c0_18, %c0_19, %c0_20] : memref<2x1x28xf32, #tpu.memory_space<vmem>>, vector<1x1x28xf32>
    %36 = vector.shape_cast %35 : vector<1x1x28xf32> to vector<1x28xf32>
    %37 = vector.broadcast %36 : vector<1x28xf32> to vector<128x28xf32>
    %38 = arith.addf %34, %37 : vector<128x28xf32>
    %39 = arith.addf %1, %38 : vector<128x28xf32>
    %c0_21 = arith.constant 0 : index
    %c0_22 = arith.constant 0 : index
    %c0_23 = arith.constant 0 : index
    %40 = vector.load %arg8[%c0_21, %c0_22, %c0_23] : memref<2x1x28xf32, #tpu.memory_space<vmem>>, vector<1x1x28xf32>
    %41 = vector.shape_cast %40 : vector<1x1x28xf32> to vector<1x28xf32>
    %c0_24 = arith.constant 0 : index
    %c0_25 = arith.constant 0 : index
    %c0_26 = arith.constant 0 : index
    %42 = vector.load %arg9[%c0_24, %c0_25, %c0_26] : memref<2x1x28xf32, #tpu.memory_space<vmem>>, vector<1x1x28xf32>
    %43 = vector.shape_cast %42 : vector<1x1x28xf32> to vector<1x28xf32>
    %cst_27 = arith.constant dense<0.000000e+00> : vector<128xf32>
    %44 = vector.multi_reduction <add>, %39, %cst_27 [1] : vector<128x28xf32> to vector<128xf32>
    %45 = vector.shape_cast %44 : vector<128xf32> to vector<128x1xf32>
    %cst_28 = arith.constant 2.800000e+01 : f32
    %46 = vector.broadcast %cst_28 : f32 to vector<128x1xf32>
    %47 = arith.divf %45, %46 : vector<128x1xf32>
    %48 = vector.broadcast %47 : vector<128x1xf32> to vector<128x28xf32>
    %49 = arith.subf %39, %48 : vector<128x28xf32>
    %50 = arith.mulf %49, %49 : vector<128x28xf32>
    %cst_29 = arith.constant dense<0.000000e+00> : vector<128xf32>
    %51 = vector.multi_reduction <add>, %50, %cst_29 [1] : vector<128x28xf32> to vector<128xf32>
    %52 = vector.shape_cast %51 : vector<128xf32> to vector<128x1xf32>
    %cst_30 = arith.constant 2.800000e+01 : f32
    %53 = vector.broadcast %cst_30 : f32 to vector<128x1xf32>
    %54 = arith.divf %52, %53 : vector<128x1xf32>
    %55 = vector.broadcast %47 : vector<128x1xf32> to vector<128x28xf32>
    %56 = arith.subf %39, %55 : vector<128x28xf32>
    %cst_31 = arith.constant 9.99999974E-6 : f32
    %57 = vector.broadcast %cst_31 : f32 to vector<128x1xf32>
    %58 = arith.addf %54, %57 : vector<128x1xf32>
    %59 = math.rsqrt %58 : vector<128x1xf32>
    %60 = vector.broadcast %59 : vector<128x1xf32> to vector<128x28xf32>
    %61 = arith.mulf %56, %60 : vector<128x28xf32>
    %62 = vector.broadcast %41 : vector<1x28xf32> to vector<128x28xf32>
    %63 = arith.mulf %61, %62 : vector<128x28xf32>
    %64 = vector.broadcast %43 : vector<1x28xf32> to vector<128x28xf32>
    %65 = arith.addf %63, %64 : vector<128x28xf32>
    %66 = arith.truncf %65 : vector<128x28xf32> to vector<128x28xbf16>
    %c0_32 = arith.constant 0 : index
    %c0_33 = arith.constant 0 : index
    %c0_34 = arith.constant 0 : index
    %67 = vector.load %arg10[%c0_32, %c0_33, %c0_34] : memref<2x28x32xbf16, #tpu.memory_space<vmem>>, vector<1x28x32xbf16>
    %68 = vector.shape_cast %67 : vector<1x28x32xbf16> to vector<28x32xbf16>
    %cst_35 = arith.constant dense<0.000000e+00> : vector<128x32xf32>
    %69 = tpu.matmul %66, %68, %cst_35 {dimension_numbers = #tpu.dot_dimension_numbers<[1], [0], [0], [1], [0, 0, 1, 1], [], []>} : vector<128x28xbf16>, vector<28x32xbf16>, vector<128x32xf32> -> vector<128x32xf32>
    %c0_36 = arith.constant 0 : index
    %c0_37 = arith.constant 0 : index
    %c0_38 = arith.constant 0 : index
    %70 = vector.load %arg11[%c0_36, %c0_37, %c0_38] : memref<2x1x32xf32, #tpu.memory_space<vmem>>, vector<1x1x32xf32>
    %71 = vector.shape_cast %70 : vector<1x1x32xf32> to vector<1x32xf32>
    %72 = vector.broadcast %71 : vector<1x32xf32> to vector<128x32xf32>
    %73 = arith.addf %69, %72 : vector<128x32xf32>
    %cst_39 = arith.constant 0.000000e+00 : f32
    %74 = vector.broadcast %cst_39 : f32 to vector<128x32xf32>
    %75 = arith.maximumf %73, %74 : vector<128x32xf32>
    %76 = arith.truncf %75 : vector<128x32xf32> to vector<128x32xbf16>
    %c0_40 = arith.constant 0 : index
    %c0_41 = arith.constant 0 : index
    %c0_42 = arith.constant 0 : index
    %77 = vector.load %arg12[%c0_40, %c0_41, %c0_42] : memref<2x32x28xbf16, #tpu.memory_space<vmem>>, vector<1x32x28xbf16>
    %78 = vector.shape_cast %77 : vector<1x32x28xbf16> to vector<32x28xbf16>
    %cst_43 = arith.constant dense<0.000000e+00> : vector<128x28xf32>
    %79 = tpu.matmul %76, %78, %cst_43 {dimension_numbers = #tpu.dot_dimension_numbers<[1], [0], [0], [1], [0, 0, 1, 1], [], []>} : vector<128x32xbf16>, vector<32x28xbf16>, vector<128x28xf32> -> vector<128x28xf32>
    %c0_44 = arith.constant 0 : index
    %c0_45 = arith.constant 0 : index
    %c0_46 = arith.constant 0 : index
    %80 = vector.load %arg13[%c0_44, %c0_45, %c0_46] : memref<2x1x28xf32, #tpu.memory_space<vmem>>, vector<1x1x28xf32>
    %81 = vector.shape_cast %80 : vector<1x1x28xf32> to vector<1x28xf32>
    %82 = vector.broadcast %81 : vector<1x28xf32> to vector<128x28xf32>
    %83 = arith.addf %79, %82 : vector<128x28xf32>
    %84 = arith.addf %65, %83 : vector<128x28xf32>
    %c0_47 = arith.constant 0 : index
    %c0_48 = arith.constant 0 : index
    %c0_49 = arith.constant 0 : index
    %85 = vector.load %arg14[%c0_47, %c0_48, %c0_49] : memref<2x1x28xf32, #tpu.memory_space<vmem>>, vector<1x1x28xf32>
    %86 = vector.shape_cast %85 : vector<1x1x28xf32> to vector<1x28xf32>
    %c0_50 = arith.constant 0 : index
    %c0_51 = arith.constant 0 : index
    %c0_52 = arith.constant 0 : index
    %87 = vector.load %arg15[%c0_50, %c0_51, %c0_52] : memref<2x1x28xf32, #tpu.memory_space<vmem>>, vector<1x1x28xf32>
    %88 = vector.shape_cast %87 : vector<1x1x28xf32> to vector<1x28xf32>
    %cst_53 = arith.constant dense<0.000000e+00> : vector<128xf32>
    %89 = vector.multi_reduction <add>, %84, %cst_53 [1] : vector<128x28xf32> to vector<128xf32>
    %90 = vector.shape_cast %89 : vector<128xf32> to vector<128x1xf32>
    %cst_54 = arith.constant 2.800000e+01 : f32
    %91 = vector.broadcast %cst_54 : f32 to vector<128x1xf32>
    %92 = arith.divf %90, %91 : vector<128x1xf32>
    %93 = vector.broadcast %92 : vector<128x1xf32> to vector<128x28xf32>
    %94 = arith.subf %84, %93 : vector<128x28xf32>
    %95 = arith.mulf %94, %94 : vector<128x28xf32>
    %cst_55 = arith.constant dense<0.000000e+00> : vector<128xf32>
    %96 = vector.multi_reduction <add>, %95, %cst_55 [1] : vector<128x28xf32> to vector<128xf32>
    %97 = vector.shape_cast %96 : vector<128xf32> to vector<128x1xf32>
    %cst_56 = arith.constant 2.800000e+01 : f32
    %98 = vector.broadcast %cst_56 : f32 to vector<128x1xf32>
    %99 = arith.divf %97, %98 : vector<128x1xf32>
    %100 = vector.broadcast %92 : vector<128x1xf32> to vector<128x28xf32>
    %101 = arith.subf %84, %100 : vector<128x28xf32>
    %cst_57 = arith.constant 9.99999974E-6 : f32
    %102 = vector.broadcast %cst_57 : f32 to vector<128x1xf32>
    %103 = arith.addf %99, %102 : vector<128x1xf32>
    %104 = math.rsqrt %103 : vector<128x1xf32>
    %105 = vector.broadcast %104 : vector<128x1xf32> to vector<128x28xf32>
    %106 = arith.mulf %101, %105 : vector<128x28xf32>
    %107 = vector.broadcast %86 : vector<1x28xf32> to vector<128x28xf32>
    %108 = arith.mulf %106, %107 : vector<128x28xf32>
    %109 = vector.broadcast %88 : vector<1x28xf32> to vector<128x28xf32>
    %110 = arith.addf %108, %109 : vector<128x28xf32>
    %111 = arith.truncf %110 : vector<128x28xf32> to vector<128x28xbf16>
    %c1 = arith.constant 1 : index
    %c0_58 = arith.constant 0 : index
    %c0_59 = arith.constant 0 : index
    %112 = vector.load %arg4[%c1, %c0_58, %c0_59] : memref<2x28x84xbf16, #tpu.memory_space<vmem>>, vector<1x28x84xbf16>
    %113 = vector.shape_cast %112 : vector<1x28x84xbf16> to vector<28x84xbf16>
    %cst_60 = arith.constant dense<0.000000e+00> : vector<128x84xf32>
    %114 = tpu.matmul %111, %113, %cst_60 {dimension_numbers = #tpu.dot_dimension_numbers<[1], [0], [0], [1], [0, 0, 1, 1], [], []>} : vector<128x28xbf16>, vector<28x84xbf16>, vector<128x84xf32> -> vector<128x84xf32>
    %c1_61 = arith.constant 1 : index
    %c0_62 = arith.constant 0 : index
    %c0_63 = arith.constant 0 : index
    %115 = vector.load %arg5[%c1_61, %c0_62, %c0_63] : memref<2x1x84xf32, #tpu.memory_space<vmem>>, vector<1x1x84xf32>
    %116 = vector.shape_cast %115 : vector<1x1x84xf32> to vector<1x84xf32>
    %117 = vector.broadcast %116 : vector<1x84xf32> to vector<128x84xf32>
    %118 = arith.addf %114, %117 : vector<128x84xf32>
    %119 = vector.extract_strided_slice %118 {offsets = [0, 0], sizes = [128, 28], strides = [1, 1]} : vector<128x84xf32> to vector<128x28xf32>
    %120 = vector.extract_strided_slice %118 {offsets = [0, 28], sizes = [128, 28], strides = [1, 1]} : vector<128x84xf32> to vector<128x28xf32>
    %121 = vector.extract_strided_slice %118 {offsets = [0, 56], sizes = [128, 28], strides = [1, 1]} : vector<128x84xf32> to vector<128x28xf32>
    %122 = arith.truncf %119 : vector<128x28xf32> to vector<128x28xbf16>
    %123 = arith.truncf %120 : vector<128x28xf32> to vector<128x28xbf16>
    %cst_64 = arith.constant dense<0.000000e+00> : vector<128x128xf32>
    %124 = tpu.matmul %122, %123, %cst_64 {dimension_numbers = #tpu.dot_dimension_numbers<[1], [1], [0], [0], [0, 0, 1, 0], [], []>} : vector<128x28xbf16>, vector<128x28xbf16>, vector<128x128xf32> -> vector<128x128xf32>
    %125 = arith.addf %124, %2 : vector<128x128xf32>
    %cst_65 = arith.constant dense<0xFF800000> : vector<128xf32>
    %126 = vector.multi_reduction <maximumf>, %125, %cst_65 [1] : vector<128x128xf32> to vector<128xf32>
    %127 = vector.shape_cast %126 : vector<128xf32> to vector<128x1xf32>
    %128 = vector.broadcast %127 : vector<128x1xf32> to vector<128x128xf32>
    %129 = arith.subf %125, %128 : vector<128x128xf32>
    %130 = math.exp %129 : vector<128x128xf32>
    %cst_66 = arith.constant dense<0.000000e+00> : vector<128xf32>
    %131 = vector.multi_reduction <add>, %130, %cst_66 [1] : vector<128x128xf32> to vector<128xf32>
    %132 = vector.shape_cast %131 : vector<128xf32> to vector<128x1xf32>
    %133 = tpu.reciprocal %132 {approx = true} : vector<128x1xf32> -> vector<128x1xf32>
    %134 = vector.broadcast %133 : vector<128x1xf32> to vector<128x128xf32>
    %135 = arith.mulf %130, %134 : vector<128x128xf32>
    %136 = arith.truncf %135 : vector<128x128xf32> to vector<128x128xbf16>
    %137 = arith.truncf %121 : vector<128x28xf32> to vector<128x28xbf16>
    %cst_67 = arith.constant dense<0.000000e+00> : vector<128x28xf32>
    %138 = tpu.matmul %136, %137, %cst_67 {dimension_numbers = #tpu.dot_dimension_numbers<[1], [0], [0], [1], [0, 0, 1, 1], [], []>} : vector<128x128xbf16>, vector<128x28xbf16>, vector<128x28xf32> -> vector<128x28xf32>
    %139 = arith.truncf %138 : vector<128x28xf32> to vector<128x28xbf16>
    %c1_68 = arith.constant 1 : index
    %c0_69 = arith.constant 0 : index
    %c0_70 = arith.constant 0 : index
    %140 = vector.load %arg6[%c1_68, %c0_69, %c0_70] : memref<2x28x28xbf16, #tpu.memory_space<vmem>>, vector<1x28x28xbf16>
    %141 = vector.shape_cast %140 : vector<1x28x28xbf16> to vector<28x28xbf16>
    %cst_71 = arith.constant dense<0.000000e+00> : vector<128x28xf32>
    %142 = tpu.matmul %139, %141, %cst_71 {dimension_numbers = #tpu.dot_dimension_numbers<[1], [0], [0], [1], [0, 0, 1, 1], [], []>} : vector<128x28xbf16>, vector<28x28xbf16>, vector<128x28xf32> -> vector<128x28xf32>
    %c1_72 = arith.constant 1 : index
    %c0_73 = arith.constant 0 : index
    %c0_74 = arith.constant 0 : index
    %143 = vector.load %arg7[%c1_72, %c0_73, %c0_74] : memref<2x1x28xf32, #tpu.memory_space<vmem>>, vector<1x1x28xf32>
    %144 = vector.shape_cast %143 : vector<1x1x28xf32> to vector<1x28xf32>
    %145 = vector.broadcast %144 : vector<1x28xf32> to vector<128x28xf32>
    %146 = arith.addf %142, %145 : vector<128x28xf32>
    %147 = arith.addf %110, %146 : vector<128x28xf32>
    %c1_75 = arith.constant 1 : index
    %c0_76 = arith.constant 0 : index
    %c0_77 = arith.constant 0 : index
    %148 = vector.load %arg8[%c1_75, %c0_76, %c0_77] : memref<2x1x28xf32, #tpu.memory_space<vmem>>, vector<1x1x28xf32>
    %149 = vector.shape_cast %148 : vector<1x1x28xf32> to vector<1x28xf32>
    %c1_78 = arith.constant 1 : index
    %c0_79 = arith.constant 0 : index
    %c0_80 = arith.constant 0 : index
    %150 = vector.load %arg9[%c1_78, %c0_79, %c0_80] : memref<2x1x28xf32, #tpu.memory_space<vmem>>, vector<1x1x28xf32>
    %151 = vector.shape_cast %150 : vector<1x1x28xf32> to vector<1x28xf32>
    %cst_81 = arith.constant dense<0.000000e+00> : vector<128xf32>
    %152 = vector.multi_reduction <add>, %147, %cst_81 [1] : vector<128x28xf32> to vector<128xf32>
    %153 = vector.shape_cast %152 : vector<128xf32> to vector<128x1xf32>
    %cst_82 = arith.constant 2.800000e+01 : f32
    %154 = vector.broadcast %cst_82 : f32 to vector<128x1xf32>
    %155 = arith.divf %153, %154 : vector<128x1xf32>
    %156 = vector.broadcast %155 : vector<128x1xf32> to vector<128x28xf32>
    %157 = arith.subf %147, %156 : vector<128x28xf32>
    %158 = arith.mulf %157, %157 : vector<128x28xf32>
    %cst_83 = arith.constant dense<0.000000e+00> : vector<128xf32>
    %159 = vector.multi_reduction <add>, %158, %cst_83 [1] : vector<128x28xf32> to vector<128xf32>
    %160 = vector.shape_cast %159 : vector<128xf32> to vector<128x1xf32>
    %cst_84 = arith.constant 2.800000e+01 : f32
    %161 = vector.broadcast %cst_84 : f32 to vector<128x1xf32>
    %162 = arith.divf %160, %161 : vector<128x1xf32>
    %163 = vector.broadcast %155 : vector<128x1xf32> to vector<128x28xf32>
    %164 = arith.subf %147, %163 : vector<128x28xf32>
    %cst_85 = arith.constant 9.99999974E-6 : f32
    %165 = vector.broadcast %cst_85 : f32 to vector<128x1xf32>
    %166 = arith.addf %162, %165 : vector<128x1xf32>
    %167 = math.rsqrt %166 : vector<128x1xf32>
    %168 = vector.broadcast %167 : vector<128x1xf32> to vector<128x28xf32>
    %169 = arith.mulf %164, %168 : vector<128x28xf32>
    %170 = vector.broadcast %149 : vector<1x28xf32> to vector<128x28xf32>
    %171 = arith.mulf %169, %170 : vector<128x28xf32>
    %172 = vector.broadcast %151 : vector<1x28xf32> to vector<128x28xf32>
    %173 = arith.addf %171, %172 : vector<128x28xf32>
    %174 = arith.truncf %173 : vector<128x28xf32> to vector<128x28xbf16>
    %c1_86 = arith.constant 1 : index
    %c0_87 = arith.constant 0 : index
    %c0_88 = arith.constant 0 : index
    %175 = vector.load %arg10[%c1_86, %c0_87, %c0_88] : memref<2x28x32xbf16, #tpu.memory_space<vmem>>, vector<1x28x32xbf16>
    %176 = vector.shape_cast %175 : vector<1x28x32xbf16> to vector<28x32xbf16>
    %cst_89 = arith.constant dense<0.000000e+00> : vector<128x32xf32>
    %177 = tpu.matmul %174, %176, %cst_89 {dimension_numbers = #tpu.dot_dimension_numbers<[1], [0], [0], [1], [0, 0, 1, 1], [], []>} : vector<128x28xbf16>, vector<28x32xbf16>, vector<128x32xf32> -> vector<128x32xf32>
    %c1_90 = arith.constant 1 : index
    %c0_91 = arith.constant 0 : index
    %c0_92 = arith.constant 0 : index
    %178 = vector.load %arg11[%c1_90, %c0_91, %c0_92] : memref<2x1x32xf32, #tpu.memory_space<vmem>>, vector<1x1x32xf32>
    %179 = vector.shape_cast %178 : vector<1x1x32xf32> to vector<1x32xf32>
    %180 = vector.broadcast %179 : vector<1x32xf32> to vector<128x32xf32>
    %181 = arith.addf %177, %180 : vector<128x32xf32>
    %cst_93 = arith.constant 0.000000e+00 : f32
    %182 = vector.broadcast %cst_93 : f32 to vector<128x32xf32>
    %183 = arith.maximumf %181, %182 : vector<128x32xf32>
    %184 = arith.truncf %183 : vector<128x32xf32> to vector<128x32xbf16>
    %c1_94 = arith.constant 1 : index
    %c0_95 = arith.constant 0 : index
    %c0_96 = arith.constant 0 : index
    %185 = vector.load %arg12[%c1_94, %c0_95, %c0_96] : memref<2x32x28xbf16, #tpu.memory_space<vmem>>, vector<1x32x28xbf16>
    %186 = vector.shape_cast %185 : vector<1x32x28xbf16> to vector<32x28xbf16>
    %cst_97 = arith.constant dense<0.000000e+00> : vector<128x28xf32>
    %187 = tpu.matmul %184, %186, %cst_97 {dimension_numbers = #tpu.dot_dimension_numbers<[1], [0], [0], [1], [0, 0, 1, 1], [], []>} : vector<128x32xbf16>, vector<32x28xbf16>, vector<128x28xf32> -> vector<128x28xf32>
    %c1_98 = arith.constant 1 : index
    %c0_99 = arith.constant 0 : index
    %c0_100 = arith.constant 0 : index
    %188 = vector.load %arg13[%c1_98, %c0_99, %c0_100] : memref<2x1x28xf32, #tpu.memory_space<vmem>>, vector<1x1x28xf32>
    %189 = vector.shape_cast %188 : vector<1x1x28xf32> to vector<1x28xf32>
    %190 = vector.broadcast %189 : vector<1x28xf32> to vector<128x28xf32>
    %191 = arith.addf %187, %190 : vector<128x28xf32>
    %192 = arith.addf %173, %191 : vector<128x28xf32>
    %c1_101 = arith.constant 1 : index
    %c0_102 = arith.constant 0 : index
    %c0_103 = arith.constant 0 : index
    %193 = vector.load %arg14[%c1_101, %c0_102, %c0_103] : memref<2x1x28xf32, #tpu.memory_space<vmem>>, vector<1x1x28xf32>
    %194 = vector.shape_cast %193 : vector<1x1x28xf32> to vector<1x28xf32>
    %c1_104 = arith.constant 1 : index
    %c0_105 = arith.constant 0 : index
    %c0_106 = arith.constant 0 : index
    %195 = vector.load %arg15[%c1_104, %c0_105, %c0_106] : memref<2x1x28xf32, #tpu.memory_space<vmem>>, vector<1x1x28xf32>
    %196 = vector.shape_cast %195 : vector<1x1x28xf32> to vector<1x28xf32>
    %cst_107 = arith.constant dense<0.000000e+00> : vector<128xf32>
    %197 = vector.multi_reduction <add>, %192, %cst_107 [1] : vector<128x28xf32> to vector<128xf32>
    %198 = vector.shape_cast %197 : vector<128xf32> to vector<128x1xf32>
    %cst_108 = arith.constant 2.800000e+01 : f32
    %199 = vector.broadcast %cst_108 : f32 to vector<128x1xf32>
    %200 = arith.divf %198, %199 : vector<128x1xf32>
    %201 = vector.broadcast %200 : vector<128x1xf32> to vector<128x28xf32>
    %202 = arith.subf %192, %201 : vector<128x28xf32>
    %203 = arith.mulf %202, %202 : vector<128x28xf32>
    %cst_109 = arith.constant dense<0.000000e+00> : vector<128xf32>
    %204 = vector.multi_reduction <add>, %203, %cst_109 [1] : vector<128x28xf32> to vector<128xf32>
    %205 = vector.shape_cast %204 : vector<128xf32> to vector<128x1xf32>
    %cst_110 = arith.constant 2.800000e+01 : f32
    %206 = vector.broadcast %cst_110 : f32 to vector<128x1xf32>
    %207 = arith.divf %205, %206 : vector<128x1xf32>
    %208 = vector.broadcast %200 : vector<128x1xf32> to vector<128x28xf32>
    %209 = arith.subf %192, %208 : vector<128x28xf32>
    %cst_111 = arith.constant 9.99999974E-6 : f32
    %210 = vector.broadcast %cst_111 : f32 to vector<128x1xf32>
    %211 = arith.addf %207, %210 : vector<128x1xf32>
    %212 = math.rsqrt %211 : vector<128x1xf32>
    %213 = vector.broadcast %212 : vector<128x1xf32> to vector<128x28xf32>
    %214 = arith.mulf %209, %213 : vector<128x28xf32>
    %215 = vector.broadcast %194 : vector<1x28xf32> to vector<128x28xf32>
    %216 = arith.mulf %214, %215 : vector<128x28xf32>
    %217 = vector.broadcast %196 : vector<1x28xf32> to vector<128x28xf32>
    %218 = arith.addf %216, %217 : vector<128x28xf32>
    %219 = arith.truncf %218 : vector<128x28xf32> to vector<128x28xbf16>
    %c0_112 = arith.constant 0 : index
    %c0_113 = arith.constant 0 : index
    %220 = vector.load %arg16[%c0_112, %c0_113] : memref<28x14xbf16, #tpu.memory_space<vmem>>, vector<28x14xbf16>
    %cst_114 = arith.constant dense<0.000000e+00> : vector<128x14xf32>
    %221 = tpu.matmul %219, %220, %cst_114 {dimension_numbers = #tpu.dot_dimension_numbers<[1], [0], [0], [1], [0, 0, 1, 1], [], []>} : vector<128x28xbf16>, vector<28x14xbf16>, vector<128x14xf32> -> vector<128x14xf32>
    %c0_115 = arith.constant 0 : index
    %c0_116 = arith.constant 0 : index
    %222 = vector.load %arg17[%c0_115, %c0_116] : memref<1x14xf32, #tpu.memory_space<vmem>>, vector<1x14xf32>
    %223 = vector.broadcast %222 : vector<1x14xf32> to vector<128x14xf32>
    %224 = arith.addf %221, %223 : vector<128x14xf32>
    %cst_117 = arith.constant 0.000000e+00 : f32
    %225 = vector.broadcast %cst_117 : f32 to vector<128x14xf32>
    %226 = arith.cmpf ogt, %224, %225 : vector<128x14xf32>
    %227 = math.exp %224 : vector<128x14xf32>
    %cst_118 = arith.constant 1.000000e+00 : f32
    %228 = vector.broadcast %cst_118 : f32 to vector<128x14xf32>
    %229 = arith.subf %227, %228 : vector<128x14xf32>
    %230 = arith.select %226, %224, %229 : vector<128x14xi1>, vector<128x14xf32>
    %c0_119 = arith.constant 0 : index
    %c0_120 = arith.constant 0 : index
    %231 = vector.load %arg18[%c0_119, %c0_120] : memref<4x14xbf16, #tpu.memory_space<vmem>>, vector<4x14xbf16>
    %232 = arith.truncf %230 : vector<128x14xf32> to vector<128x14xbf16>
    %cst_121 = arith.constant dense<0.000000e+00> : vector<4x128xf32>
    %233 = tpu.matmul %231, %232, %cst_121 {dimension_numbers = #tpu.dot_dimension_numbers<[1], [1], [0], [0], [0, 0, 1, 0], [], []>} : vector<4x14xbf16>, vector<128x14xbf16>, vector<4x128xf32> -> vector<4x128xf32>
    %c0_122 = arith.constant 0 : index
    %c0_123 = arith.constant 0 : index
    %234 = vector.load %arg19[%c0_122, %c0_123] : memref<4x1xf32, #tpu.memory_space<vmem>>, vector<4x1xf32>
    %235 = vector.broadcast %234 : vector<4x1xf32> to vector<4x128xf32>
    %236 = arith.addf %233, %235 : vector<4x128xf32>
    %cst_124 = arith.constant 0.000000e+00 : f32
    %237 = vector.broadcast %cst_124 : f32 to vector<4x128xf32>
    %238 = arith.cmpf ogt, %236, %237 : vector<4x128xf32>
    %239 = math.exp %236 : vector<4x128xf32>
    %cst_125 = arith.constant 1.000000e+00 : f32
    %240 = vector.broadcast %cst_125 : f32 to vector<4x128xf32>
    %241 = arith.subf %239, %240 : vector<4x128xf32>
    %242 = arith.select %238, %236, %241 : vector<4x128xi1>, vector<4x128xf32>
    %c0_126 = arith.constant 0 : index
    %c0_127 = arith.constant 0 : index
    %c0_128 = arith.constant 0 : index
    %243 = vector.load %arg2[%c0_126, %c0_127, %c0_128] : memref<1x4x128xf32, #tpu.memory_space<vmem>>, vector<1x4x128xf32>
    %244 = vector.shape_cast %243 : vector<1x4x128xf32> to vector<4x128xf32>
    %245 = arith.subf %242, %244 : vector<4x128xf32>
    %246 = math.absf %245 : vector<4x128xf32>
    %247 = tpu.concatenate %242, %246 in 0 : vector<4x128xf32>, vector<4x128xf32> -> vector<8x128xf32>
    %c0_129 = arith.constant 0 : index
    %c0_130 = arith.constant 0 : index
    %c0_131 = arith.constant 0 : index
    %248 = vector.load %arg20[%c0_129, %c0_130, %c0_131] : memref<1x8x128xf32, #tpu.memory_space<vmem>>, vector<1x8x128xf32>
    %249 = vector.shape_cast %248 : vector<1x8x128xf32> to vector<8x128xf32>
    %250 = vector.shape_cast %247 : vector<8x128xf32> to vector<1x8x128xf32>
    tpu.vector_store %arg20[%c0_129, %c0_130, %c0_131], %250 {strides = array<i32>} : memref<1x8x128xf32, #tpu.memory_space<vmem>>, vector<1x8x128xf32>,
    return
  }
  func.func @transform_0(%arg0: i32) -> (i32, i32, i32) {
    %c0_i32 = arith.constant 0 : i32
    %c0_i32_0 = arith.constant 0 : i32
    %c0_i32_1 = arith.constant 0 : i32
    return %arg0, %c0_i32, %c0_i32_0 : i32, i32, i32
  }
  func.func @transform_1(%arg0: i32) -> (i32, i32, i32) {
    %c0_i32 = arith.constant 0 : i32
    %c0_i32_0 = arith.constant 0 : i32
    %c0_i32_1 = arith.constant 0 : i32
    return %arg0, %c0_i32, %c0_i32_0 : i32, i32, i32
  }
  func.func @transform_2(%arg0: i32) -> (i32, i32) {
    %c0_i32 = arith.constant 0 : i32
    %c0_i32_0 = arith.constant 0 : i32
    %c0_i32_1 = arith.constant 0 : i32
    return %c0_i32, %c0_i32_0 : i32, i32
  }
  func.func @transform_3(%arg0: i32) -> (i32, i32, i32) {
    %c0_i32 = arith.constant 0 : i32
    %c0_i32_0 = arith.constant 0 : i32
    %c0_i32_1 = arith.constant 0 : i32
    %c0_i32_2 = arith.constant 0 : i32
    return %c0_i32, %c0_i32_0, %c0_i32_1 : i32, i32, i32
  }
  func.func @transform_4(%arg0: i32) -> (i32, i32, i32) {
    %c0_i32 = arith.constant 0 : i32
    %c0_i32_0 = arith.constant 0 : i32
    %c0_i32_1 = arith.constant 0 : i32
    %c0_i32_2 = arith.constant 0 : i32
    return %c0_i32, %c0_i32_0, %c0_i32_1 : i32, i32, i32
  }
  func.func @transform_5(%arg0: i32) -> (i32, i32, i32) {
    %c0_i32 = arith.constant 0 : i32
    %c0_i32_0 = arith.constant 0 : i32
    %c0_i32_1 = arith.constant 0 : i32
    %c0_i32_2 = arith.constant 0 : i32
    return %c0_i32, %c0_i32_0, %c0_i32_1 : i32, i32, i32
  }
  func.func @transform_6(%arg0: i32) -> (i32, i32, i32) {
    %c0_i32 = arith.constant 0 : i32
    %c0_i32_0 = arith.constant 0 : i32
    %c0_i32_1 = arith.constant 0 : i32
    %c0_i32_2 = arith.constant 0 : i32
    return %c0_i32, %c0_i32_0, %c0_i32_1 : i32, i32, i32
  }
  func.func @transform_7(%arg0: i32) -> (i32, i32, i32) {
    %c0_i32 = arith.constant 0 : i32
    %c0_i32_0 = arith.constant 0 : i32
    %c0_i32_1 = arith.constant 0 : i32
    %c0_i32_2 = arith.constant 0 : i32
    return %c0_i32, %c0_i32_0, %c0_i32_1 : i32, i32, i32
  }
  func.func @transform_8(%arg0: i32) -> (i32, i32, i32) {
    %c0_i32 = arith.constant 0 : i32
    %c0_i32_0 = arith.constant 0 : i32
    %c0_i32_1 = arith.constant 0 : i32
    %c0_i32_2 = arith.constant 0 : i32
    return %c0_i32, %c0_i32_0, %c0_i32_1 : i32, i32, i32
  }
  func.func @transform_9(%arg0: i32) -> (i32, i32, i32) {
    %c0_i32 = arith.constant 0 : i32
    %c0_i32_0 = arith.constant 0 : i32
    %c0_i32_1 = arith.constant 0 : i32
    %c0_i32_2 = arith.constant 0 : i32
    return %c0_i32, %c0_i32_0, %c0_i32_1 : i32, i32, i32
  }
  func.func @transform_10(%arg0: i32) -> (i32, i32, i32) {
    %c0_i32 = arith.constant 0 : i32
    %c0_i32_0 = arith.constant 0 : i32
    %c0_i32_1 = arith.constant 0 : i32
    %c0_i32_2 = arith.constant 0 : i32
    return %c0_i32, %c0_i32_0, %c0_i32_1 : i32, i32, i32
  }
  func.func @transform_11(%arg0: i32) -> (i32, i32, i32) {
    %c0_i32 = arith.constant 0 : i32
    %c0_i32_0 = arith.constant 0 : i32
    %c0_i32_1 = arith.constant 0 : i32
    %c0_i32_2 = arith.constant 0 : i32
    return %c0_i32, %c0_i32_0, %c0_i32_1 : i32, i32, i32
  }
  func.func @transform_12(%arg0: i32) -> (i32, i32, i32) {
    %c0_i32 = arith.constant 0 : i32
    %c0_i32_0 = arith.constant 0 : i32
    %c0_i32_1 = arith.constant 0 : i32
    %c0_i32_2 = arith.constant 0 : i32
    return %c0_i32, %c0_i32_0, %c0_i32_1 : i32, i32, i32
  }
  func.func @transform_13(%arg0: i32) -> (i32, i32, i32) {
    %c0_i32 = arith.constant 0 : i32
    %c0_i32_0 = arith.constant 0 : i32
    %c0_i32_1 = arith.constant 0 : i32
    %c0_i32_2 = arith.constant 0 : i32
    return %c0_i32, %c0_i32_0, %c0_i32_1 : i32, i32, i32
  }
  func.func @transform_14(%arg0: i32) -> (i32, i32, i32) {
    %c0_i32 = arith.constant 0 : i32
    %c0_i32_0 = arith.constant 0 : i32
    %c0_i32_1 = arith.constant 0 : i32
    %c0_i32_2 = arith.constant 0 : i32
    return %c0_i32, %c0_i32_0, %c0_i32_1 : i32, i32, i32
  }
  func.func @transform_15(%arg0: i32) -> (i32, i32) {
    %c0_i32 = arith.constant 0 : i32
    %c0_i32_0 = arith.constant 0 : i32
    %c0_i32_1 = arith.constant 0 : i32
    return %c0_i32, %c0_i32_0 : i32, i32
  }
  func.func @transform_16(%arg0: i32) -> (i32, i32) {
    %c0_i32 = arith.constant 0 : i32
    %c0_i32_0 = arith.constant 0 : i32
    %c0_i32_1 = arith.constant 0 : i32
    return %c0_i32, %c0_i32_0 : i32, i32
  }
  func.func @transform_17(%arg0: i32) -> (i32, i32) {
    %c0_i32 = arith.constant 0 : i32
    %c0_i32_0 = arith.constant 0 : i32
    %c0_i32_1 = arith.constant 0 : i32
    return %c0_i32, %c0_i32_0 : i32, i32
  }
  func.func @transform_18(%arg0: i32) -> (i32, i32) {
    %c0_i32 = arith.constant 0 : i32
    %c0_i32_0 = arith.constant 0 : i32
    %c0_i32_1 = arith.constant 0 : i32
    return %c0_i32, %c0_i32_0 : i32, i32
  }
  func.func @transform_19(%arg0: i32) -> (i32, i32, i32) {
    %c0_i32 = arith.constant 0 : i32
    %c0_i32_0 = arith.constant 0 : i32
    %c0_i32_1 = arith.constant 0 : i32
    return %arg0, %c0_i32, %c0_i32_0 : i32, i32, i32
  }
}

</mosaic_0001>

<llo_original>
// kernel: spatio_temporal_discriminator_forward.1
$region0: #{spatio_temporal_discriminator_forward.1}
  #allocation0 [shape = 'u32[]', space=smem, size = 0x4, offset = 0x4, fixed_abs, tag = 'smem constant byte address 0x4 - core index']
  #allocation1 [shape = 'u32[144,128]{1,0:T(1,128)}', space=vmem, size = 0x12000, scoped, tag = 'internal scratch']
  %s0 = inlined_call_operand.vmem [shape: f32[2,128,28], index: 0, kind: input, shape index: {}]
  %s1 = inlined_call_operand.vmem [shape: f32[2,4,128], index: 1, kind: input, shape index: {}]
  %s2 = inlined_call_operand.vmem [shape: f32[128,128], index: 2, kind: input, shape index: {}]
  %s3 = inlined_call_operand.vmem [shape: bf16[2,28,84], index: 3, kind: input, shape index: {}]
  %s4 = inlined_call_operand.vmem [shape: f32[2,1,84], index: 4, kind: input, shape index: {}]
  %s5 = inlined_call_operand.vmem [shape: bf16[2,28,28], index: 5, kind: input, shape index: {}]
  %s6 = inlined_call_operand.vmem [shape: f32[2,1,28], index: 6, kind: input, shape index: {}]
  %s7 = inlined_call_operand.vmem [shape: f32[2,1,28], index: 7, kind: input, shape index: {}]
  %s8 = inlined_call_operand.vmem [shape: f32[2,1,28], index: 8, kind: input, shape index: {}]
  %s9 = inlined_call_operand.vmem [shape: bf16[2,28,32], index: 9, kind: input, shape index: {}]
  %s10 = inlined_call_operand.vmem [shape: f32[2,1,32], index: 10, kind: input, shape index: {}]
  %s11 = inlined_call_operand.vmem [shape: bf16[2,32,28], index: 11, kind: input, shape index: {}]
  %s12 = inlined_call_operand.vmem [shape: f32[2,1,28], index: 12, kind: input, shape index: {}]
  %s13 = inlined_call_operand.vmem [shape: f32[2,1,28], index: 13, kind: input, shape index: {}]
  %s14 = inlined_call_operand.vmem [shape: f32[2,1,28], index: 14, kind: input, shape index: {}]
  %s15 = inlined_call_operand.vmem [shape: bf16[28,14], index: 15, kind: input, shape index: {}]
  %s16 = inlined_call_operand.vmem [shape: f32[1,14], index: 16, kind: input, shape index: {}]
  %s17 = inlined_call_operand.vmem [shape: bf16[4,14], index: 17, kind: input, shape index: {}]
  %s18 = inlined_call_operand.vmem [shape: f32[4,1], index: 18, kind: input, shape index: {}]
  %s19 = inlined_call_operand.vmem [shape: f32[2,8,128], index: 19, kind: output, shape index: {}]
  %s20 = sld [smem:[#allocation0]]
  $region109: #{spatio_temporal_discriminator_forward.1} parent=0
    _
  %s22 = ssub.s32 1, %s20
  %s23 = scalar_select 0, %s22, %s20
  loop: start=0, step=1, limit=4
  $region2: #{spatio_temporal_discriminator_forward.1} parent=0 // loop_pre_header
    _
  $region3: #{spatio_temporal_discriminator_forward.1} parent=0 // loop_header
    %s25 = sphi 0, %s29
    %p26 = scmp.ge.s32.totalorder %s25, 4
    %s35 = sphi 0, %s37
    %s38 = sphi 0, %s35
    %s39 = sphi 0, %s38
    %s55 = sphi 0, %s39
    %s61 = sphi 0, %s63
    %s64 = sphi 0, %s61
    %s65 = sphi 0, %s64
    %s81 = sphi 0, %s65
    %s85 = sphi 0, %s85
    %s87 = sphi 0, %s85
    %s88 = sphi 0, %s87
    %s102 = sphi 0, %s88
    %s106 = sphi 0, %s106
    %s108 = sphi 0, %s106
    %s109 = sphi 0, %s108
    %s123 = sphi 0, %s109
    %s127 = sphi 0, %s127
    %s129 = sphi 0, %s127
    %s130 = sphi 0, %s129
    %s144 = sphi 0, %s130
    %s148 = sphi 0, %s148
    %s150 = sphi 0, %s148
    %s151 = sphi 0, %s150
    %s165 = sphi 0, %s151
    %s169 = sphi 0, %s169
    %s171 = sphi 0, %s169
    %s172 = sphi 0, %s171
    %s186 = sphi 0, %s172
    %s190 = sphi 0, %s190
    %s192 = sphi 0, %s190
    %s193 = sphi 0, %s192
    %s207 = sphi 0, %s193
    %s211 = sphi 0, %s211
    %s213 = sphi 0, %s211
    %s214 = sphi 0, %s213
    %s228 = sphi 0, %s214
    %s232 = sphi 0, %s232
    %s234 = sphi 0, %s232
    %s235 = sphi 0, %s234
    %s249 = sphi 0, %s235
    %s253 = sphi 0, %s253
    %s255 = sphi 0, %s253
    %s256 = sphi 0, %s255
    %s270 = sphi 0, %s256
    %s274 = sphi 0, %s274
    %s276 = sphi 0, %s274
    %s277 = sphi 0, %s276
    %s291 = sphi 0, %s277
    %s295 = sphi 0, %s295
    %s297 = sphi 0, %s295
    %s298 = sphi 0, %s297
    %s312 = sphi 0, %s298
    %s316 = sphi 0, %s316
    %s318 = sphi 0, %s316
    %s319 = sphi 0, %s318
    %s333 = sphi 0, %s319
    %s337 = sphi 0, %s337
    %s339 = sphi 0, %s337
    %s340 = sphi 0, %s339
    %s354 = sphi 0, %s340
    %s358 = sphi 0, %s358
    %s360 = sphi 0, %s358
    %s361 = sphi 0, %s360
    %s375 = sphi 0, %s361
    %s379 = sphi 0, %s379
    %s381 = sphi 0, %s379
    %s382 = sphi 0, %s381
    %s396 = sphi 0, %s382
    %s400 = sphi 0, %s400
    %s402 = sphi 0, %s400
    %s403 = sphi 0, %s402
    %s417 = sphi 0, %s403
    %s421 = sphi 0, %s421
    %s423 = sphi 0, %s421
    %s424 = sphi 0, %s423
    %s438 = sphi 0, %s424
    %s444 = sphi 0, %s446
    %s447 = sphi 0, %s444
    %s448 = sphi 0, %s447
    %s464 = sphi 0, %s448
  $region4: #{spatio_temporal_discriminator_forward.1} parent=0 // loop_header_branch
    %28 = sbr.rel (%p26) target = $region8
  $region5: #{spatio_temporal_discriminator_forward.1} parent=0 // loop_body
    %s30 = ssub.s32 %s25, 1
    %s31 = ssub.s32 %s25, 2
    %s32 = sadd.s32 %s25, 1
    %s33 = ssub.s32 %s25, %s32
    %p34 = scmp.eq.s32.totalorder %s33, 0
    %s36 = sadd.s32 %s35, 1
    %s37 = scalar_select %p34, %s35, %s36
    %p40 = pneg %p34
    %p41 = scmp.eq.s32.totalorder %s25, 1
    %p42 = por %p40, %p41
    %p43 = scmp.ne.s32.totalorder %s35, %s38
    %p44 = scmp.eq.s32.totalorder %s25, 0
    %p45 = por %p43, %p44
    %p46 = scmp.ne.s32.totalorder %s35, %s38
    %p47 = scmp.eq.s32.totalorder %s30, 1
    %p48 = por %p46, %p47
    %p49 = scmp.ne.s32.totalorder %s38, %s39
    %p50 = scmp.eq.s32.totalorder %s30, 0
    %p51 = por %p49, %p50
    %p52 = scmp.ne.s32.totalorder %s38, %s39
    %p53 = scmp.eq.s32.totalorder %s31, 1
    %p54 = por %p52, %p53
    %p56 = scmp.ne.s32.totalorder %s39, %s55
    %p57 = scmp.eq.s32.totalorder %s31, 0
    %p58 = por %p56, %p57
    %s59 = ssub.s32 %s25, %s32
    %p60 = scmp.eq.s32.totalorder %s59, 0
    %s62 = sadd.s32 %s61, 1
    %s63 = scalar_select %p60, %s61, %s62
    %p66 = pneg %p60
    %p67 = scmp.eq.s32.totalorder %s25, 1
    %p68 = por %p66, %p67
    %p69 = scmp.ne.s32.totalorder %s61, %s64
    %p70 = scmp.eq.s32.totalorder %s25, 0
    %p71 = por %p69, %p70
    %p72 = scmp.ne.s32.totalorder %s61, %s64
    %p73 = scmp.eq.s32.totalorder %s30, 1
    %p74 = por %p72, %p73
    %p75 = scmp.ne.s32.totalorder %s64, %s65
    %p76 = scmp.eq.s32.totalorder %s30, 0
    %p77 = por %p75, %p76
    %p78 = scmp.ne.s32.totalorder %s64, %s65
    %p79 = scmp.eq.s32.totalorder %s31, 1
    %p80 = por %p78, %p79
    %p82 = scmp.ne.s32.totalorder %s65, %s81
    %p83 = scmp.eq.s32.totalorder %s31, 0
    %p84 = por %p82, %p83
    %s86 = sadd.s32 %s85, 1
    %p89 = scmp.eq.s32.totalorder %s25, 1
    %p90 = scmp.ne.s32.totalorder %s85, %s87
    %p91 = scmp.eq.s32.totalorder %s25, 0
    %p92 = por %p90, %p91
    %p93 = scmp.ne.s32.totalorder %s85, %s87
    %p94 = scmp.eq.s32.totalorder %s30, 1
    %p95 = por %p93, %p94
    %p96 = scmp.ne.s32.totalorder %s87, %s88
    %p97 = scmp.eq.s32.totalorder %s30, 0
    %p98 = por %p96, %p97
    %p99 = scmp.ne.s32.totalorder %s87, %s88
    %p100 = scmp.eq.s32.totalorder %s31, 1
    %p101 = por %p99, %p100
    %p103 = scmp.ne.s32.totalorder %s88, %s102
    %p104 = scmp.eq.s32.totalorder %s31, 0
    %p105 = por %p103, %p104
    %s107 = sadd.s32 %s106, 1
    %p110 = scmp.eq.s32.totalorder %s25, 1
    %p111 = scmp.ne.s32.totalorder %s106, %s108
    %p112 = scmp.eq.s32.totalorder %s25, 0
    %p113 = por %p111, %p112
    %p114 = scmp.ne.s32.totalorder %s106, %s108
    %p115 = scmp.eq.s32.totalorder %s30, 1
    %p116 = por %p114, %p115
    %p117 = scmp.ne.s32.totalorder %s108, %s109
    %p118 = scmp.eq.s32.totalorder %s30, 0
    %p119 = por %p117, %p118
    %p120 = scmp.ne.s32.totalorder %s108, %s109
    %p121 = scmp.eq.s32.totalorder %s31, 1
    %p122 = por %p120, %p121
    %p124 = scmp.ne.s32.totalorder %s109, %s123
    %p125 = scmp.eq.s32.totalorder %s31, 0
    %p126 = por %p124, %p125
    %s128 = sadd.s32 %s127, 1
    %p131 = scmp.eq.s32.totalorder %s25, 1
    %p132 = scmp.ne.s32.totalorder %s127, %s129
    %p133 = scmp.eq.s32.totalorder %s25, 0
    %p134 = por %p132, %p133
    %p135 = scmp.ne.s32.totalorder %s127, %s129
    %p136 = scmp.eq.s32.totalorder %s30, 1
    %p137 = por %p135, %p136
    %p138 = scmp.ne.s32.totalorder %s129, %s130
    %p139 = scmp.eq.s32.totalorder %s30, 0
    %p140 = por %p138, %p139
    %p141 = scmp.ne.s32.totalorder %s129, %s130
    %p142 = scmp.eq.s32.totalorder %s31, 1
    %p143 = por %p141, %p142
    %p145 = scmp.ne.s32.totalorder %s130, %s144
    %p146 = scmp.eq.s32.totalorder %s31, 0
    %p147 = por %p145, %p146
    %s149 = sadd.s32 %s148, 1
    %p152 = scmp.eq.s32.totalorder %s25, 1
    %p153 = scmp.ne.s32.totalorder %s148, %s150
    %p154 = scmp.eq.s32.totalorder %s25, 0
    %p155 = por %p153, %p154
    %p156 = scmp.ne.s32.totalorder %s148, %s150
    %p157 = scmp.eq.s32.totalorder %s30, 1
    %p158 = por %p156, %p157
    %p159 = scmp.ne.s32.totalorder %s150, %s151
    %p160 = scmp.eq.s32.totalorder %s30, 0
    %p161 = por %p159, %p160
    %p162 = scmp.ne.s32.totalorder %s150, %s151
    %p163 = scmp.eq.s32.totalorder %s31, 1
    %p164 = por %p162, %p163
    %p166 = scmp.ne.s32.totalorder %s151, %s165
    %p167 = scmp.eq.s32.totalorder %s31, 0
    %p168 = por %p166, %p167
    %s170 = sadd.s32 %s169, 1
    %p173 = scmp.eq.s32.totalorder %s25, 1
    %p174 = scmp.ne.s32.totalorder %s169, %s171
    %p175 = scmp.eq.s32.totalorder %s25, 0
    %p176 = por %p174, %p175
    %p177 = scmp.ne.s32.totalorder %s169, %s171
    %p178 = scmp.eq.s32.totalorder %s30, 1
    %p179 = por %p177, %p178
    %p180 = scmp.ne.s32.totalorder %s171, %s172
    %p181 = scmp.eq.s32.totalorder %s30, 0
    %p182 = por %p180, %p181
    %p183 = scmp.ne.s32.totalorder %s171, %s172
    %p184 = scmp.eq.s32.totalorder %s31, 1
    %p185 = por %p183, %p184
    %p187 = scmp.ne.s32.totalorder %s172, %s186
    %p188 = scmp.eq.s32.totalorder %s31, 0
    %p189 = por %p187, %p188
    %s191 = sadd.s32 %s190, 1
    %p194 = scmp.eq.s32.totalorder %s25, 1
    %p195 = scmp.ne.s32.totalorder %s190, %s192
    %p196 = scmp.eq.s32.totalorder %s25, 0
    %p197 = por %p195, %p196
    %p198 = scmp.ne.s32.totalorder %s190, %s192
    %p199 = scmp.eq.s32.totalorder %s30, 1
    %p200 = por %p198, %p199
    %p201 = scmp.ne.s32.totalorder %s192, %s193
    %p202 = scmp.eq.s32.totalorder %s30, 0
    %p203 = por %p201, %p202
    %p204 = scmp.ne.s32.totalorder %s192, %s193
    %p205 = scmp.eq.s32.totalorder %s31, 1
    %p206 = por %p204, %p205
    %p208 = scmp.ne.s32.totalorder %s193, %s207
    %p209 = scmp.eq.s32.totalorder %s31, 0
    %p210 = por %p208, %p209
    %s212 = sadd.s32 %s211, 1
    %p215 = scmp.eq.s32.totalorder %s25, 1
    %p216 = scmp.ne.s32.totalorder %s211, %s213
    %p217 = scmp.eq.s32.totalorder %s25, 0
    %p218 = por %p216, %p217
    %p219 = scmp.ne.s32.totalorder %s211, %s213
    %p220 = scmp.eq.s32.totalorder %s30, 1
    %p221 = por %p219, %p220
    %p222 = scmp.ne.s32.totalorder %s213, %s214
    %p223 = scmp.eq.s32.totalorder %s30, 0
    %p224 = por %p222, %p223
    %p225 = scmp.ne.s32.totalorder %s213, %s214
    %p226 = scmp.eq.s32.totalorder %s31, 1
    %p227 = por %p225, %p226
    %p229 = scmp.ne.s32.totalorder %s214, %s228
    %p230 = scmp.eq.s32.totalorder %s31, 0
    %p231 = por %p229, %p230
    %s233 = sadd.s32 %s232, 1
    %p236 = scmp.eq.s32.totalorder %s25, 1
    %p237 = scmp.ne.s32.totalorder %s232, %s234
    %p238 = scmp.eq.s32.totalorder %s25, 0
    %p239 = por %p237, %p238
    %p240 = scmp.ne.s32.totalorder %s232, %s234
    %p241 = scmp.eq.s32.totalorder %s30, 1
    %p242 = por %p240, %p241
    %p243 = scmp.ne.s32.totalorder %s234, %s235
    %p244 = scmp.eq.s32.totalorder %s30, 0
    %p245 = por %p243, %p244
    %p246 = scmp.ne.s32.totalorder %s234, %s235
    %p247 = scmp.eq.s32.totalorder %s31, 1
    %p248 = por %p246, %p247
    %p250 = scmp.ne.s32.totalorder %s235, %s249
    %p251 = scmp.eq.s32.totalorder %s31, 0
    %p252 = por %p250, %p251
    %s254 = sadd.s32 %s253, 1
    %p257 = scmp.eq.s32.totalorder %s25, 1
    %p258 = scmp.ne.s32.totalorder %s253, %s255
    %p259 = scmp.eq.s32.totalorder %s25, 0
    %p260 = por %p258, %p259
    %p261 = scmp.ne.s32.totalorder %s253, %s255
    %p262 = scmp.eq.s32.totalorder %s30, 1
    %p263 = por %p261, %p262
    %p264 = scmp.ne.s32.totalorder %s255, %s256
    %p265 = scmp.eq.s32.totalorder %s30, 0
    %p266 = por %p264, %p265
    %p267 = scmp.ne.s32.totalorder %s255, %s256
    %p268 = scmp.eq.s32.totalorder %s31, 1
    %p269 = por %p267, %p268
    %p271 = scmp.ne.s32.totalorder %s256, %s270
    %p272 = scmp.eq.s32.totalorder %s31, 0
    %p273 = por %p271, %p272
    %s275 = sadd.s32 %s274, 1
    %p278 = scmp.eq.s32.totalorder %s25, 1
    %p279 = scmp.ne.s32.totalorder %s274, %s276
    %p280 = scmp.eq.s32.totalorder %s25, 0
    %p281 = por %p279, %p280
    %p282 = scmp.ne.s32.totalorder %s274, %s276
    %p283 = scmp.eq.s32.totalorder %s30, 1
    %p284 = por %p282, %p283
    %p285 = scmp.ne.s32.totalorder %s276, %s277
    %p286 = scmp.eq.s32.totalorder %s30, 0
    %p287 = por %p285, %p286
    %p288 = scmp.ne.s32.totalorder %s276, %s277
    %p289 = scmp.eq.s32.totalorder %s31, 1
    %p290 = por %p288, %p289
    %p292 = scmp.ne.s32.totalorder %s277, %s291
    %p293 = scmp.eq.s32.totalorder %s31, 0
    %p294 = por %p292, %p293
    %s296 = sadd.s32 %s295, 1
    %p299 = scmp.eq.s32.totalorder %s25, 1
    %p300 = scmp.ne.s32.totalorder %s295, %s297
    %p301 = scmp.eq.s32.totalorder %s25, 0
    %p302 = por %p300, %p301
    %p303 = scmp.ne.s32.totalorder %s295, %s297
    %p304 = scmp.eq.s32.totalorder %s30, 1
    %p305 = por %p303, %p304
    %p306 = scmp.ne.s32.totalorder %s297, %s298
    %p307 = scmp.eq.s32.totalorder %s30, 0
    %p308 = por %p306, %p307
    %p309 = scmp.ne.s32.totalorder %s297, %s298
    %p310 = scmp.eq.s32.totalorder %s31, 1
    %p311 = por %p309, %p310
    %p313 = scmp.ne.s32.totalorder %s298, %s312
    %p314 = scmp.eq.s32.totalorder %s31, 0
    %p315 = por %p313, %p314
    %s317 = sadd.s32 %s316, 1
    %p320 = scmp.eq.s32.totalorder %s25, 1
    %p321 = scmp.ne.s32.totalorder %s316, %s318
    %p322 = scmp.eq.s32.totalorder %s25, 0
    %p323 = por %p321, %p322
    %p324 = scmp.ne.s32.totalorder %s316, %s318
    %p325 = scmp.eq.s32.totalorder %s30, 1
    %p326 = por %p324, %p325
    %p327 = scmp.ne.s32.totalorder %s318, %s319
    %p328 = scmp.eq.s32.totalorder %s30, 0
    %p329 = por %p327, %p328
    %p330 = scmp.ne.s32.totalorder %s318, %s319
    %p331 = scmp.eq.s32.totalorder %s31, 1
    %p332 = por %p330, %p331
    %p334 = scmp.ne.s32.totalorder %s319, %s333
    %p335 = scmp.eq.s32.totalorder %s31, 0
    %p336 = por %p334, %p335
    %s338 = sadd.s32 %s337, 1
    %p341 = scmp.eq.s32.totalorder %s25, 1
    %p342 = scmp.ne.s32.totalorder %s337, %s339
    %p343 = scmp.eq.s32.totalorder %s25, 0
    %p344 = por %p342, %p343
    %p345 = scmp.ne.s32.totalorder %s337, %s339
    %p346 = scmp.eq.s32.totalorder %s30, 1
    %p347 = por %p345, %p346
    %p348 = scmp.ne.s32.totalorder %s339, %s340
    %p349 = scmp.eq.s32.totalorder %s30, 0
    %p350 = por %p348, %p349
    %p351 = scmp.ne.s32.totalorder %s339, %s340
    %p352 = scmp.eq.s32.totalorder %s31, 1
    %p353 = por %p351, %p352
    %p355 = scmp.ne.s32.totalorder %s340, %s354
    %p356 = scmp.eq.s32.totalorder %s31, 0
    %p357 = por %p355, %p356
    %s359 = sadd.s32 %s358, 1
    %p362 = scmp.eq.s32.totalorder %s25, 1
    %p363 = scmp.ne.s32.totalorder %s358, %s360
    %p364 = scmp.eq.s32.totalorder %s25, 0
    %p365 = por %p363, %p364
    %p366 = scmp.ne.s32.totalorder %s358, %s360
    %p367 = scmp.eq.s32.totalorder %s30, 1
    %p368 = por %p366, %p367
    %p369 = scmp.ne.s32.totalorder %s360, %s361
    %p370 = scmp.eq.s32.totalorder %s30, 0
    %p371 = por %p369, %p370
    %p372 = scmp.ne.s32.totalorder %s360, %s361
    %p373 = scmp.eq.s32.totalorder %s31, 1
    %p374 = por %p372, %p373
    %p376 = scmp.ne.s32.totalorder %s361, %s375
    %p377 = scmp.eq.s32.totalorder %s31, 0
    %p378 = por %p376, %p377
    %s380 = sadd.s32 %s379, 1
    %p383 = scmp.eq.s32.totalorder %s25, 1
    %p384 = scmp.ne.s32.totalorder %s379, %s381
    %p385 = scmp.eq.s32.totalorder %s25, 0
    %p386 = por %p384, %p385
    %p387 = scmp.ne.s32.totalorder %s379, %s381
    %p388 = scmp.eq.s32.totalorder %s30, 1
    %p389 = por %p387, %p388
    %p390 = scmp.ne.s32.totalorder %s381, %s382
    %p391 = scmp.eq.s32.totalorder %s30, 0
    %p392 = por %p390, %p391
    %p393 = scmp.ne.s32.totalorder %s381, %s382
    %p394 = scmp.eq.s32.totalorder %s31, 1
    %p395 = por %p393, %p394
    %p397 = scmp.ne.s32.totalorder %s382, %s396
    %p398 = scmp.eq.s32.totalorder %s31, 0
    %p399 = por %p397, %p398
    %s401 = sadd.s32 %s400, 1
    %p404 = scmp.eq.s32.totalorder %s25, 1
    %p405 = scmp.ne.s32.totalorder %s400, %s402
    %p406 = scmp.eq.s32.totalorder %s25, 0
    %p407 = por %p405, %p406
    %p408 = scmp.ne.s32.totalorder %s400, %s402
    %p409 = scmp.eq.s32.totalorder %s30, 1
    %p410 = por %p408, %p409
    %p411 = scmp.ne.s32.totalorder %s402, %s403
    %p412 = scmp.eq.s32.totalorder %s30, 0
    %p413 = por %p411, %p412
    %p414 = scmp.ne.s32.totalorder %s402, %s403
    %p415 = scmp.eq.s32.totalorder %s31, 1
    %p416 = por %p414, %p415
    %p418 = scmp.ne.s32.totalorder %s403, %s417
    %p419 = scmp.eq.s32.totalorder %s31, 0
    %p420 = por %p418, %p419
    %s422 = sadd.s32 %s421, 1
    %p425 = scmp.eq.s32.totalorder %s25, 1
    %p426 = scmp.ne.s32.totalorder %s421, %s423
    %p427 = scmp.eq.s32.totalorder %s25, 0
    %p428 = por %p426, %p427
    %p429 = scmp.ne.s32.totalorder %s421, %s423
    %p430 = scmp.eq.s32.totalorder %s30, 1
    %p431 = por %p429, %p430
    %p432 = scmp.ne.s32.totalorder %s423, %s424
    %p433 = scmp.eq.s32.totalorder %s30, 0
    %p434 = por %p432, %p433
    %p435 = scmp.ne.s32.totalorder %s423, %s424
    %p436 = scmp.eq.s32.totalorder %s31, 1
    %p437 = por %p435, %p436
    %p439 = scmp.ne.s32.totalorder %s424, %s438
    %p440 = scmp.eq.s32.totalorder %s31, 0
    %p441 = por %p439, %p440
    %s442 = ssub.s32 %s25, %s32
    %p443 = scmp.eq.s32.totalorder %s442, 0
    %s445 = sadd.s32 %s444, 1
    %s446 = scalar_select %p443, %s444, %s445
    %p449 = pneg %p443
    %p450 = scmp.eq.s32.totalorder %s25, 1
    %p451 = por %p449, %p450
    %p452 = scmp.ne.s32.totalorder %s444, %s447
    %p453 = scmp.eq.s32.totalorder %s25, 0
    %p454 = por %p452, %p453
    %p455 = scmp.ne.s32.totalorder %s444, %s447
    %p456 = scmp.eq.s32.totalorder %s30, 1
    %p457 = por %p455, %p456
    %p458 = scmp.ne.s32.totalorder %s447, %s448
    %p459 = scmp.eq.s32.totalorder %s30, 0
    %p460 = por %p458, %p459
    %p461 = scmp.ne.s32.totalorder %s447, %s448
    %p462 = scmp.eq.s32.totalorder %s31, 1
    %p463 = por %p461, %p462
    %p465 = scmp.ne.s32.totalorder %s448, %s464
    %p466 = scmp.eq.s32.totalorder %s31, 0
    %p467 = por %p465, %p466
    %p468 = scmp.le.s32.totalorder 1, %s25
    %p469 = scmp.lt.s32.totalorder %s25, 3
    %p470 = pnand %p468, %p469
    %p471 = pneg %p470
    // Predicated region
    $region9: #{spatio_temporal_discriminator_forward.1} parent=5 // pred_check
      _
    $region10: #{spatio_temporal_discriminator_forward.1} parent=5 // pred_check_branch
      %473 = sbr.rel (%p470) target = $region12
    $region11: #{spatio_temporal_discriminator_forward.1} parent=5 // pred_region
      %s474 = ssub.s32 %s25, 1
      // Predicated region
      $region13: #{spatio_temporal_discriminator_forward.1} parent=11 // pred_check
        %p475 = pneg %p98
      $region14: #{spatio_temporal_discriminator_forward.1} parent=11 // pred_check_branch
        %477 = sbr.rel (%p475) target = $region16
      $region15: #{spatio_temporal_discriminator_forward.1} parent=11 // pred_region
        _
      $region16: #{spatio_temporal_discriminator_forward.1} parent=11 // pred_fallthru
        _
      // Predicated region
      $region17: #{spatio_temporal_discriminator_forward.1} parent=11 // pred_check
        %p478 = pneg %p119
      $region18: #{spatio_temporal_discriminator_forward.1} parent=11 // pred_check_branch
        %480 = sbr.rel (%p478) target = $region20
      $region19: #{spatio_temporal_discriminator_forward.1} parent=11 // pred_region
        _
      $region20: #{spatio_temporal_discriminator_forward.1} parent=11 // pred_fallthru
        _
      // Predicated region
      $region21: #{spatio_temporal_discriminator_forward.1} parent=11 // pred_check
        %p481 = pneg %p140
      $region22: #{spatio_temporal_discriminator_forward.1} parent=11 // pred_check_branch
        %483 = sbr.rel (%p481) target = $region24
      $region23: #{spatio_temporal_discriminator_forward.1} parent=11 // pred_region
        _
      $region24: #{spatio_temporal_discriminator_forward.1} parent=11 // pred_fallthru
        _
      // Predicated region
      $region25: #{spatio_temporal_discriminator_forward.1} parent=11 // pred_check
        %p484 = pneg %p161
      $region26: #{spatio_temporal_discriminator_forward.1} parent=11 // pred_check_branch
        %486 = sbr.rel (%p484) target = $region28
      $region27: #{spatio_temporal_discriminator_forward.1} parent=11 // pred_region
        _
      $region28: #{spatio_temporal_discriminator_forward.1} parent=11 // pred_fallthru
        _
      // Predicated region
      $region29: #{spatio_temporal_discriminator_forward.1} parent=11 // pred_check
        %p487 = pneg %p182
      $region30: #{spatio_temporal_discriminator_forward.1} parent=11 // pred_check_branch
        %489 = sbr.rel (%p487) target = $region32
      $region31: #{spatio_temporal_discriminator_forward.1} parent=11 // pred_region
        _
      $region32: #{spatio_temporal_discriminator_forward.1} parent=11 // pred_fallthru
        _
      // Predicated region
      $region33: #{spatio_temporal_discriminator_forward.1} parent=11 // pred_check
        %p490 = pneg %p203
      $region34: #{spatio_temporal_discriminator_forward.1} parent=11 // pred_check_branch
        %492 = sbr.rel (%p490) target = $region36
      $region35: #{spatio_temporal_discriminator_forward.1} parent=11 // pred_region
        _
      $region36: #{spatio_temporal_discriminator_forward.1} parent=11 // pred_fallthru
        _
      // Predicated region
      $region37: #{spatio_temporal_discriminator_forward.1} parent=11 // pred_check
        %p493 = pneg %p224
      $region38: #{spatio_temporal_discriminator_forward.1} parent=11 // pred_check_branch
        %495 = sbr.rel (%p493) target = $region40
      $region39: #{spatio_temporal_discriminator_forward.1} parent=11 // pred_region
        _
      $region40: #{spatio_temporal_discriminator_forward.1} parent=11 // pred_fallthru
        _
      // Predicated region
      $region41: #{spatio_temporal_discriminator_forward.1} parent=11 // pred_check
        %p496 = pneg %p245
      $region42: #{spatio_temporal_discriminator_forward.1} parent=11 // pred_check_branch
        %498 = sbr.rel (%p496) target = $region44
      $region43: #{spatio_temporal_discriminator_forward.1} parent=11 // pred_region
        _
      $region44: #{spatio_temporal_discriminator_forward.1} parent=11 // pred_fallthru
        _
      // Predicated region
      $region45: #{spatio_temporal_discriminator_forward.1} parent=11 // pred_check
        %p499 = pneg %p266
      $region46: #{spatio_temporal_discriminator_forward.1} parent=11 // pred_check_branch
        %501 = sbr.rel (%p499) target = $region48
      $region47: #{spatio_temporal_discriminator_forward.1} parent=11 // pred_region
        _
      $region48: #{spatio_temporal_discriminator_forward.1} parent=11 // pred_fallthru
        _
      // Predicated region
      $region49: #{spatio_temporal_discriminator_forward.1} parent=11 // pred_check
        %p502 = pneg %p287
      $region50: #{spatio_temporal_discriminator_forward.1} parent=11 // pred_check_branch
        %504 = sbr.rel (%p502) target = $region52
      $region51: #{spatio_temporal_discriminator_forward.1} parent=11 // pred_region
        _
      $region52: #{spatio_temporal_discriminator_forward.1} parent=11 // pred_fallthru
        _
      // Predicated region
      $region53: #{spatio_temporal_discriminator_forward.1} parent=11 // pred_check
        %p505 = pneg %p308
      $region54: #{spatio_temporal_discriminator_forward.1} parent=11 // pred_check_branch
        %507 = sbr.rel (%p505) target = $region56
      $region55: #{spatio_temporal_discriminator_forward.1} parent=11 // pred_region
        _
      $region56: #{spatio_temporal_discriminator_forward.1} parent=11 // pred_fallthru
        _
      // Predicated region
      $region57: #{spatio_temporal_discriminator_forward.1} parent=11 // pred_check
        %p508 = pneg %p329
      $region58: #{spatio_temporal_discriminator_forward.1} parent=11 // pred_check_branch
        %510 = sbr.rel (%p508) target = $region60
      $region59: #{spatio_temporal_discriminator_forward.1} parent=11 // pred_region
        _
      $region60: #{spatio_temporal_discriminator_forward.1} parent=11 // pred_fallthru
        _
      // Predicated region
      $region61: #{spatio_temporal_discriminator_forward.1} parent=11 // pred_check
        %p511 = pneg %p350
      $region62: #{spatio_temporal_discriminator_forward.1} parent=11 // pred_check_branch
        %513 = sbr.rel (%p511) target = $region64
      $region63: #{spatio_temporal_discriminator_forward.1} parent=11 // pred_region
        _
      $region64: #{spatio_temporal_discriminator_forward.1} parent=11 // pred_fallthru
        _
      // Predicated region
      $region65: #{spatio_temporal_discriminator_forward.1} parent=11 // pred_check
        %p514 = pneg %p371
      $region66: #{spatio_temporal_discriminator_forward.1} parent=11 // pred_check_branch
        %516 = sbr.rel (%p514) target = $region68
      $region67: #{spatio_temporal_discriminator_forward.1} parent=11 // pred_region
        _
      $region68: #{spatio_temporal_discriminator_forward.1} parent=11 // pred_fallthru
        _
      // Predicated region
      $region69: #{spatio_temporal_discriminator_forward.1} parent=11 // pred_check
        %p517 = pneg %p392
      $region70: #{spatio_temporal_discriminator_forward.1} parent=11 // pred_check_branch
        %519 = sbr.rel (%p517) target = $region72
      $region71: #{spatio_temporal_discriminator_forward.1} parent=11 // pred_region
        _
      $region72: #{spatio_temporal_discriminator_forward.1} parent=11 // pred_fallthru
        _
      // Predicated region
      $region73: #{spatio_temporal_discriminator_forward.1} parent=11 // pred_check
        %p520 = pneg %p413
      $region74: #{spatio_temporal_discriminator_forward.1} parent=11 // pred_check_branch
        %522 = sbr.rel (%p520) target = $region76
      $region75: #{spatio_temporal_discriminator_forward.1} parent=11 // pred_region
        _
      $region76: #{spatio_temporal_discriminator_forward.1} parent=11 // pred_fallthru
        _
      // Predicated region
      $region77: #{spatio_temporal_discriminator_forward.1} parent=11 // pred_check
        %p523 = pneg %p434
      $region78: #{spatio_temporal_discriminator_forward.1} parent=11 // pred_check_branch
        %525 = sbr.rel (%p523) target = $region80
      $region79: #{spatio_temporal_discriminator_forward.1} parent=11 // pred_region
        _
      $region80: #{spatio_temporal_discriminator_forward.1} parent=11 // pred_fallthru
        _
    $region12: #{spatio_temporal_discriminator_forward.1} parent=5 // pred_fallthru
      _
    %p526 = scmp.lt.s32.totalorder %s25, 2
    // Predicated region
    $region81: #{spatio_temporal_discriminator_forward.1} parent=5 // pred_check
      %p527 = pneg %p526
    $region82: #{spatio_temporal_discriminator_forward.1} parent=5 // pred_check_branch
      %529 = sbr.rel (%p527) target = $region84
    $region83: #{spatio_temporal_discriminator_forward.1} parent=5 // pred_region
      // Predicated region
      $region85: #{spatio_temporal_discriminator_forward.1} parent=83 // pred_check
        %p530 = pneg %p45
      $region86: #{spatio_temporal_discriminator_forward.1} parent=83 // pred_check_branch
        %532 = sbr.rel (%p530) target = $region88
      $region87: #{spatio_temporal_discriminator_forward.1} parent=83 // pred_region
        %p533 = scmp.lt.s32.totalorder %s25, 1
        %s534 = scalar_select %p533, %s25, 1
        %s535 = smul.addr %s534, 16
        %s536 = smul.addr %s535, 8
        %s537 = scalar_lea.vmem %s0, %s536
      $region88: #{spatio_temporal_discriminator_forward.1} parent=83 // pred_fallthru
        _
      // Predicated region
      $region89: #{spatio_temporal_discriminator_forward.1} parent=83 // pred_check
        %p538 = pneg %p71
      $region90: #{spatio_temporal_discriminator_forward.1} parent=83 // pred_check_branch
        %540 = sbr.rel (%p538) target = $region92
      $region91: #{spatio_temporal_discriminator_forward.1} parent=83 // pred_region
        %p541 = scmp.lt.s32.totalorder %s25, 1
        %s542 = scalar_select %p541, %s25, 1
        %s543 = smul.addr %s542, 4
        %s544 = scalar_lea.vmem %s1, %s543
      $region92: #{spatio_temporal_discriminator_forward.1} parent=83 // pred_fallthru
        _
    $region84: #{spatio_temporal_discriminator_forward.1} parent=5 // pred_fallthru
      _
    %p545 = scmp.le.s32.totalorder 1, %s25
    %p546 = scmp.lt.s32.totalorder %s25, 3
    %p547 = pnand %p545, %p546
    %p548 = pneg %p547
    // Predicated region
    $region93: #{spatio_temporal_discriminator_forward.1} parent=5 // pred_check
      _
    $region94: #{spatio_temporal_discriminator_forward.1} parent=5 // pred_check_branch
      %550 = sbr.rel (%p547) target = $region96
    $region95: #{spatio_temporal_discriminator_forward.1} parent=5 // pred_region
      %s551 = ssub.s32 %s25, 1
      %p552 = scmp.lt.s32.totalorder %s30, 1
      %s553 = scalar_select %p552, %s30, 1
      %s554 = smul.addr %s553, 16
      %s555 = smul.addr %s554, 8
      %s556 = scalar_lea.vmem %s0, %s555
      %p557 = pneg %p51
      %p558 = pneg %p48
      %p559 = scmp.lt.s32.totalorder %s30, 1
      %s560 = scalar_select %p559, %s30, 1
      %s561 = smul.addr %s560, 4
      %s562 = scalar_lea.vmem %s1, %s561
      %p563 = pneg %p77
      %p564 = pneg %p74
      %p565 = pneg %p98
      %p566 = pneg %p95
      %p567 = pneg %p119
      %p568 = pneg %p116
      %p569 = pneg %p140
      %p570 = pneg %p137
      %p571 = pneg %p161
      %p572 = pneg %p158
      %p573 = pneg %p182
      %p574 = pneg %p179
      %p575 = pneg %p203
      %p576 = pneg %p200
      %p577 = pneg %p224
      %p578 = pneg %p221
      %p579 = pneg %p245
      %p580 = pneg %p242
      %p581 = pneg %p266
      %p582 = pneg %p263
      %p583 = pneg %p287
      %p584 = pneg %p284
      %p585 = pneg %p308
      %p586 = pneg %p305
      %p587 = pneg %p329
      %p588 = pneg %p326
      %p589 = pneg %p350
      %p590 = pneg %p347
      %p591 = pneg %p371
      %p592 = pneg %p368
      %p593 = pneg %p392
      %p594 = pneg %p389
      %p595 = pneg %p413
      %p596 = pneg %p410
      %p597 = pneg %p434
      %p598 = pneg %p431
      %p599 = pneg %p460
      %p600 = pneg %p457
      %p601 = scmp.lt.s32.totalorder %s30, 1
      %s602 = scalar_select %p601, %s30, 1
      %s603 = smul.addr %s602, 8
      %s604 = scalar_lea.vmem %s19, %s603
      %p605 = scmp.lt.s32.totalorder %s30, 1
      %s606 = scalar_select %p605, %s30, 1
      %s607 = smul.addr %s606, 16
      %s608 = smul.addr %s607, 8
      %s609 = scalar_lea.vmem %s0, %s608
      %p610 = scmp.lt.s32.totalorder %s30, 1
      %s611 = scalar_select %p610, %s30, 1
      %s612 = smul.addr %s611, 4
      %s613 = scalar_lea.vmem %s1, %s612
      %p614 = scmp.lt.s32.totalorder %s30, 1
      %s615 = scalar_select %p614, %s30, 1
      %s616 = smul.addr %s615, 8
      %s617 = scalar_lea.vmem %s19, %s616
      %v619 = vld [vmem:[%s609] sm:$0xff]
      %v620 = vld [vmem:[%s609 + $0x8] sm:$0xff]
      %v621 = vld [vmem:[%s609 + $0x10] sm:$0xff]
      %v622 = vld [vmem:[%s609 + $0x18] sm:$0xff]
      %v623 = vld [vmem:[%s609 + $0x20] sm:$0xff]
      %v624 = vld [vmem:[%s609 + $0x28] sm:$0xff]
      %v625 = vld [vmem:[%s609 + $0x30] sm:$0xff]
      %v626 = vld [vmem:[%s609 + $0x38] sm:$0xff]
      %v627 = vld [vmem:[%s609 + $0x40] sm:$0xff]
      %v628 = vld [vmem:[%s609 + $0x48] sm:$0xff]
      %v629 = vld [vmem:[%s609 + $0x50] sm:$0xff]
      %v630 = vld [vmem:[%s609 + $0x58] sm:$0xff]
      %v631 = vld [vmem:[%s609 + $0x60] sm:$0xff]
      %v632 = vld [vmem:[%s609 + $0x68] sm:$0xff]
      %v633 = vld [vmem:[%s609 + $0x70] sm:$0xff]
      %v634 = vld [vmem:[%s609 + $0x78] sm:$0xff]
      %v635 = vld [vmem:[%s2] sm:$0xff]
      %v636 = vld [vmem:[%s2 + $0x8] sm:$0xff]
      %v637 = vld [vmem:[%s2 + $0x10] sm:$0xff]
      %v638 = vld [vmem:[%s2 + $0x18] sm:$0xff]
      %v639 = vld [vmem:[%s2 + $0x20] sm:$0xff]
      %v640 = vld [vmem:[%s2 + $0x28] sm:$0xff]
      %v641 = vld [vmem:[%s2 + $0x30] sm:$0xff]
      %v642 = vld [vmem:[%s2 + $0x38] sm:$0xff]
      %v643 = vld [vmem:[%s2 + $0x40] sm:$0xff]
      %v644 = vld [vmem:[%s2 + $0x48] sm:$0xff]
      %v645 = vld [vmem:[%s2 + $0x50] sm:$0xff]
      %v646 = vld [vmem:[%s2 + $0x58] sm:$0xff]
      %v647 = vld [vmem:[%s2 + $0x60] sm:$0xff]
      %v648 = vld [vmem:[%s2 + $0x68] sm:$0xff]
      %v649 = vld [vmem:[%s2 + $0x70] sm:$0xff]
      %v650 = vld [vmem:[%s2 + $0x78] sm:$0xff]
      %v651 = vpack.c.bf16 %v620, %v619
      %v652 = vpack.c.bf16 %v622, %v621
      %v653 = vpack.c.bf16 %v624, %v623
      %v654 = vpack.c.bf16 %v626, %v625
      %v655 = vpack.c.bf16 %v628, %v627
      %v656 = vpack.c.bf16 %v630, %v629
      %v657 = vpack.c.bf16 %v632, %v631
      %v658 = vpack.c.bf16 %v634, %v633
      %v659 = vld [vmem:[%s3] sm:$0xf]
      %v660 = vld [vmem:[%s3 + $0x4] sm:$0xf]
      %v661 = vld [vmem:[%s3 + $0x8] sm:$0xf]
      %v662 = vld [vmem:[%s3 + $0xc] sm:$0x3]
      %v663 = vld [vmem:[%s4] sm:$0x1]
      %v665 = vlaneseq
      %v666 = vshrl.u32 %v665, 7
      %v667 = vsub.s32 0, %v666
      %v668 = vrot.slane %v663, %v667
      %v674 = vunpack.c.l.b16 %v659
      %v675 = vunpack.c.l.b16 %v660
      %v676 = vunpack.c.l.b16 %v661
      %v677 = vunpack.c.l.b16 %v662
      %v678 = vpack.c.b16 %v675, %v674
      %v679 = vpack.c.b16 %v677, %v676
      %vm681 = vcmask 228352
      %v683 = vsel %vm681, %v651, 0
      %v686 = vsel %vm681, %v652, 0
      %v689 = vsel %vm681, %v653, 0
      %v692 = vsel %vm681, %v654, 0
      %v695 = vsel %vm681, %v655, 0
      %v698 = vsel %vm681, %v656, 0
      %v701 = vsel %vm681, %v657, 0
      %v704 = vsel %vm681, %v658, 0
      %vm706 = vcmask 1045504
      %v708 = vsel %vm706, %v679, 0
      %710 = vmatprep.subr.bf16.mxu0 0
      %711 = vmatpush1.bf16.msra.mxu0 %v678
      %712 = vmatprep.subr.bf16.mxu0 0
      %713 = vmatpush1.bf16.msra.mxu0 %v708
      %714 = vmatprep.subr.bf16.mxu0 0
      %715 = vmatpush1.bf16.msra.mxu0 0
      %716 = vmatprep.subr.bf16.mxu0 0
      %717 = vmatpush1.bf16.msra.mxu0 0
      %718 = vmatprep.subr.bf16.mxu0 0
      %719 = vmatpush1.bf16.msra.mxu0 0
      %720 = vmatprep.subr.bf16.mxu0 0
      %721 = vmatpush1.bf16.msra.mxu0 0
      %722 = vmatprep.subr.bf16.mxu0 0
      %723 = vmatpush1.bf16.msra.mxu0 0
      %724 = vmatprep.subr.bf16.mxu0 0
      %725 = vmatpush1.bf16.msra.mxu0 0
      %726 = vmatprep.subr.bf16.mxu0 0
      %727 = vmatpush1.bf16.msra.mxu0 0
      %728 = vmatprep.subr.bf16.mxu0 0
      %729 = vmatpush1.bf16.msra.mxu0 0
      %730 = vmatprep.subr.bf16.mxu0 0
      %731 = vmatpush1.bf16.msra.mxu0 0
      %732 = vmatprep.subr.bf16.mxu0 0
      %733 = vmatpush1.bf16.msra.mxu0 0
      %734 = vmatprep.subr.bf16.mxu0 0
      %735 = vmatpush1.bf16.msra.mxu0 0
      %736 = vmatprep.subr.bf16.mxu0 0
      %737 = vmatpush1.bf16.msra.mxu0 0
      %738 = vmatprep.subr.bf16.mxu0 0
      %739 = vmatpush1.bf16.msra.mxu0 0
      %740 = vmatprep.subr.bf16.mxu0 0
      %741 = vmatpush1.bf16.msra.mxu0 0
      %742 = vmatprep.mubr.bf16.mxu0 0
      %743 = vmatmul.mubr.bf16.gmra.mrb[0].mxu0 %v683
      %v744 = vpop.f32.mrb[0].mxu0
      %v745 = vadd.f32 %v668, %v744
      %v746 = vpop.f32.mrb[0].mxu0
      %v747 = vpop.f32.mrb[0].mxu0
      %v748 = vadd.f32 %v668, %v747
      %v749 = vpop.f32.mrb[0].mxu0
      %750 = vmatprep.mubr.bf16.mxu0 0
      %751 = vmatmul.mubr.bf16.gmra.mrb[0].mxu0 %v686
      %v752 = vpop.f32.mrb[0].mxu0
      %v753 = vadd.f32 %v668, %v752
      %v754 = vpop.f32.mrb[0].mxu0
      %v755 = vpop.f32.mrb[0].mxu0
      %v756 = vadd.f32 %v668, %v755
      %v757 = vpop.f32.mrb[0].mxu0
      %758 = vmatprep.mubr.bf16.mxu0 0
      %759 = vmatmul.mubr.bf16.gmra.mrb[0].mxu0 %v689
      %v760 = vpop.f32.mrb[0].mxu0
      %v761 = vadd.f32 %v668, %v760
      %v762 = vpop.f32.mrb[0].mxu0
      %v763 = vpop.f32.mrb[0].mxu0
      %v764 = vadd.f32 %v668, %v763
      %v765 = vpop.f32.mrb[0].mxu0
      %766 = vmatprep.mubr.bf16.mxu0 0
      %767 = vmatmul.mubr.bf16.gmra.mrb[0].mxu0 %v692
      %v768 = vpop.f32.mrb[0].mxu0
      %v769 = vadd.f32 %v668, %v768
      %v770 = vpop.f32.mrb[0].mxu0
      %v771 = vpop.f32.mrb[0].mxu0
      %v772 = vadd.f32 %v668, %v771
      %v773 = vpop.f32.mrb[0].mxu0
      %774 = vmatprep.mubr.bf16.mxu0 0
      %775 = vmatmul.mubr.bf16.gmra.mrb[0].mxu0 %v695
      %v776 = vpop.f32.mrb[0].mxu0
      %v777 = vadd.f32 %v668, %v776
      %v778 = vpop.f32.mrb[0].mxu0
      %v779 = vpop.f32.mrb[0].mxu0
      %v780 = vadd.f32 %v668, %v779
      %v781 = vpop.f32.mrb[0].mxu0
      %782 = vmatprep.mubr.bf16.mxu0 0
      %783 = vmatmul.mubr.bf16.gmra.mrb[0].mxu0 %v698
      %v784 = vpop.f32.mrb[0].mxu0
      %v785 = vadd.f32 %v668, %v784
      %v786 = vpop.f32.mrb[0].mxu0
      %v787 = vpop.f32.mrb[0].mxu0
      %v788 = vadd.f32 %v668, %v787
      %v789 = vpop.f32.mrb[0].mxu0
      %790 = vmatprep.mubr.bf16.mxu0 0
      %791 = vmatmul.mubr.bf16.gmra.mrb[0].mxu0 %v701
      %v792 = vpop.f32.mrb[0].mxu0
      %v793 = vadd.f32 %v668, %v792
      %v794 = vpop.f32.mrb[0].mxu0
      %v795 = vpop.f32.mrb[0].mxu0
      %v796 = vadd.f32 %v668, %v795
      %v797 = vpop.f32.mrb[0].mxu0
      %798 = vmatprep.mubr.bf16.mxu0 0
      %799 = vmatmul.mubr.bf16.gmra.mrb[0].mxu0 %v704
      %v800 = vpop.f32.mrb[0].mxu0
      %v801 = vadd.f32 %v668, %v800
      %v802 = vpop.f32.mrb[0].mxu0
      %v803 = vpop.f32.mrb[0].mxu0
      %v804 = vadd.f32 %v668, %v803
      %v805 = vpop.f32.mrb[0].mxu0
      %806 = vdwg.mxu0
      %v807 = vpack.c.bf16 %v748, %v745
      %v808 = vpack.c.bf16 %v756, %v753
      %v809 = vpack.c.bf16 %v764, %v761
      %v810 = vpack.c.bf16 %v772, %v769
      %v811 = vpack.c.bf16 %v780, %v777
      %v812 = vpack.c.bf16 %v788, %v785
      %v813 = vpack.c.bf16 %v796, %v793
      %v814 = vpack.c.bf16 %v804, %v801
      %823 = vrot.lane.b32.xlu0 %v807, 100
      %v824 = vpop.permute.xlu0 %823
      %825 = vrot.lane.b32.xlu0 %v808, 100
      %v826 = vpop.permute.xlu0 %825
      %827 = vrot.lane.b32.xlu0 %v809, 100
      %v828 = vpop.permute.xlu0 %827
      %829 = vrot.lane.b32.xlu0 %v810, 100
      %v830 = vpop.permute.xlu0 %829
      %831 = vrot.lane.b32.xlu0 %v811, 100
      %v832 = vpop.permute.xlu0 %831
      %833 = vrot.lane.b32.xlu0 %v812, 100
      %v834 = vpop.permute.xlu0 %833
      %835 = vrot.lane.b32.xlu0 %v813, 100
      %v836 = vpop.permute.xlu0 %835
      %837 = vrot.lane.b32.xlu0 %v814, 100
      %v838 = vpop.permute.xlu0 %837
      %v840 = vsel %vm681, %v807, 0
      %v843 = vsel %vm681, %v808, 0
      %v846 = vsel %vm681, %v809, 0
      %v849 = vsel %vm681, %v810, 0
      %v852 = vsel %vm681, %v811, 0
      %v855 = vsel %vm681, %v812, 0
      %v858 = vsel %vm681, %v813, 0
      %v861 = vsel %vm681, %v814, 0
      %v864 = vsel %vm681, %v824, 0
      %v867 = vsel %vm681, %v826, 0
      %v870 = vsel %vm681, %v828, 0
      %v873 = vsel %vm681, %v830, 0
      %v876 = vsel %vm681, %v832, 0
      %v879 = vsel %vm681, %v834, 0
      %v882 = vsel %vm681, %v836, 0
      %v885 = vsel %vm681, %v838, 0
      %887 = vmatprep.subr.bf16.mxu0 0
      %888 = vmatpush1.bf16.xpose.msra.mxu0 %v864
      %889 = vmatprep.subr.bf16.mxu0 0
      %890 = vmatpush1.bf16.xpose.msra.mxu0 %v867
      %891 = vmatprep.subr.bf16.mxu0 0
      %892 = vmatpush1.bf16.xpose.msra.mxu0 %v870
      %893 = vmatprep.subr.bf16.mxu0 0
      %894 = vmatpush1.bf16.xpose.msra.mxu0 %v873
      %895 = vmatprep.subr.bf16.mxu0 0
      %896 = vmatpush1.bf16.xpose.msra.mxu0 %v876
      %897 = vmatprep.subr.bf16.mxu0 0
      %898 = vmatpush1.bf16.xpose.msra.mxu0 %v879
      %899 = vmatprep.subr.bf16.mxu0 0
      %900 = vmatpush1.bf16.xpose.msra.mxu0 %v882
      %901 = vmatprep.subr.bf16.mxu0 0
      %902 = vmatpush1.bf16.xpose.msra.mxu0 %v885
      %903 = vmatprep.subr.bf16.mxu0 0
      %904 = vmatpush1.bf16.xpose.msra.mxu0 0
      %905 = vmatprep.subr.bf16.mxu0 0
      %906 = vmatpush1.bf16.xpose.msra.mxu0 0
      %907 = vmatprep.subr.bf16.mxu0 0
      %908 = vmatpush1.bf16.xpose.msra.mxu0 0
      %909 = vmatprep.subr.bf16.mxu0 0
      %910 = vmatpush1.bf16.xpose.msra.mxu0 0
      %911 = vmatprep.subr.bf16.mxu0 0
      %912 = vmatpush1.bf16.xpose.msra.mxu0 0
      %913 = vmatprep.subr.bf16.mxu0 0
      %914 = vmatpush1.bf16.xpose.msra.mxu0 0
      %915 = vmatprep.subr.bf16.mxu0 0
      %916 = vmatpush1.bf16.xpose.msra.mxu0 0
      %917 = vmatprep.subr.bf16.mxu0 0
      %918 = vmatpush1.bf16.xpose.msra.mxu0 0
      %919 = vmatprep.mubr.bf16.mxu0 0
      %920 = vmatmul.mubr.bf16.gmra.mrb[0].mxu0 %v840
      %v921 = vpop.f32.mrb[0].mxu0
      %v922 = vadd.f32 %v635, %v921
      %v923 = vpop.f32.mrb[0].mxu0
      %v924 = vpop.f32.mrb[0].mxu0
      %v925 = vadd.f32 %v636, %v924
      %v926 = vpop.f32.mrb[0].mxu0
      %927 = vmatprep.mubr.bf16.mxu0 0
      %928 = vmatmul.mubr.bf16.gmra.mrb[0].mxu0 %v843
      %v929 = vpop.f32.mrb[0].mxu0
      %v930 = vadd.f32 %v637, %v929
      %v931 = vpop.f32.mrb[0].mxu0
      %v932 = vpop.f32.mrb[0].mxu0
      %v933 = vadd.f32 %v638, %v932
      %v934 = vpop.f32.mrb[0].mxu0
      %935 = vmatprep.mubr.bf16.mxu0 0
      %936 = vmatmul.mubr.bf16.gmra.mrb[0].mxu0 %v846
      %v937 = vpop.f32.mrb[0].mxu0
      %v938 = vadd.f32 %v639, %v937
      %v939 = vpop.f32.mrb[0].mxu0
      %v940 = vpop.f32.mrb[0].mxu0
      %v941 = vadd.f32 %v640, %v940
      %v942 = vpop.f32.mrb[0].mxu0
      %943 = vmatprep.mubr.bf16.mxu0 0
      %944 = vmatmul.mubr.bf16.gmra.mrb[0].mxu0 %v849
      %v945 = vpop.f32.mrb[0].mxu0
      %v946 = vadd.f32 %v641, %v945
      %v947 = vpop.f32.mrb[0].mxu0
      %v948 = vpop.f32.mrb[0].mxu0
      %v949 = vadd.f32 %v642, %v948
      %v950 = vpop.f32.mrb[0].mxu0
      %951 = vmatprep.mubr.bf16.mxu0 0
      %952 = vmatmul.mubr.bf16.gmra.mrb[0].mxu0 %v852
      %v953 = vpop.f32.mrb[0].mxu0
      %v954 = vadd.f32 %v643, %v953
      %v955 = vpop.f32.mrb[0].mxu0
      %v956 = vpop.f32.mrb[0].mxu0
      %v957 = vadd.f32 %v644, %v956
      %v958 = vpop.f32.mrb[0].mxu0
      %959 = vmatprep.mubr.bf16.mxu0 0
      %960 = vmatmul.mubr.bf16.gmra.mrb[0].mxu0 %v855
      %v961 = vpop.f32.mrb[0].mxu0
      %v962 = vadd.f32 %v645, %v961
      %v963 = vpop.f32.mrb[0].mxu0
      %v964 = vpop.f32.mrb[0].mxu0
      %v965 = vadd.f32 %v646, %v964
      %v966 = vpop.f32.mrb[0].mxu0
      %967 = vmatprep.mubr.bf16.mxu0 0
      %968 = vmatmul.mubr.bf16.gmra.mrb[0].mxu0 %v858
      %v969 = vpop.f32.mrb[0].mxu0
      %v970 = vadd.f32 %v647, %v969
      %v971 = vpop.f32.mrb[0].mxu0
      %v972 = vpop.f32.mrb[0].mxu0
      %v973 = vadd.f32 %v648, %v972
      %v974 = vpop.f32.mrb[0].mxu0
      %975 = vmatprep.mubr.bf16.mxu0 0
      %976 = vmatmul.mubr.bf16.gmra.mrb[0].mxu0 %v861
      %v977 = vpop.f32.mrb[0].mxu0
      %v978 = vadd.f32 %v649, %v977
      %v979 = vpop.f32.mrb[0].mxu0
      %v980 = vpop.f32.mrb[0].mxu0
      %v981 = vadd.f32 %v650, %v980
      %v982 = vpop.f32.mrb[0].mxu0
      %983 = vdwg.mxu0
      %984 = vmax.xlane.f32.xlu0 %v922
      %v985 = vpop.xlane.xlu0 %984
      %986 = vmax.xlane.f32.xlu0 %v925
      %v987 = vpop.xlane.xlu0 %986
      %988 = vmax.xlane.f32.xlu0 %v930
      %v989 = vpop.xlane.xlu0 %988
      %990 = vmax.xlane.f32.xlu0 %v933
      %v991 = vpop.xlane.xlu0 %990
      %992 = vmax.xlane.f32.xlu0 %v938
      %v993 = vpop.xlane.xlu0 %992
      %994 = vmax.xlane.f32.xlu0 %v941
      %v995 = vpop.xlane.xlu0 %994
      %996 = vmax.xlane.f32.xlu0 %v946
      %v997 = vpop.xlane.xlu0 %996
      %998 = vmax.xlane.f32.xlu0 %v949
      %v999 = vpop.xlane.xlu0 %998
      %1000 = vmax.xlane.f32.xlu0 %v954
      %v1001 = vpop.xlane.xlu0 %1000
      %1002 = vmax.xlane.f32.xlu0 %v957
      %v1003 = vpop.xlane.xlu0 %1002
      %1004 = vmax.xlane.f32.xlu0 %v962
      %v1005 = vpop.xlane.xlu0 %1004
      %1006 = vmax.xlane.f32.xlu0 %v965
      %v1007 = vpop.xlane.xlu0 %1006
      %1008 = vmax.xlane.f32.xlu0 %v970
      %v1009 = vpop.xlane.xlu0 %1008
      %1010 = vmax.xlane.f32.xlu0 %v973
      %v1011 = vpop.xlane.xlu0 %1010
      %1012 = vmax.xlane.f32.xlu0 %v978
      %v1013 = vpop.xlane.xlu0 %1012
      %1014 = vmax.xlane.f32.xlu0 %v981
      %v1015 = vpop.xlane.xlu0 %1014
      %v1016 = vsub.f32 %v922, %v985
      %v1017 = vsub.f32 %v925, %v987
      %v1018 = vsub.f32 %v930, %v989
      %v1019 = vsub.f32 %v933, %v991
      %v1020 = vsub.f32 %v938, %v993
      %v1021 = vsub.f32 %v941, %v995
      %v1022 = vsub.f32 %v946, %v997
      %v1023 = vsub.f32 %v949, %v999
      %v1024 = vsub.f32 %v954, %v1001
      %v1025 = vsub.f32 %v957, %v1003
      %v1026 = vsub.f32 %v962, %v1005
      %v1027 = vsub.f32 %v965, %v1007
      %v1028 = vsub.f32 %v970, %v1009
      %v1029 = vsub.f32 %v973, %v1011
      %v1030 = vsub.f32 %v978, %v1013
      %v1031 = vsub.f32 %v981, %v1015
      %v1032 = vmul.f32 %v1016, 1.442695
      %v1033 = vpow.pop %v1032
      %v1034 = vmul.f32 %v1017, 1.442695
      %v1035 = vpow.pop %v1034
      %v1036 = vmul.f32 %v1018, 1.442695
      %v1037 = vpow.pop %v1036
      %v1038 = vmul.f32 %v1019, 1.442695
      %v1039 = vpow.pop %v1038
      %v1040 = vmul.f32 %v1020, 1.442695
      %v1041 = vpow.pop %v1040
      %v1042 = vmul.f32 %v1021, 1.442695
      %v1043 = vpow.pop %v1042
      %v1044 = vmul.f32 %v1022, 1.442695
      %v1045 = vpow.pop %v1044
      %v1046 = vmul.f32 %v1023, 1.442695
      %v1047 = vpow.pop %v1046
      %v1048 = vmul.f32 %v1024, 1.442695
      %v1049 = vpow.pop %v1048
      %v1050 = vmul.f32 %v1025, 1.442695
      %v1051 = vpow.pop %v1050
      %v1052 = vmul.f32 %v1026, 1.442695
      %v1053 = vpow.pop %v1052
      %v1054 = vmul.f32 %v1027, 1.442695
      %v1055 = vpow.pop %v1054
      %v1056 = vmul.f32 %v1028, 1.442695
      %v1057 = vpow.pop %v1056
      %v1058 = vmul.f32 %v1029, 1.442695
      %v1059 = vpow.pop %v1058
      %v1060 = vmul.f32 %v1030, 1.442695
      %v1061 = vpow.pop %v1060
      %v1062 = vmul.f32 %v1031, 1.442695
      %v1063 = vpow.pop %v1062
      %1064 = vadd.xlane.f32.xlu0 %v1033
      %v1065 = vpop.xlane.xlu0 %1064
      %1066 = vadd.xlane.f32.xlu0 %v1035
      %v1067 = vpop.xlane.xlu0 %1066
      %1068 = vadd.xlane.f32.xlu0 %v1037
      %v1069 = vpop.xlane.xlu0 %1068
      %1070 = vadd.xlane.f32.xlu0 %v1039
      %v1071 = vpop.xlane.xlu0 %1070
      %1072 = vadd.xlane.f32.xlu0 %v1041
      %v1073 = vpop.xlane.xlu0 %1072
      %1074 = vadd.xlane.f32.xlu0 %v1043
      %v1075 = vpop.xlane.xlu0 %1074
      %1076 = vadd.xlane.f32.xlu0 %v1045
      %v1077 = vpop.xlane.xlu0 %1076
      %1078 = vadd.xlane.f32.xlu0 %v1047
      %v1079 = vpop.xlane.xlu0 %1078
      %1080 = vadd.xlane.f32.xlu0 %v1049
      %v1081 = vpop.xlane.xlu0 %1080
      %1082 = vadd.xlane.f32.xlu0 %v1051
      %v1083 = vpop.xlane.xlu0 %1082
      %1084 = vadd.xlane.f32.xlu0 %v1053
      %v1085 = vpop.xlane.xlu0 %1084
      %1086 = vadd.xlane.f32.xlu0 %v1055
      %v1087 = vpop.xlane.xlu0 %1086
      %1088 = vadd.xlane.f32.xlu0 %v1057
      %v1089 = vpop.xlane.xlu0 %1088
      %1090 = vadd.xlane.f32.xlu0 %v1059
      %v1091 = vpop.xlane.xlu0 %1090
      %1092 = vadd.xlane.f32.xlu0 %v1061
      %v1093 = vpop.xlane.xlu0 %1092
      %1094 = vadd.xlane.f32.xlu0 %v1063
      %v1095 = vpop.xlane.xlu0 %1094
      %v1096 = vrcp.pop %v1065
      %v1097 = vrcp.pop %v1067
      %v1098 = vrcp.pop %v1069
      %v1099 = vrcp.pop %v1071
      %v1100 = vrcp.pop %v1073
      %v1101 = vrcp.pop %v1075
      %v1102 = vrcp.pop %v1077
      %v1103 = vrcp.pop %v1079
      %v1104 = vrcp.pop %v1081
      %v1105 = vrcp.pop %v1083
      %v1106 = vrcp.pop %v1085
      %v1107 = vrcp.pop %v1087
      %v1108 = vrcp.pop %v1089
      %v1109 = vrcp.pop %v1091
      %v1110 = vrcp.pop %v1093
      %v1111 = vrcp.pop %v1095
      %v1112 = vmul.f32 %v1033, %v1096
      %v1113 = vmul.f32 %v1035, %v1097
      %v1114 = vmul.f32 %v1037, %v1098
      %v1115 = vmul.f32 %v1039, %v1099
      %v1116 = vmul.f32 %v1041, %v1100
      %v1117 = vmul.f32 %v1043, %v1101
      %v1118 = vmul.f32 %v1045, %v1102
      %v1119 = vmul.f32 %v1047, %v1103
      %v1120 = vmul.f32 %v1049, %v1104
      %v1121 = vmul.f32 %v1051, %v1105
      %v1122 = vmul.f32 %v1053, %v1106
      %v1123 = vmul.f32 %v1055, %v1107
      %v1124 = vmul.f32 %v1057, %v1108
      %v1125 = vmul.f32 %v1059, %v1109
      %v1126 = vmul.f32 %v1061, %v1110
      %v1127 = vmul.f32 %v1063, %v1111
      %v1128 = vpack.c.bf16 %v1113, %v1112
      %v1129 = vpack.c.bf16 %v1115, %v1114
      %v1130 = vpack.c.bf16 %v1117, %v1116
      %v1131 = vpack.c.bf16 %v1119, %v1118
      %v1132 = vpack.c.bf16 %v1121, %v1120
      %v1133 = vpack.c.bf16 %v1123, %v1122
      %v1134 = vpack.c.bf16 %v1125, %v1124
      %v1135 = vpack.c.bf16 %v1127, %v1126
      %1136 = vrot.lane.b32.xlu0 %v807, 72
      %v1137 = vpop.permute.xlu0 %1136
      %1138 = vrot.lane.b32.xlu0 %v808, 72
      %v1139 = vpop.permute.xlu0 %1138
      %1140 = vrot.lane.b32.xlu0 %v809, 72
      %v1141 = vpop.permute.xlu0 %1140
      %1142 = vrot.lane.b32.xlu0 %v810, 72
      %v1143 = vpop.permute.xlu0 %1142
      %1144 = vrot.lane.b32.xlu0 %v811, 72
      %v1145 = vpop.permute.xlu0 %1144
      %1146 = vrot.lane.b32.xlu0 %v812, 72
      %v1147 = vpop.permute.xlu0 %1146
      %1148 = vrot.lane.b32.xlu0 %v813, 72
      %v1149 = vpop.permute.xlu0 %1148
      %1150 = vrot.lane.b32.xlu0 %v814, 72
      %v1151 = vpop.permute.xlu0 %1150
      %1160 = vmatprep.subr.bf16.mxu0 0
      %1161 = vmatpush1.bf16.msra.mxu0 %v1137
      %1162 = vmatprep.subr.bf16.mxu0 0
      %1163 = vmatpush1.bf16.msra.mxu0 %v1139
      %1164 = vmatprep.subr.bf16.mxu0 0
      %1165 = vmatpush1.bf16.msra.mxu0 %v1141
      %1166 = vmatprep.subr.bf16.mxu0 0
      %1167 = vmatpush1.bf16.msra.mxu0 %v1143
      %1168 = vmatprep.subr.bf16.mxu0 0
      %1169 = vmatpush1.bf16.msra.mxu0 %v1145
      %1170 = vmatprep.subr.bf16.mxu0 0
      %1171 = vmatpush1.bf16.msra.mxu0 %v1147
      %1172 = vmatprep.subr.bf16.mxu0 0
      %1173 = vmatpush1.bf16.msra.mxu0 %v1149
      %1174 = vmatprep.subr.bf16.mxu0 0
      %1175 = vmatpush1.bf16.msra.mxu0 %v1151
      %1176 = vmatprep.subr.bf16.mxu0 0
      %1177 = vmatpush1.bf16.msra.mxu0 0
      %1178 = vmatprep.subr.bf16.mxu0 0
      %1179 = vmatpush1.bf16.msra.mxu0 0
      %1180 = vmatprep.subr.bf16.mxu0 0
      %1181 = vmatpush1.bf16.msra.mxu0 0
      %1182 = vmatprep.subr.bf16.mxu0 0
      %1183 = vmatpush1.bf16.msra.mxu0 0
      %1184 = vmatprep.subr.bf16.mxu0 0
      %1185 = vmatpush1.bf16.msra.mxu0 0
      %1186 = vmatprep.subr.bf16.mxu0 0
      %1187 = vmatpush1.bf16.msra.mxu0 0
      %1188 = vmatprep.subr.bf16.mxu0 0
      %1189 = vmatpush1.bf16.msra.mxu0 0
      %1190 = vmatprep.subr.bf16.mxu0 0
      %1191 = vmatpush1.bf16.msra.mxu0 0
      %1192 = vmatprep.mubr.bf16.mxu0 0
      %1193 = vmatmul.mubr.bf16.gmra.mrb[0].mxu0 %v1128
      %v1194 = vpop.f32.mrb[0].mxu0
      %v1195 = vadd.f32 0.0, %v1194
      %v1196 = vpop.f32.mrb[0].mxu0
      %v1197 = vpop.f32.mrb[0].mxu0
      %v1198 = vadd.f32 0.0, %v1197
      %v1199 = vpop.f32.mrb[0].mxu0
      %1200 = vmatprep.mubr.bf16.mxu0 0
      %1201 = vmatmul.mubr.bf16.gmra.mrb[0].mxu0 %v1129
      %v1202 = vpop.f32.mrb[0].mxu0
      %v1203 = vadd.f32 0.0, %v1202
      %v1204 = vpop.f32.mrb[0].mxu0
      %v1205 = vpop.f32.mrb[0].mxu0
      %v1206 = vadd.f32 0.0, %v1205
      %v1207 = vpop.f32.mrb[0].mxu0
      %1208 = vmatprep.mubr.bf16.mxu0 0
      %1209 = vmatmul.mubr.bf16.gmra.mrb[0].mxu0 %v1130
      %v1210 = vpop.f32.mrb[0].mxu0
      %v1211 = vadd.f32 0.0, %v1210
      %v1212 = vpop.f32.mrb[0].mxu0
      %v1213 = vpop.f32.mrb[0].mxu0
      %v1214 = vadd.f32 0.0, %v1213
      %v1215 = vpop.f32.mrb[0].mxu0
      %1216 = vmatprep.mubr.bf16.mxu0 0
      %1217 = vmatmul.mubr.bf16.gmra.mrb[0].mxu0 %v1131
      %v1218 = vpop.f32.mrb[0].mxu0
      %v1219 = vadd.f32 0.0, %v1218
      %v1220 = vpop.f32.mrb[0].mxu0
      %v1221 = vpop.f32.mrb[0].mxu0
      %v1222 = vadd.f32 0.0, %v1221
      %v1223 = vpop.f32.mrb[0].mxu0
      %1224 = vmatprep.mubr.bf16.mxu0 0
      %1225 = vmatmul.mubr.bf16.gmra.mrb[0].mxu0 %v1132
      %v1226 = vpop.f32.mrb[0].mxu0
      %v1227 = vadd.f32 0.0, %v1226
      %v1228 = vpop.f32.mrb[0].mxu0
      %v1229 = vpop.f32.mrb[0].mxu0
      %v1230 = vadd.f32 0.0, %v1229
      %v1231 = vpop.f32.mrb[0].mxu0
      %1232 = vmatprep.mubr.bf16.mxu0 0
      %1233 = vmatmul.mubr.bf16.gmra.mrb[0].mxu0 %v1133
      %v1234 = vpop.f32.mrb[0].mxu0
      %v1235 = vadd.f32 0.0, %v1234
      %v1236 = vpop.f32.mrb[0].mxu0
      %v1237 = vpop.f32.mrb[0].mxu0
      %v1238 = vadd.f32 0.0, %v1237
      %v1239 = vpop.f32.mrb[0].mxu0
      %1240 = vmatprep.mubr.bf16.mxu0 0
      %1241 = vmatmul.mubr.bf16.gmra.mrb[0].mxu0 %v1134
      %v1242 = vpop.f32.mrb[0].mxu0
      %v1243 = vadd.f32 0.0, %v1242
      %v1244 = vpop.f32.mrb[0].mxu0
      %v1245 = vpop.f32.mrb[0].mxu0
      %v1246 = vadd.f32 0.0, %v1245
      %v1247 = vpop.f32.mrb[0].mxu0
      %1248 = vmatprep.mubr.bf16.mxu0 0
      %1249 = vmatmul.mubr.bf16.gmra.mrb[0].mxu0 %v1135
      %v1250 = vpop.f32.mrb[0].mxu0
      %v1251 = vadd.f32 0.0, %v1250
      %v1252 = vpop.f32.mrb[0].mxu0
      %v1253 = vpop.f32.mrb[0].mxu0
      %v1254 = vadd.f32 0.0, %v1253
      %v1255 = vpop.f32.mrb[0].mxu0
      %1256 = vdwg.mxu0
      %v1257 = vpack.c.bf16 %v1198, %v1195
      %v1258 = vpack.c.bf16 %v1206, %v1203
      %v1259 = vpack.c.bf16 %v1214, %v1211
      %v1260 = vpack.c.bf16 %v1222, %v1219
      %v1261 = vpack.c.bf16 %v1230, %v1227
      %v1262 = vpack.c.bf16 %v1238, %v1235
      %v1263 = vpack.c.bf16 %v1246, %v1243
      %v1264 = vpack.c.bf16 %v1254, %v1251
      %v1265 = vld [vmem:[%s5] sm:$0xf]
      %v1266 = vld [vmem:[%s5 + $0x4] sm:$0xf]
      %v1267 = vld [vmem:[%s5 + $0x8] sm:$0xf]
      %v1268 = vld [vmem:[%s5 + $0xc] sm:$0x3]
      %v1269 = vld [vmem:[%s6] sm:$0x1]
      %v1271 = vlaneseq
      %v1272 = vshrl.u32 %v1271, 7
      %v1273 = vsub.s32 0, %v1272
      %v1274 = vrot.slane %v1269, %v1273
      %v1280 = vunpack.c.l.b16 %v1265
      %v1281 = vunpack.c.l.b16 %v1266
      %v1282 = vunpack.c.l.b16 %v1267
      %v1283 = vunpack.c.l.b16 %v1268
      %v1284 = vpack.c.b16 %v1281, %v1280
      %v1285 = vpack.c.b16 %v1283, %v1282
      %v1288 = vsel %vm681, %v1257, 0
      %v1291 = vsel %vm681, %v1258, 0
      %v1294 = vsel %vm681, %v1259, 0
      %v1297 = vsel %vm681, %v1260, 0
      %v1300 = vsel %vm681, %v1261, 0
      %v1303 = vsel %vm681, %v1262, 0
      %v1306 = vsel %vm681, %v1263, 0
      %v1309 = vsel %vm681, %v1264, 0
      %v1312 = vsel %vm706, %v1285, 0
      %1314 = vmatprep.subr.bf16.mxu0 0
      %1315 = vmatpush1.bf16.msra.mxu0 %v1284
      %1316 = vmatprep.subr.bf16.mxu0 0
      %1317 = vmatpush1.bf16.msra.mxu0 %v1312
      %1318 = vmatprep.subr.bf16.mxu0 0
      %1319 = vmatpush1.bf16.msra.mxu0 0
      %1320 = vmatprep.subr.bf16.mxu0 0
      %1321 = vmatpush1.bf16.msra.mxu0 0
      %1322 = vmatprep.subr.bf16.mxu0 0
      %1323 = vmatpush1.bf16.msra.mxu0 0
      %1324 = vmatprep.subr.bf16.mxu0 0
      %1325 = vmatpush1.bf16.msra.mxu0 0
      %1326 = vmatprep.subr.bf16.mxu0 0
      %1327 = vmatpush1.bf16.msra.mxu0 0
      %1328 = vmatprep.subr.bf16.mxu0 0
      %1329 = vmatpush1.bf16.msra.mxu0 0
      %1330 = vmatprep.subr.bf16.mxu0 0
      %1331 = vmatpush1.bf16.msra.mxu0 0
      %1332 = vmatprep.subr.bf16.mxu0 0
      %1333 = vmatpush1.bf16.msra.mxu0 0
      %1334 = vmatprep.subr.bf16.mxu0 0
      %1335 = vmatpush1.bf16.msra.mxu0 0
      %1336 = vmatprep.subr.bf16.mxu0 0
      %1337 = vmatpush1.bf16.msra.mxu0 0
      %1338 = vmatprep.subr.bf16.mxu0 0
      %1339 = vmatpush1.bf16.msra.mxu0 0
      %1340 = vmatprep.subr.bf16.mxu0 0
      %1341 = vmatpush1.bf16.msra.mxu0 0
      %1342 = vmatprep.subr.bf16.mxu0 0
      %1343 = vmatpush1.bf16.msra.mxu0 0
      %1344 = vmatprep.subr.bf16.mxu0 0
      %1345 = vmatpush1.bf16.msra.mxu0 0
      %1346 = vmatprep.mubr.bf16.mxu0 0
      %1347 = vmatmul.mubr.bf16.gmra.mrb[0].mxu0 %v1288
      %v1348 = vpop.f32.mrb[0].mxu0
      %v1349 = vadd.f32 %v1274, %v1348
      %v1350 = vpop.f32.mrb[0].mxu0
      %v1351 = vpop.f32.mrb[0].mxu0
      %v1352 = vadd.f32 %v1274, %v1351
      %v1353 = vpop.f32.mrb[0].mxu0
      %1354 = vmatprep.mubr.bf16.mxu0 0
      %1355 = vmatmul.mubr.bf16.gmra.mrb[0].mxu0 %v1291
      %v1356 = vpop.f32.mrb[0].mxu0
      %v1357 = vadd.f32 %v1274, %v1356
      %v1358 = vpop.f32.mrb[0].mxu0
      %v1359 = vpop.f32.mrb[0].mxu0
      %v1360 = vadd.f32 %v1274, %v1359
      %v1361 = vpop.f32.mrb[0].mxu0
      %1362 = vmatprep.mubr.bf16.mxu0 0
      %1363 = vmatmul.mubr.bf16.gmra.mrb[0].mxu0 %v1294
      %v1364 = vpop.f32.mrb[0].mxu0
      %v1365 = vadd.f32 %v1274, %v1364
      %v1366 = vpop.f32.mrb[0].mxu0
      %v1367 = vpop.f32.mrb[0].mxu0
      %v1368 = vadd.f32 %v1274, %v1367
      %v1369 = vpop.f32.mrb[0].mxu0
      %1370 = vmatprep.mubr.bf16.mxu0 0
      %1371 = vmatmul.mubr.bf16.gmra.mrb[0].mxu0 %v1297
      %v1372 = vpop.f32.mrb[0].mxu0
      %v1373 = vadd.f32 %v1274, %v1372
      %v1374 = vpop.f32.mrb[0].mxu0
      %v1375 = vpop.f32.mrb[0].mxu0
      %v1376 = vadd.f32 %v1274, %v1375
      %v1377 = vpop.f32.mrb[0].mxu0
      %1378 = vmatprep.mubr.bf16.mxu0 0
      %1379 = vmatmul.mubr.bf16.gmra.mrb[0].mxu0 %v1300
      %v1380 = vpop.f32.mrb[0].mxu0
      %v1381 = vadd.f32 %v1274, %v1380
      %v1382 = vpop.f32.mrb[0].mxu0
      %v1383 = vpop.f32.mrb[0].mxu0
      %v1384 = vadd.f32 %v1274, %v1383
      %v1385 = vpop.f32.mrb[0].mxu0
      %1386 = vmatprep.mubr.bf16.mxu0 0
      %1387 = vmatmul.mubr.bf16.gmra.mrb[0].mxu0 %v1303
      %v1388 = vpop.f32.mrb[0].mxu0
      %v1389 = vadd.f32 %v1274, %v1388
      %v1390 = vpop.f32.mrb[0].mxu0
      %v1391 = vpop.f32.mrb[0].mxu0
      %v1392 = vadd.f32 %v1274, %v1391
      %v1393 = vpop.f32.mrb[0].mxu0
      %1394 = vmatprep.mubr.bf16.mxu0 0
      %1395 = vmatmul.mubr.bf16.gmra.mrb[0].mxu0 %v1306
      %v1396 = vpop.f32.mrb[0].mxu0
      %v1397 = vadd.f32 %v1274, %v1396
      %v1398 = vpop.f32.mrb[0].mxu0
      %v1399 = vpop.f32.mrb[0].mxu0
      %v1400 = vadd.f32 %v1274, %v1399
      %v1401 = vpop.f32.mrb[0].mxu0
      %1402 = vmatprep.mubr.bf16.mxu0 0
      %1403 = vmatmul.mubr.bf16.gmra.mrb[0].mxu0 %v1309
      %v1404 = vpop.f32.mrb[0].mxu0
      %v1405 = vadd.f32 %v1274, %v1404
      %v1406 = vpop.f32.mrb[0].mxu0
      %v1407 = vpop.f32.mrb[0].mxu0
      %v1408 = vadd.f32 %v1274, %v1407
      %v1409 = vpop.f32.mrb[0].mxu0
      %1410 = vdwg.mxu0
      %v1411 = vadd.f32 %v619, %v1349
      %v1412 = vadd.f32 %v620, %v1352
      %v1413 = vadd.f32 %v621, %v1357
      %v1414 = vadd.f32 %v622, %v1360
      %v1415 = vadd.f32 %v623, %v1365
      %v1416 = vadd.f32 %v624, %v1368
      %v1417 = vadd.f32 %v625, %v1373
      %v1418 = vadd.f32 %v626, %v1376
      %v1419 = vadd.f32 %v627, %v1381
      %v1420 = vadd.f32 %v628, %v1384
      %v1421 = vadd.f32 %v629, %v1389
      %v1422 = vadd.f32 %v630, %v1392
      %v1423 = vadd.f32 %v631, %v1397
      %v1424 = vadd.f32 %v632, %v1400
      %v1425 = vadd.f32 %v633, %v1405
      %v1426 = vadd.f32 %v634, %v1408
      %v1427 = vld [vmem:[%s7] sm:$0x1]
      %v1428 = vld [vmem:[%s8] sm:$0x1]
      %v1429 = vsel %vm681, %v1411, 0.0
      %1430 = vadd.xlane.f32.xlu0 %v1429
      %v1431 = vpop.xlane.xlu0 %1430
      %v1432 = vsel %vm681, %v1412, 0.0
      %1433 = vadd.xlane.f32.xlu0 %v1432
      %v1434 = vpop.xlane.xlu0 %1433
      %v1435 = vsel %vm681, %v1413, 0.0
      %1436 = vadd.xlane.f32.xlu0 %v1435
      %v1437 = vpop.xlane.xlu0 %1436
      %v1438 = vsel %vm681, %v1414, 0.0
      %1439 = vadd.xlane.f32.xlu0 %v1438
      %v1440 = vpop.xlane.xlu0 %1439
      %v1441 = vsel %vm681, %v1415, 0.0
      %1442 = vadd.xlane.f32.xlu0 %v1441
      %v1443 = vpop.xlane.xlu0 %1442
      %v1444 = vsel %vm681, %v1416, 0.0
      %1445 = vadd.xlane.f32.xlu0 %v1444
      %v1446 = vpop.xlane.xlu0 %1445
      %v1447 = vsel %vm681, %v1417, 0.0
      %1448 = vadd.xlane.f32.xlu0 %v1447
      %v1449 = vpop.xlane.xlu0 %1448
      %v1450 = vsel %vm681, %v1418, 0.0
      %1451 = vadd.xlane.f32.xlu0 %v1450
      %v1452 = vpop.xlane.xlu0 %1451
      %v1453 = vsel %vm681, %v1419, 0.0
      %1454 = vadd.xlane.f32.xlu0 %v1453
      %v1455 = vpop.xlane.xlu0 %1454
      %v1456 = vsel %vm681, %v1420, 0.0
      %1457 = vadd.xlane.f32.xlu0 %v1456
      %v1458 = vpop.xlane.xlu0 %1457
      %v1459 = vsel %vm681, %v1421, 0.0
      %1460 = vadd.xlane.f32.xlu0 %v1459
      %v1461 = vpop.xlane.xlu0 %1460
      %v1462 = vsel %vm681, %v1422, 0.0
      %1463 = vadd.xlane.f32.xlu0 %v1462
      %v1464 = vpop.xlane.xlu0 %1463
      %v1465 = vsel %vm681, %v1423, 0.0
      %1466 = vadd.xlane.f32.xlu0 %v1465
      %v1467 = vpop.xlane.xlu0 %1466
      %v1468 = vsel %vm681, %v1424, 0.0
      %1469 = vadd.xlane.f32.xlu0 %v1468
      %v1470 = vpop.xlane.xlu0 %1469
      %v1471 = vsel %vm681, %v1425, 0.0
      %1472 = vadd.xlane.f32.xlu0 %v1471
      %v1473 = vpop.xlane.xlu0 %1472
      %v1474 = vsel %vm681, %v1426, 0.0
      %1475 = vadd.xlane.f32.xlu0 %v1474
      %v1476 = vpop.xlane.xlu0 %1475
      %v1477 = vrcp.pop 28.0
      %v1478 = vmul.f32 %v1431, %v1477
      %v1479 = vmul.f32 %v1434, %v1477
      %v1480 = vmul.f32 %v1437, %v1477
      %v1481 = vmul.f32 %v1440, %v1477
      %v1482 = vmul.f32 %v1443, %v1477
      %v1483 = vmul.f32 %v1446, %v1477
      %v1484 = vmul.f32 %v1449, %v1477
      %v1485 = vmul.f32 %v1452, %v1477
      %v1486 = vmul.f32 %v1455, %v1477
      %v1487 = vmul.f32 %v1458, %v1477
      %v1488 = vmul.f32 %v1461, %v1477
      %v1489 = vmul.f32 %v1464, %v1477
      %v1490 = vmul.f32 %v1467, %v1477
      %v1491 = vmul.f32 %v1470, %v1477
      %v1492 = vmul.f32 %v1473, %v1477
      %v1493 = vmul.f32 %v1476, %v1477
      %v1494 = vsub.f32 %v1411, %v1478
      %v1495 = vsub.f32 %v1412, %v1479
      %v1496 = vsub.f32 %v1413, %v1480
      %v1497 = vsub.f32 %v1414, %v1481
      %v1498 = vsub.f32 %v1415, %v1482
      %v1499 = vsub.f32 %v1416, %v1483
      %v1500 = vsub.f32 %v1417, %v1484
      %v1501 = vsub.f32 %v1418, %v1485
      %v1502 = vsub.f32 %v1419, %v1486
      %v1503 = vsub.f32 %v1420, %v1487
      %v1504 = vsub.f32 %v1421, %v1488
      %v1505 = vsub.f32 %v1422, %v1489
      %v1506 = vsub.f32 %v1423, %v1490
      %v1507 = vsub.f32 %v1424, %v1491
      %v1508 = vsub.f32 %v1425, %v1492
      %v1509 = vsub.f32 %v1426, %v1493
      %v1510 = vmul.f32 %v1494, %v1494
      %v1511 = vmul.f32 %v1495, %v1495
      %v1512 = vmul.f32 %v1496, %v1496
      %v1513 = vmul.f32 %v1497, %v1497
      %v1514 = vmul.f32 %v1498, %v1498
      %v1515 = vmul.f32 %v1499, %v1499
      %v1516 = vmul.f32 %v1500, %v1500
      %v1517 = vmul.f32 %v1501, %v1501
      %v1518 = vmul.f32 %v1502, %v1502
      %v1519 = vmul.f32 %v1503, %v1503
      %v1520 = vmul.f32 %v1504, %v1504
      %v1521 = vmul.f32 %v1505, %v1505
      %v1522 = vmul.f32 %v1506, %v1506
      %v1523 = vmul.f32 %v1507, %v1507
      %v1524 = vmul.f32 %v1508, %v1508
      %v1525 = vmul.f32 %v1509, %v1509
      %v1526 = vsel %vm681, %v1510, 0.0
      %1527 = vadd.xlane.f32.xlu0 %v1526
      %v1528 = vpop.xlane.xlu0 %1527
      %v1529 = vsel %vm681, %v1511, 0.0
      %1530 = vadd.xlane.f32.xlu0 %v1529
      %v1531 = vpop.xlane.xlu0 %1530
      %v1532 = vsel %vm681, %v1512, 0.0
      %1533 = vadd.xlane.f32.xlu0 %v1532
      %v1534 = vpop.xlane.xlu0 %1533
      %v1535 = vsel %vm681, %v1513, 0.0
      %1536 = vadd.xlane.f32.xlu0 %v1535
      %v1537 = vpop.xlane.xlu0 %1536
      %v1538 = vsel %vm681, %v1514, 0.0
      %1539 = vadd.xlane.f32.xlu0 %v1538
      %v1540 = vpop.xlane.xlu0 %1539
      %v1541 = vsel %vm681, %v1515, 0.0
      %1542 = vadd.xlane.f32.xlu0 %v1541
      %v1543 = vpop.xlane.xlu0 %1542
      %v1544 = vsel %vm681, %v1516, 0.0
      %1545 = vadd.xlane.f32.xlu0 %v1544
      %v1546 = vpop.xlane.xlu0 %1545
      %v1547 = vsel %vm681, %v1517, 0.0
      %1548 = vadd.xlane.f32.xlu0 %v1547
      %v1549 = vpop.xlane.xlu0 %1548
      %v1550 = vsel %vm681, %v1518, 0.0
      %1551 = vadd.xlane.f32.xlu0 %v1550
      %v1552 = vpop.xlane.xlu0 %1551
      %v1553 = vsel %vm681, %v1519, 0.0
      %1554 = vadd.xlane.f32.xlu0 %v1553
      %v1555 = vpop.xlane.xlu0 %1554
      %v1556 = vsel %vm681, %v1520, 0.0
      %1557 = vadd.xlane.f32.xlu0 %v1556
      %v1558 = vpop.xlane.xlu0 %1557
      %v1559 = vsel %vm681, %v1521, 0.0
      %1560 = vadd.xlane.f32.xlu0 %v1559
      %v1561 = vpop.xlane.xlu0 %1560
      %v1562 = vsel %vm681, %v1522, 0.0
      %1563 = vadd.xlane.f32.xlu0 %v1562
      %v1564 = vpop.xlane.xlu0 %1563
      %v1565 = vsel %vm681, %v1523, 0.0
      %1566 = vadd.xlane.f32.xlu0 %v1565
      %v1567 = vpop.xlane.xlu0 %1566
      %v1568 = vsel %vm681, %v1524, 0.0
      %1569 = vadd.xlane.f32.xlu0 %v1568
      %v1570 = vpop.xlane.xlu0 %1569
      %v1571 = vsel %vm681, %v1525, 0.0
      %1572 = vadd.xlane.f32.xlu0 %v1571
      %v1573 = vpop.xlane.xlu0 %1572
      %v1574 = vmul.f32 %v1528, %v1477
      %v1575 = vmul.f32 %v1531, %v1477
      %v1576 = vmul.f32 %v1534, %v1477
      %v1577 = vmul.f32 %v1537, %v1477
      %v1578 = vmul.f32 %v1540, %v1477
      %v1579 = vmul.f32 %v1543, %v1477
      %v1580 = vmul.f32 %v1546, %v1477
      %v1581 = vmul.f32 %v1549, %v1477
      %v1582 = vmul.f32 %v1552, %v1477
      %v1583 = vmul.f32 %v1555, %v1477
      %v1584 = vmul.f32 %v1558, %v1477
      %v1585 = vmul.f32 %v1561, %v1477
      %v1586 = vmul.f32 %v1564, %v1477
      %v1587 = vmul.f32 %v1567, %v1477
      %v1588 = vmul.f32 %v1570, %v1477
      %v1589 = vmul.f32 %v1573, %v1477
      %v1590 = vadd.f32 %v1574, 1e-05
      %v1591 = vadd.f32 %v1575, 1e-05
      %v1592 = vadd.f32 %v1576, 1e-05
      %v1593 = vadd.f32 %v1577, 1e-05
      %v1594 = vadd.f32 %v1578, 1e-05
      %v1595 = vadd.f32 %v1579, 1e-05
      %v1596 = vadd.f32 %v1580, 1e-05
      %v1597 = vadd.f32 %v1581, 1e-05
      %v1598 = vadd.f32 %v1582, 1e-05
      %v1599 = vadd.f32 %v1583, 1e-05
      %v1600 = vadd.f32 %v1584, 1e-05
      %v1601 = vadd.f32 %v1585, 1e-05
      %v1602 = vadd.f32 %v1586, 1e-05
      %v1603 = vadd.f32 %v1587, 1e-05
      %v1604 = vadd.f32 %v1588, 1e-05
      %v1605 = vadd.f32 %v1589, 1e-05
      %v1606 = vrsqrt.pop %v1590
      %v1607 = vrsqrt.pop %v1591
      %v1608 = vrsqrt.pop %v1592
      %v1609 = vrsqrt.pop %v1593
      %v1610 = vrsqrt.pop %v1594
      %v1611 = vrsqrt.pop %v1595
      %v1612 = vrsqrt.pop %v1596
      %v1613 = vrsqrt.pop %v1597
      %v1614 = vrsqrt.pop %v1598
      %v1615 = vrsqrt.pop %v1599
      %v1616 = vrsqrt.pop %v1600
      %v1617 = vrsqrt.pop %v1601
      %v1618 = vrsqrt.pop %v1602
      %v1619 = vrsqrt.pop %v1603
      %v1620 = vrsqrt.pop %v1604
      %v1621 = vrsqrt.pop %v1605
      %v1622 = vmul.f32 %v1494, %v1606
      %v1623 = vmul.f32 %v1495, %v1607
      %v1624 = vmul.f32 %v1496, %v1608
      %v1625 = vmul.f32 %v1497, %v1609
      %v1626 = vmul.f32 %v1498, %v1610
      %v1627 = vmul.f32 %v1499, %v1611
      %v1628 = vmul.f32 %v1500, %v1612
      %v1629 = vmul.f32 %v1501, %v1613
      %v1630 = vmul.f32 %v1502, %v1614
      %v1631 = vmul.f32 %v1503, %v1615
      %v1632 = vmul.f32 %v1504, %v1616
      %v1633 = vmul.f32 %v1505, %v1617
      %v1634 = vmul.f32 %v1506, %v1618
      %v1635 = vmul.f32 %v1507, %v1619
      %v1636 = vmul.f32 %v1508, %v1620
      %v1637 = vmul.f32 %v1509, %v1621
      %v1639 = vlaneseq
      %v1640 = vshrl.u32 %v1639, 7
      %v1641 = vsub.s32 0, %v1640
      %v1642 = vrot.slane %v1427, %v1641
      %v1644 = vmul.f32 %v1622, %v1642
      %v1645 = vmul.f32 %v1623, %v1642
      %v1646 = vmul.f32 %v1624, %v1642
      %v1647 = vmul.f32 %v1625, %v1642
      %v1648 = vmul.f32 %v1626, %v1642
      %v1649 = vmul.f32 %v1627, %v1642
      %v1650 = vmul.f32 %v1628, %v1642
      %v1651 = vmul.f32 %v1629, %v1642
      %v1652 = vmul.f32 %v1630, %v1642
      %v1653 = vmul.f32 %v1631, %v1642
      %v1654 = vmul.f32 %v1632, %v1642
      %v1655 = vmul.f32 %v1633, %v1642
      %v1656 = vmul.f32 %v1634, %v1642
      %v1657 = vmul.f32 %v1635, %v1642
      %v1658 = vmul.f32 %v1636, %v1642
      %v1659 = vmul.f32 %v1637, %v1642
      %v1661 = vlaneseq
      %v1662 = vshrl.u32 %v1661, 7
      %v1663 = vsub.s32 0, %v1662
      %v1664 = vrot.slane %v1428, %v1663
      %v1666 = vadd.f32 %v1644, %v1664
      %v1667 = vadd.f32 %v1645, %v1664
      %v1668 = vadd.f32 %v1646, %v1664
      %v1669 = vadd.f32 %v1647, %v1664
      %v1670 = vadd.f32 %v1648, %v1664
      %v1671 = vadd.f32 %v1649, %v1664
      %v1672 = vadd.f32 %v1650, %v1664
      %v1673 = vadd.f32 %v1651, %v1664
      %v1674 = vadd.f32 %v1652, %v1664
      %v1675 = vadd.f32 %v1653, %v1664
      %v1676 = vadd.f32 %v1654, %v1664
      %v1677 = vadd.f32 %v1655, %v1664
      %v1678 = vadd.f32 %v1656, %v1664
      %v1679 = vadd.f32 %v1657, %v1664
      %v1680 = vadd.f32 %v1658, %v1664
      %v1681 = vadd.f32 %v1659, %v1664
      %v1682 = vpack.c.bf16 %v1667, %v1666
      %v1683 = vpack.c.bf16 %v1669, %v1668
      %v1684 = vpack.c.bf16 %v1671, %v1670
      %v1685 = vpack.c.bf16 %v1673, %v1672
      %v1686 = vpack.c.bf16 %v1675, %v1674
      %v1687 = vpack.c.bf16 %v1677, %v1676
      %v1688 = vpack.c.bf16 %v1679, %v1678
      %v1689 = vpack.c.bf16 %v1681, %v1680
      %v1690 = vld [vmem:[%s9] sm:$0xf]
      %v1691 = vld [vmem:[%s9 + $0x4] sm:$0xf]
      %v1692 = vld [vmem:[%s9 + $0x8] sm:$0xf]
      %v1693 = vld [vmem:[%s9 + $0xc] sm:$0x3]
      %v1694 = vld [vmem:[%s10] sm:$0x1]
      %v1696 = vlaneseq
      %v1697 = vshrl.u32 %v1696, 7
      %v1698 = vsub.s32 0, %v1697
      %v1699 = vrot.slane %v1694, %v1698
      %v1705 = vunpack.c.l.b16 %v1690
      %v1706 = vunpack.c.l.b16 %v1691
      %v1707 = vunpack.c.l.b16 %v1692
      %v1708 = vunpack.c.l.b16 %v1693
      %v1709 = vpack.c.b16 %v1706, %v1705
      %v1710 = vpack.c.b16 %v1708, %v1707
      %v1713 = vsel %vm681, %v1682, 0
      %v1716 = vsel %vm681, %v1683, 0
      %v1719 = vsel %vm681, %v1684, 0
      %v1722 = vsel %vm681, %v1685, 0
      %v1725 = vsel %vm681, %v1686, 0
      %v1728 = vsel %vm681, %v1687, 0
      %v1731 = vsel %vm681, %v1688, 0
      %v1734 = vsel %vm681, %v1689, 0
      %v1737 = vsel %vm706, %v1710, 0
      %1739 = vmatprep.subr.bf16.mxu0 0
      %1740 = vmatpush1.bf16.msra.mxu0 %v1709
      %1741 = vmatprep.subr.bf16.mxu0 0
      %1742 = vmatpush1.bf16.msra.mxu0 %v1737
      %1743 = vmatprep.subr.bf16.mxu0 0
      %1744 = vmatpush1.bf16.msra.mxu0 0
      %1745 = vmatprep.subr.bf16.mxu0 0
      %1746 = vmatpush1.bf16.msra.mxu0 0
      %1747 = vmatprep.subr.bf16.mxu0 0
      %1748 = vmatpush1.bf16.msra.mxu0 0
      %1749 = vmatprep.subr.bf16.mxu0 0
      %1750 = vmatpush1.bf16.msra.mxu0 0
      %1751 = vmatprep.subr.bf16.mxu0 0
      %1752 = vmatpush1.bf16.msra.mxu0 0
      %1753 = vmatprep.subr.bf16.mxu0 0
      %1754 = vmatpush1.bf16.msra.mxu0 0
      %1755 = vmatprep.subr.bf16.mxu0 0
      %1756 = vmatpush1.bf16.msra.mxu0 0
      %1757 = vmatprep.subr.bf16.mxu0 0
      %1758 = vmatpush1.bf16.msra.mxu0 0
      %1759 = vmatprep.subr.bf16.mxu0 0
      %1760 = vmatpush1.bf16.msra.mxu0 0
      %1761 = vmatprep.subr.bf16.mxu0 0
      %1762 = vmatpush1.bf16.msra.mxu0 0
      %1763 = vmatprep.subr.bf16.mxu0 0
      %1764 = vmatpush1.bf16.msra.mxu0 0
      %1765 = vmatprep.subr.bf16.mxu0 0
      %1766 = vmatpush1.bf16.msra.mxu0 0
      %1767 = vmatprep.subr.bf16.mxu0 0
      %1768 = vmatpush1.bf16.msra.mxu0 0
      %1769 = vmatprep.subr.bf16.mxu0 0
      %1770 = vmatpush1.bf16.msra.mxu0 0
      %1771 = vmatprep.mubr.bf16.mxu0 0
      %1772 = vmatmul.mubr.bf16.gmra.mrb[0].mxu0 %v1713
      %v1773 = vpop.f32.mrb[0].mxu0
      %v1774 = vadd.f32 %v1699, %v1773
      %v1775 = vpop.f32.mrb[0].mxu0
      %v1776 = vpop.f32.mrb[0].mxu0
      %v1777 = vadd.f32 %v1699, %v1776
      %v1778 = vpop.f32.mrb[0].mxu0
      %1779 = vmatprep.mubr.bf16.mxu0 0
      %1780 = vmatmul.mubr.bf16.gmra.mrb[0].mxu0 %v1716
      %v1781 = vpop.f32.mrb[0].mxu0
      %v1782 = vadd.f32 %v1699, %v1781
      %v1783 = vpop.f32.mrb[0].mxu0
      %v1784 = vpop.f32.mrb[0].mxu0
      %v1785 = vadd.f32 %v1699, %v1784
      %v1786 = vpop.f32.mrb[0].mxu0
      %1787 = vmatprep.mubr.bf16.mxu0 0
      %1788 = vmatmul.mubr.bf16.gmra.mrb[0].mxu0 %v1719
      %v1789 = vpop.f32.mrb[0].mxu0
      %v1790 = vadd.f32 %v1699, %v1789
      %v1791 = vpop.f32.mrb[0].mxu0
      %v1792 = vpop.f32.mrb[0].mxu0
      %v1793 = vadd.f32 %v1699, %v1792
      %v1794 = vpop.f32.mrb[0].mxu0
      %1795 = vmatprep.mubr.bf16.mxu0 0
      %1796 = vmatmul.mubr.bf16.gmra.mrb[0].mxu0 %v1722
      %v1797 = vpop.f32.mrb[0].mxu0
      %v1798 = vadd.f32 %v1699, %v1797
      %v1799 = vpop.f32.mrb[0].mxu0
      %v1800 = vpop.f32.mrb[0].mxu0
      %v1801 = vadd.f32 %v1699, %v1800
      %v1802 = vpop.f32.mrb[0].mxu0
      %1803 = vmatprep.mubr.bf16.mxu0 0
      %1804 = vmatmul.mubr.bf16.gmra.mrb[0].mxu0 %v1725
      %v1805 = vpop.f32.mrb[0].mxu0
      %v1806 = vadd.f32 %v1699, %v1805
      %v1807 = vpop.f32.mrb[0].mxu0
      %v1808 = vpop.f32.mrb[0].mxu0
      %v1809 = vadd.f32 %v1699, %v1808
      %v1810 = vpop.f32.mrb[0].mxu0
      %1811 = vmatprep.mubr.bf16.mxu0 0
      %1812 = vmatmul.mubr.bf16.gmra.mrb[0].mxu0 %v1728
      %v1813 = vpop.f32.mrb[0].mxu0
      %v1814 = vadd.f32 %v1699, %v1813
      %v1815 = vpop.f32.mrb[0].mxu0
      %v1816 = vpop.f32.mrb[0].mxu0
      %v1817 = vadd.f32 %v1699, %v1816
      %v1818 = vpop.f32.mrb[0].mxu0
      %1819 = vmatprep.mubr.bf16.mxu0 0
      %1820 = vmatmul.mubr.bf16.gmra.mrb[0].mxu0 %v1731
      %v1821 = vpop.f32.mrb[0].mxu0
      %v1822 = vadd.f32 %v1699, %v1821
      %v1823 = vpop.f32.mrb[0].mxu0
      %v1824 = vpop.f32.mrb[0].mxu0
      %v1825 = vadd.f32 %v1699, %v1824
      %v1826 = vpop.f32.mrb[0].mxu0
      %1827 = vmatprep.mubr.bf16.mxu0 0
      %1828 = vmatmul.mubr.bf16.gmra.mrb[0].mxu0 %v1734
      %v1829 = vpop.f32.mrb[0].mxu0
      %v1830 = vadd.f32 %v1699, %v1829
      %v1831 = vpop.f32.mrb[0].mxu0
      %v1832 = vpop.f32.mrb[0].mxu0
      %v1833 = vadd.f32 %v1699, %v1832
      %v1834 = vpop.f32.mrb[0].mxu0
      %1835 = vdwg.mxu0
      %v1836 = vmax.f32 %v1774, 0.0
      %v1837 = vmax.f32 %v1777, 0.0
      %v1838 = vmax.f32 %v1782, 0.0
      %v1839 = vmax.f32 %v1785, 0.0
      %v1840 = vmax.f32 %v1790, 0.0
      %v1841 = vmax.f32 %v1793, 0.0
      %v1842 = vmax.f32 %v1798, 0.0
      %v1843 = vmax.f32 %v1801, 0.0
      %v1844 = vmax.f32 %v1806, 0.0
      %v1845 = vmax.f32 %v1809, 0.0
      %v1846 = vmax.f32 %v1814, 0.0
      %v1847 = vmax.f32 %v1817, 0.0
      %v1848 = vmax.f32 %v1822, 0.0
      %v1849 = vmax.f32 %v1825, 0.0
      %v1850 = vmax.f32 %v1830, 0.0
      %v1851 = vmax.f32 %v1833, 0.0
      %v1852 = vpack.c.bf16 %v1837, %v1836
      %v1853 = vpack.c.bf16 %v1839, %v1838
      %v1854 = vpack.c.bf16 %v1841, %v1840
      %v1855 = vpack.c.bf16 %v1843, %v1842
      %v1856 = vpack.c.bf16 %v1845, %v1844
      %v1857 = vpack.c.bf16 %v1847, %v1846
      %v1858 = vpack.c.bf16 %v1849, %v1848
      %v1859 = vpack.c.bf16 %v1851, %v1850
      %v1860 = vld [vmem:[%s11] sm:$0xf]
      %v1861 = vld [vmem:[%s11 + $0x4] sm:$0xf]
      %v1862 = vld [vmem:[%s11 + $0x8] sm:$0xf]
      %v1863 = vld [vmem:[%s11 + $0xc] sm:$0xf]
      %v1864 = vld [vmem:[%s12] sm:$0x1]
      %v1866 = vlaneseq
      %v1867 = vshrl.u32 %v1866, 7
      %v1868 = vsub.s32 0, %v1867
      %v1869 = vrot.slane %v1864, %v1868
      %v1875 = vunpack.c.l.b16 %v1860
      %v1876 = vunpack.c.l.b16 %v1861
      %v1877 = vunpack.c.l.b16 %v1862
      %v1878 = vunpack.c.l.b16 %v1863
      %v1879 = vpack.c.b16 %v1876, %v1875
      %v1880 = vpack.c.b16 %v1878, %v1877
      %vm1883 = vcmask 261120
      %v1885 = vsel %vm1883, %v1852, 0
      %v1888 = vsel %vm1883, %v1853, 0
      %v1891 = vsel %vm1883, %v1854, 0
      %v1894 = vsel %vm1883, %v1855, 0
      %v1897 = vsel %vm1883, %v1856, 0
      %v1900 = vsel %vm1883, %v1857, 0
      %v1903 = vsel %vm1883, %v1858, 0
      %v1906 = vsel %vm1883, %v1859, 0
      %1908 = vmatprep.subr.bf16.mxu0 0
      %1909 = vmatpush1.bf16.msra.mxu0 %v1879
      %1910 = vmatprep.subr.bf16.mxu0 0
      %1911 = vmatpush1.bf16.msra.mxu0 %v1880
      %1912 = vmatprep.subr.bf16.mxu0 0
      %1913 = vmatpush1.bf16.msra.mxu0 0
      %1914 = vmatprep.subr.bf16.mxu0 0
      %1915 = vmatpush1.bf16.msra.mxu0 0
      %1916 = vmatprep.subr.bf16.mxu0 0
      %1917 = vmatpush1.bf16.msra.mxu0 0
      %1918 = vmatprep.subr.bf16.mxu0 0
      %1919 = vmatpush1.bf16.msra.mxu0 0
      %1920 = vmatprep.subr.bf16.mxu0 0
      %1921 = vmatpush1.bf16.msra.mxu0 0
      %1922 = vmatprep.subr.bf16.mxu0 0
      %1923 = vmatpush1.bf16.msra.mxu0 0
      %1924 = vmatprep.subr.bf16.mxu0 0
      %1925 = vmatpush1.bf16.msra.mxu0 0
      %1926 = vmatprep.subr.bf16.mxu0 0
      %1927 = vmatpush1.bf16.msra.mxu0 0
      %1928 = vmatprep.subr.bf16.mxu0 0
      %1929 = vmatpush1.bf16.msra.mxu0 0
      %1930 = vmatprep.subr.bf16.mxu0 0
      %1931 = vmatpush1.bf16.msra.mxu0 0
      %1932 = vmatprep.subr.bf16.mxu0 0
      %1933 = vmatpush1.bf16.msra.mxu0 0
      %1934 = vmatprep.subr.bf16.mxu0 0
      %1935 = vmatpush1.bf16.msra.mxu0 0
      %1936 = vmatprep.subr.bf16.mxu0 0
      %1937 = vmatpush1.bf16.msra.mxu0 0
      %1938 = vmatprep.subr.bf16.mxu0 0
      %1939 = vmatpush1.bf16.msra.mxu0 0
      %1940 = vmatprep.mubr.bf16.mxu0 0
      %1941 = vmatmul.mubr.bf16.gmra.mrb[0].mxu0 %v1885
      %v1942 = vpop.f32.mrb[0].mxu0
      %v1943 = vadd.f32 %v1869, %v1942
      %v1944 = vpop.f32.mrb[0].mxu0
      %v1945 = vpop.f32.mrb[0].mxu0
      %v1946 = vadd.f32 %v1869, %v1945
      %v1947 = vpop.f32.mrb[0].mxu0
      %1948 = vmatprep.mubr.bf16.mxu0 0
      %1949 = vmatmul.mubr.bf16.gmra.mrb[0].mxu0 %v1888
      %v1950 = vpop.f32.mrb[0].mxu0
      %v1951 = vadd.f32 %v1869, %v1950
      %v1952 = vpop.f32.mrb[0].mxu0
      %v1953 = vpop.f32.mrb[0].mxu0
      %v1954 = vadd.f32 %v1869, %v1953
      %v1955 = vpop.f32.mrb[0].mxu0
      %1956 = vmatprep.mubr.bf16.mxu0 0
      %1957 = vmatmul.mubr.bf16.gmra.mrb[0].mxu0 %v1891
      %v1958 = vpop.f32.mrb[0].mxu0
      %v1959 = vadd.f32 %v1869, %v1958
      %v1960 = vpop.f32.mrb[0].mxu0
      %v1961 = vpop.f32.mrb[0].mxu0
      %v1962 = vadd.f32 %v1869, %v1961
      %v1963 = vpop.f32.mrb[0].mxu0
      %1964 = vmatprep.mubr.bf16.mxu0 0
      %1965 = vmatmul.mubr.bf16.gmra.mrb[0].mxu0 %v1894
      %v1966 = vpop.f32.mrb[0].mxu0
      %v1967 = vadd.f32 %v1869, %v1966
      %v1968 = vpop.f32.mrb[0].mxu0
      %v1969 = vpop.f32.mrb[0].mxu0
      %v1970 = vadd.f32 %v1869, %v1969
      %v1971 = vpop.f32.mrb[0].mxu0
      %1972 = vmatprep.mubr.bf16.mxu0 0
      %1973 = vmatmul.mubr.bf16.gmra.mrb[0].mxu0 %v1897
      %v1974 = vpop.f32.mrb[0].mxu0
      %v1975 = vadd.f32 %v1869, %v1974
      %v1976 = vpop.f32.mrb[0].mxu0
      %v1977 = vpop.f32.mrb[0].mxu0
      %v1978 = vadd.f32 %v1869, %v1977
      %v1979 = vpop.f32.mrb[0].mxu0
      %1980 = vmatprep.mubr.bf16.mxu0 0
      %1981 = vmatmul.mubr.bf16.gmra.mrb[0].mxu0 %v1900
      %v1982 = vpop.f32.mrb[0].mxu0
      %v1983 = vadd.f32 %v1869, %v1982
      %v1984 = vpop.f32.mrb[0].mxu0
      %v1985 = vpop.f32.mrb[0].mxu0
      %v1986 = vadd.f32 %v1869, %v1985
      %v1987 = vpop.f32.mrb[0].mxu0
      %1988 = vmatprep.mubr.bf16.mxu0 0
      %1989 = vmatmul.mubr.bf16.gmra.mrb[0].mxu0 %v1903
      %v1990 = vpop.f32.mrb[0].mxu0
      %v1991 = vadd.f32 %v1869, %v1990
      %v1992 = vpop.f32.mrb[0].mxu0
      %v1993 = vpop.f32.mrb[0].mxu0
      %v1994 = vadd.f32 %v1869, %v1993
      %v1995 = vpop.f32.mrb[0].mxu0
      %1996 = vmatprep.mubr.bf16.mxu0 0
      %1997 = vmatmul.mubr.bf16.gmra.mrb[0].mxu0 %v1906
      %v1998 = vpop.f32.mrb[0].mxu0
      %v1999 = vadd.f32 %v1869, %v1998
      %v2000 = vpop.f32.mrb[0].mxu0
      %v2001 = vpop.f32.mrb[0].mxu0
      %v2002 = vadd.f32 %v1869, %v2001
      %v2003 = vpop.f32.mrb[0].mxu0
      %2004 = vdwg.mxu0
      %v2005 = vadd.f32 %v1666, %v1943
      %v2006 = vadd.f32 %v1667, %v1946
      %v2007 = vadd.f32 %v1668, %v1951
      %v2008 = vadd.f32 %v1669, %v1954
      %v2009 = vadd.f32 %v1670, %v1959
      %v2010 = vadd.f32 %v1671, %v1962
      %v2011 = vadd.f32 %v1672, %v1967
      %v2012 = vadd.f32 %v1673, %v1970
      %v2013 = vadd.f32 %v1674, %v1975
      %v2014 = vadd.f32 %v1675, %v1978
      %v2015 = vadd.f32 %v1676, %v1983
      %v2016 = vadd.f32 %v1677, %v1986
      %v2017 = vadd.f32 %v1678, %v1991
      %v2018 = vadd.f32 %v1679, %v1994
      %v2019 = vadd.f32 %v1680, %v1999
      %v2020 = vadd.f32 %v1681, %v2002
      %v2021 = vld [vmem:[%s13] sm:$0x1]
      %v2022 = vld [vmem:[%s14] sm:$0x1]
      %v2023 = vsel %vm681, %v2005, 0.0
      %2024 = vadd.xlane.f32.xlu0 %v2023
      %v2025 = vpop.xlane.xlu0 %2024
      %v2026 = vsel %vm681, %v2006, 0.0
      %2027 = vadd.xlane.f32.xlu0 %v2026
      %v2028 = vpop.xlane.xlu0 %2027
      %v2029 = vsel %vm681, %v2007, 0.0
      %2030 = vadd.xlane.f32.xlu0 %v2029
      %v2031 = vpop.xlane.xlu0 %2030
      %v2032 = vsel %vm681, %v2008, 0.0
      %2033 = vadd.xlane.f32.xlu0 %v2032
      %v2034 = vpop.xlane.xlu0 %2033
      %v2035 = vsel %vm681, %v2009, 0.0
      %2036 = vadd.xlane.f32.xlu0 %v2035
      %v2037 = vpop.xlane.xlu0 %2036
      %v2038 = vsel %vm681, %v2010, 0.0
      %2039 = vadd.xlane.f32.xlu0 %v2038
      %v2040 = vpop.xlane.xlu0 %2039
      %v2041 = vsel %vm681, %v2011, 0.0
      %2042 = vadd.xlane.f32.xlu0 %v2041
      %v2043 = vpop.xlane.xlu0 %2042
      %v2044 = vsel %vm681, %v2012, 0.0
      %2045 = vadd.xlane.f32.xlu0 %v2044
      %v2046 = vpop.xlane.xlu0 %2045
      %v2047 = vsel %vm681, %v2013, 0.0
      %2048 = vadd.xlane.f32.xlu0 %v2047
      %v2049 = vpop.xlane.xlu0 %2048
      %v2050 = vsel %vm681, %v2014, 0.0
      %2051 = vadd.xlane.f32.xlu0 %v2050
      %v2052 = vpop.xlane.xlu0 %2051
      %v2053 = vsel %vm681, %v2015, 0.0
      %2054 = vadd.xlane.f32.xlu0 %v2053
      %v2055 = vpop.xlane.xlu0 %2054
      %v2056 = vsel %vm681, %v2016, 0.0
      %2057 = vadd.xlane.f32.xlu0 %v2056
      %v2058 = vpop.xlane.xlu0 %2057
      %v2059 = vsel %vm681, %v2017, 0.0
      %2060 = vadd.xlane.f32.xlu0 %v2059
      %v2061 = vpop.xlane.xlu0 %2060
      %v2062 = vsel %vm681, %v2018, 0.0
      %2063 = vadd.xlane.f32.xlu0 %v2062
      %v2064 = vpop.xlane.xlu0 %2063
      %v2065 = vsel %vm681, %v2019, 0.0
      %2066 = vadd.xlane.f32.xlu0 %v2065
      %v2067 = vpop.xlane.xlu0 %2066
      %v2068 = vsel %vm681, %v2020, 0.0
      %2069 = vadd.xlane.f32.xlu0 %v2068
      %v2070 = vpop.xlane.xlu0 %2069
      %v2071 = vmul.f32 %v2025, %v1477
      %v2072 = vmul.f32 %v2028, %v1477
      %v2073 = vmul.f32 %v2031, %v1477
      %v2074 = vmul.f32 %v2034, %v1477
      %v2075 = vmul.f32 %v2037, %v1477
      %v2076 = vmul.f32 %v2040, %v1477
      %v2077 = vmul.f32 %v2043, %v1477
      %v2078 = vmul.f32 %v2046, %v1477
      %v2079 = vmul.f32 %v2049, %v1477
      %v2080 = vmul.f32 %v2052, %v1477
      %v2081 = vmul.f32 %v2055, %v1477
      %v2082 = vmul.f32 %v2058, %v1477
      %v2083 = vmul.f32 %v2061, %v1477
      %v2084 = vmul.f32 %v2064, %v1477
      %v2085 = vmul.f32 %v2067, %v1477
      %v2086 = vmul.f32 %v2070, %v1477
      %v2087 = vsub.f32 %v2005, %v2071
      %v2088 = vsub.f32 %v2006, %v2072
      %v2089 = vsub.f32 %v2007, %v2073
      %v2090 = vsub.f32 %v2008, %v2074
      %v2091 = vsub.f32 %v2009, %v2075
      %v2092 = vsub.f32 %v2010, %v2076
      %v2093 = vsub.f32 %v2011, %v2077
      %v2094 = vsub.f32 %v2012, %v2078
      %v2095 = vsub.f32 %v2013, %v2079
      %v2096 = vsub.f32 %v2014, %v2080
      %v2097 = vsub.f32 %v2015, %v2081
      %v2098 = vsub.f32 %v2016, %v2082
      %v2099 = vsub.f32 %v2017, %v2083
      %v2100 = vsub.f32 %v2018, %v2084
      %v2101 = vsub.f32 %v2019, %v2085
      %v2102 = vsub.f32 %v2020, %v2086
      %v2103 = vmul.f32 %v2087, %v2087
      %v2104 = vmul.f32 %v2088, %v2088
      %v2105 = vmul.f32 %v2089, %v2089
      %v2106 = vmul.f32 %v2090, %v2090
      %v2107 = vmul.f32 %v2091, %v2091
      %v2108 = vmul.f32 %v2092, %v2092
      %v2109 = vmul.f32 %v2093, %v2093
      %v2110 = vmul.f32 %v2094, %v2094
      %v2111 = vmul.f32 %v2095, %v2095
      %v2112 = vmul.f32 %v2096, %v2096
      %v2113 = vmul.f32 %v2097, %v2097
      %v2114 = vmul.f32 %v2098, %v2098
      %v2115 = vmul.f32 %v2099, %v2099
      %v2116 = vmul.f32 %v2100, %v2100
      %v2117 = vmul.f32 %v2101, %v2101
      %v2118 = vmul.f32 %v2102, %v2102
      %v2119 = vsel %vm681, %v2103, 0.0
      %2120 = vadd.xlane.f32.xlu0 %v2119
      %v2121 = vpop.xlane.xlu0 %2120
      %v2122 = vsel %vm681, %v2104, 0.0
      %2123 = vadd.xlane.f32.xlu0 %v2122
      %v2124 = vpop.xlane.xlu0 %2123
      %v2125 = vsel %vm681, %v2105, 0.0
      %2126 = vadd.xlane.f32.xlu0 %v2125
      %v2127 = vpop.xlane.xlu0 %2126
      %v2128 = vsel %vm681, %v2106, 0.0
      %2129 = vadd.xlane.f32.xlu0 %v2128
      %v2130 = vpop.xlane.xlu0 %2129
      %v2131 = vsel %vm681, %v2107, 0.0
      %2132 = vadd.xlane.f32.xlu0 %v2131
      %v2133 = vpop.xlane.xlu0 %2132
      %v2134 = vsel %vm681, %v2108, 0.0
      %2135 = vadd.xlane.f32.xlu0 %v2134
      %v2136 = vpop.xlane.xlu0 %2135
      %v2137 = vsel %vm681, %v2109, 0.0
      %2138 = vadd.xlane.f32.xlu0 %v2137
      %v2139 = vpop.xlane.xlu0 %2138
      %v2140 = vsel %vm681, %v2110, 0.0
      %2141 = vadd.xlane.f32.xlu0 %v2140
      %v2142 = vpop.xlane.xlu0 %2141
      %v2143 = vsel %vm681, %v2111, 0.0
      %2144 = vadd.xlane.f32.xlu0 %v2143
      %v2145 = vpop.xlane.xlu0 %2144
      %v2146 = vsel %vm681, %v2112, 0.0
      %2147 = vadd.xlane.f32.xlu0 %v2146
      %v2148 = vpop.xlane.xlu0 %2147
      %v2149 = vsel %vm681, %v2113, 0.0
      %2150 = vadd.xlane.f32.xlu0 %v2149
      %v2151 = vpop.xlane.xlu0 %2150
      %v2152 = vsel %vm681, %v2114, 0.0
      %2153 = vadd.xlane.f32.xlu0 %v2152
      %v2154 = vpop.xlane.xlu0 %2153
      %v2155 = vsel %vm681, %v2115, 0.0
      %2156 = vadd.xlane.f32.xlu0 %v2155
      %v2157 = vpop.xlane.xlu0 %2156
      %v2158 = vsel %vm681, %v2116, 0.0
      %2159 = vadd.xlane.f32.xlu0 %v2158
      %v2160 = vpop.xlane.xlu0 %2159
      %v2161 = vsel %vm681, %v2117, 0.0
      %2162 = vadd.xlane.f32.xlu0 %v2161
      %v2163 = vpop.xlane.xlu0 %2162
      %v2164 = vsel %vm681, %v2118, 0.0
      %2165 = vadd.xlane.f32.xlu0 %v2164
      %v2166 = vpop.xlane.xlu0 %2165
      %v2167 = vmul.f32 %v2121, %v1477
      %v2168 = vmul.f32 %v2124, %v1477
      %v2169 = vmul.f32 %v2127, %v1477
      %v2170 = vmul.f32 %v2130, %v1477
      %v2171 = vmul.f32 %v2133, %v1477
      %v2172 = vmul.f32 %v2136, %v1477
      %v2173 = vmul.f32 %v2139, %v1477
      %v2174 = vmul.f32 %v2142, %v1477
      %v2175 = vmul.f32 %v2145, %v1477
      %v2176 = vmul.f32 %v2148, %v1477
      %v2177 = vmul.f32 %v2151, %v1477
      %v2178 = vmul.f32 %v2154, %v1477
      %v2179 = vmul.f32 %v2157, %v1477
      %v2180 = vmul.f32 %v2160, %v1477
      %v2181 = vmul.f32 %v2163, %v1477
      %v2182 = vmul.f32 %v2166, %v1477
      %v2183 = vadd.f32 %v2167, 1e-05
      %v2184 = vadd.f32 %v2168, 1e-05
      %v2185 = vadd.f32 %v2169, 1e-05
      %v2186 = vadd.f32 %v2170, 1e-05
      %v2187 = vadd.f32 %v2171, 1e-05
      %v2188 = vadd.f32 %v2172, 1e-05
      %v2189 = vadd.f32 %v2173, 1e-05
      %v2190 = vadd.f32 %v2174, 1e-05
      %v2191 = vadd.f32 %v2175, 1e-05
      %v2192 = vadd.f32 %v2176, 1e-05
      %v2193 = vadd.f32 %v2177, 1e-05
      %v2194 = vadd.f32 %v2178, 1e-05
      %v2195 = vadd.f32 %v2179, 1e-05
      %v2196 = vadd.f32 %v2180, 1e-05
      %v2197 = vadd.f32 %v2181, 1e-05
      %v2198 = vadd.f32 %v2182, 1e-05
      %v2199 = vrsqrt.pop %v2183
      %v2200 = vrsqrt.pop %v2184
      %v2201 = vrsqrt.pop %v2185
      %v2202 = vrsqrt.pop %v2186
      %v2203 = vrsqrt.pop %v2187
      %v2204 = vrsqrt.pop %v2188
      %v2205 = vrsqrt.pop %v2189
      %v2206 = vrsqrt.pop %v2190
      %v2207 = vrsqrt.pop %v2191
      %v2208 = vrsqrt.pop %v2192
      %v2209 = vrsqrt.pop %v2193
      %v2210 = vrsqrt.pop %v2194
      %v2211 = vrsqrt.pop %v2195
      %v2212 = vrsqrt.pop %v2196
      %v2213 = vrsqrt.pop %v2197
      %v2214 = vrsqrt.pop %v2198
      %v2215 = vmul.f32 %v2087, %v2199
      %v2216 = vmul.f32 %v2088, %v2200
      %v2217 = vmul.f32 %v2089, %v2201
      %v2218 = vmul.f32 %v2090, %v2202
      %v2219 = vmul.f32 %v2091, %v2203
      %v2220 = vmul.f32 %v2092, %v2204
      %v2221 = vmul.f32 %v2093, %v2205
      %v2222 = vmul.f32 %v2094, %v2206
      %v2223 = vmul.f32 %v2095, %v2207
      %v2224 = vmul.f32 %v2096, %v2208
      %v2225 = vmul.f32 %v2097, %v2209
      %v2226 = vmul.f32 %v2098, %v2210
      %v2227 = vmul.f32 %v2099, %v2211
      %v2228 = vmul.f32 %v2100, %v2212
      %v2229 = vmul.f32 %v2101, %v2213
      %v2230 = vmul.f32 %v2102, %v2214
      %v2232 = vlaneseq
      %v2233 = vshrl.u32 %v2232, 7
      %v2234 = vsub.s32 0, %v2233
      %v2235 = vrot.slane %v2021, %v2234
      %v2237 = vmul.f32 %v2215, %v2235
      %v2238 = vmul.f32 %v2216, %v2235
      %v2239 = vmul.f32 %v2217, %v2235
      %v2240 = vmul.f32 %v2218, %v2235
      %v2241 = vmul.f32 %v2219, %v2235
      %v2242 = vmul.f32 %v2220, %v2235
      %v2243 = vmul.f32 %v2221, %v2235
      %v2244 = vmul.f32 %v2222, %v2235
      %v2245 = vmul.f32 %v2223, %v2235
      %v2246 = vmul.f32 %v2224, %v2235
      %v2247 = vmul.f32 %v2225, %v2235
      %v2248 = vmul.f32 %v2226, %v2235
      %v2249 = vmul.f32 %v2227, %v2235
      %v2250 = vmul.f32 %v2228, %v2235
      %v2251 = vmul.f32 %v2229, %v2235
      %v2252 = vmul.f32 %v2230, %v2235
      %v2254 = vlaneseq
      %v2255 = vshrl.u32 %v2254, 7
      %v2256 = vsub.s32 0, %v2255
      %v2257 = vrot.slane %v2022, %v2256
      %v2259 = vadd.f32 %v2237, %v2257
      %v2260 = vadd.f32 %v2238, %v2257
      %v2261 = vadd.f32 %v2239, %v2257
      %v2262 = vadd.f32 %v2240, %v2257
      %v2263 = vadd.f32 %v2241, %v2257
      %v2264 = vadd.f32 %v2242, %v2257
      %v2265 = vadd.f32 %v2243, %v2257
      %v2266 = vadd.f32 %v2244, %v2257
      %v2267 = vadd.f32 %v2245, %v2257
      %v2268 = vadd.f32 %v2246, %v2257
      %v2269 = vadd.f32 %v2247, %v2257
      %v2270 = vadd.f32 %v2248, %v2257
      %v2271 = vadd.f32 %v2249, %v2257
      %v2272 = vadd.f32 %v2250, %v2257
      %v2273 = vadd.f32 %v2251, %v2257
      %v2274 = vadd.f32 %v2252, %v2257
      %v2275 = vpack.c.bf16 %v2260, %v2259
      %v2276 = vpack.c.bf16 %v2262, %v2261
      %v2277 = vpack.c.bf16 %v2264, %v2263
      %v2278 = vpack.c.bf16 %v2266, %v2265
      %v2279 = vpack.c.bf16 %v2268, %v2267
      %v2280 = vpack.c.bf16 %v2270, %v2269
      %v2281 = vpack.c.bf16 %v2272, %v2271
      %v2282 = vpack.c.bf16 %v2274, %v2273
      %s2283 = scalar_lea.vmem %s3, 16
      %v2284 = vld [vmem:[%s2283] sm:$0xf]
      %v2285 = vld [vmem:[%s2283 + $0x4] sm:$0xf]
      %v2286 = vld [vmem:[%s2283 + $0x8] sm:$0xf]
      %v2287 = vld [vmem:[%s2283 + $0xc] sm:$0x3]
      %s2288 = scalar_lea.vmem %s4, 1
      %v2289 = vld [vmem:[%s2288] sm:$0x1]
      %v2291 = vlaneseq
      %v2292 = vshrl.u32 %v2291, 7
      %v2293 = vsub.s32 0, %v2292
      %v2294 = vrot.slane %v2289, %v2293
      %v2300 = vunpack.c.l.b16 %v2284
      %v2301 = vunpack.c.l.b16 %v2285
      %v2302 = vunpack.c.l.b16 %v2286
      %v2303 = vunpack.c.l.b16 %v2287
      %v2304 = vpack.c.b16 %v2301, %v2300
      %v2305 = vpack.c.b16 %v2303, %v2302
      %v2308 = vsel %vm681, %v2275, 0
      %v2311 = vsel %vm681, %v2276, 0
      %v2314 = vsel %vm681, %v2277, 0
      %v2317 = vsel %vm681, %v2278, 0
      %v2320 = vsel %vm681, %v2279, 0
      %v2323 = vsel %vm681, %v2280, 0
      %v2326 = vsel %vm681, %v2281, 0
      %v2329 = vsel %vm681, %v2282, 0
      %v2332 = vsel %vm706, %v2305, 0
      %2334 = vmatprep.subr.bf16.mxu0 0
      %2335 = vmatpush1.bf16.msra.mxu0 %v2304
      %2336 = vmatprep.subr.bf16.mxu0 0
      %2337 = vmatpush1.bf16.msra.mxu0 %v2332
      %2338 = vmatprep.subr.bf16.mxu0 0
      %2339 = vmatpush1.bf16.msra.mxu0 0
      %2340 = vmatprep.subr.bf16.mxu0 0
      %2341 = vmatpush1.bf16.msra.mxu0 0
      %2342 = vmatprep.subr.bf16.mxu0 0
      %2343 = vmatpush1.bf16.msra.mxu0 0
      %2344 = vmatprep.subr.bf16.mxu0 0
      %2345 = vmatpush1.bf16.msra.mxu0 0
      %2346 = vmatprep.subr.bf16.mxu0 0
      %2347 = vmatpush1.bf16.msra.mxu0 0
      %2348 = vmatprep.subr.bf16.mxu0 0
      %2349 = vmatpush1.bf16.msra.mxu0 0
      %2350 = vmatprep.subr.bf16.mxu0 0
      %2351 = vmatpush1.bf16.msra.mxu0 0
      %2352 = vmatprep.subr.bf16.mxu0 0
      %2353 = vmatpush1.bf16.msra.mxu0 0
      %2354 = vmatprep.subr.bf16.mxu0 0
      %2355 = vmatpush1.bf16.msra.mxu0 0
      %2356 = vmatprep.subr.bf16.mxu0 0
      %2357 = vmatpush1.bf16.msra.mxu0 0
      %2358 = vmatprep.subr.bf16.mxu0 0
      %2359 = vmatpush1.bf16.msra.mxu0 0
      %2360 = vmatprep.subr.bf16.mxu0 0
      %2361 = vmatpush1.bf16.msra.mxu0 0
      %2362 = vmatprep.subr.bf16.mxu0 0
      %2363 = vmatpush1.bf16.msra.mxu0 0
      %2364 = vmatprep.subr.bf16.mxu0 0
      %2365 = vmatpush1.bf16.msra.mxu0 0
      %2366 = vmatprep.mubr.bf16.mxu0 0
      %2367 = vmatmul.mubr.bf16.gmra.mrb[0].mxu0 %v2308
      %v2368 = vpop.f32.mrb[0].mxu0
      %v2369 = vadd.f32 %v2294, %v2368
      %v2370 = vpop.f32.mrb[0].mxu0
      %v2371 = vpop.f32.mrb[0].mxu0
      %v2372 = vadd.f32 %v2294, %v2371
      %v2373 = vpop.f32.mrb[0].mxu0
      %2374 = vmatprep.mubr.bf16.mxu0 0
      %2375 = vmatmul.mubr.bf16.gmra.mrb[0].mxu0 %v2311
      %v2376 = vpop.f32.mrb[0].mxu0
      %v2377 = vadd.f32 %v2294, %v2376
      %v2378 = vpop.f32.mrb[0].mxu0
      %v2379 = vpop.f32.mrb[0].mxu0
      %v2380 = vadd.f32 %v2294, %v2379
      %v2381 = vpop.f32.mrb[0].mxu0
      %2382 = vmatprep.mubr.bf16.mxu0 0
      %2383 = vmatmul.mubr.bf16.gmra.mrb[0].mxu0 %v2314
      %v2384 = vpop.f32.mrb[0].mxu0
      %v2385 = vadd.f32 %v2294, %v2384
      %v2386 = vpop.f32.mrb[0].mxu0
      %v2387 = vpop.f32.mrb[0].mxu0
      %v2388 = vadd.f32 %v2294, %v2387
      %v2389 = vpop.f32.mrb[0].mxu0
      %2390 = vmatprep.mubr.bf16.mxu0 0
      %2391 = vmatmul.mubr.bf16.gmra.mrb[0].mxu0 %v2317
      %v2392 = vpop.f32.mrb[0].mxu0
      %v2393 = vadd.f32 %v2294, %v2392
      %v2394 = vpop.f32.mrb[0].mxu0
      %v2395 = vpop.f32.mrb[0].mxu0
      %v2396 = vadd.f32 %v2294, %v2395
      %v2397 = vpop.f32.mrb[0].mxu0
      %2398 = vmatprep.mubr.bf16.mxu0 0
      %2399 = vmatmul.mubr.bf16.gmra.mrb[0].mxu0 %v2320
      %v2400 = vpop.f32.mrb[0].mxu0
      %v2401 = vadd.f32 %v2294, %v2400
      %v2402 = vpop.f32.mrb[0].mxu0
      %v2403 = vpop.f32.mrb[0].mxu0
      %v2404 = vadd.f32 %v2294, %v2403
      %v2405 = vpop.f32.mrb[0].mxu0
      %2406 = vmatprep.mubr.bf16.mxu0 0
      %2407 = vmatmul.mubr.bf16.gmra.mrb[0].mxu0 %v2323
      %v2408 = vpop.f32.mrb[0].mxu0
      %v2409 = vadd.f32 %v2294, %v2408
      %v2410 = vpop.f32.mrb[0].mxu0
      %v2411 = vpop.f32.mrb[0].mxu0
      %v2412 = vadd.f32 %v2294, %v2411
      %v2413 = vpop.f32.mrb[0].mxu0
      %2414 = vmatprep.mubr.bf16.mxu0 0
      %2415 = vmatmul.mubr.bf16.gmra.mrb[0].mxu0 %v2326
      %v2416 = vpop.f32.mrb[0].mxu0
      %v2417 = vadd.f32 %v2294, %v2416
      %v2418 = vpop.f32.mrb[0].mxu0
      %v2419 = vpop.f32.mrb[0].mxu0
      %v2420 = vadd.f32 %v2294, %v2419
      %v2421 = vpop.f32.mrb[0].mxu0
      %2422 = vmatprep.mubr.bf16.mxu0 0
      %2423 = vmatmul.mubr.bf16.gmra.mrb[0].mxu0 %v2329
      %v2424 = vpop.f32.mrb[0].mxu0
      %v2425 = vadd.f32 %v2294, %v2424
      %v2426 = vpop.f32.mrb[0].mxu0
      %v2427 = vpop.f32.mrb[0].mxu0
      %v2428 = vadd.f32 %v2294, %v2427
      %v2429 = vpop.f32.mrb[0].mxu0
      %2430 = vdwg.mxu0
      %v2431 = vpack.c.bf16 %v2372, %v2369
      %v2432 = vpack.c.bf16 %v2380, %v2377
      %v2433 = vpack.c.bf16 %v2388, %v2385
      %v2434 = vpack.c.bf16 %v2396, %v2393
      %v2435 = vpack.c.bf16 %v2404, %v2401
      %v2436 = vpack.c.bf16 %v2412, %v2409
      %v2437 = vpack.c.bf16 %v2420, %v2417
      %v2438 = vpack.c.bf16 %v2428, %v2425
      %2447 = vrot.lane.b32.xlu0 %v2431, 100
      %v2448 = vpop.permute.xlu0 %2447
      %2449 = vrot.lane.b32.xlu0 %v2432, 100
      %v2450 = vpop.permute.xlu0 %2449
      %2451 = vrot.lane.b32.xlu0 %v2433, 100
      %v2452 = vpop.permute.xlu0 %2451
      %2453 = vrot.lane.b32.xlu0 %v2434, 100
      %v2454 = vpop.permute.xlu0 %2453
      %2455 = vrot.lane.b32.xlu0 %v2435, 100
      %v2456 = vpop.permute.xlu0 %2455
      %2457 = vrot.lane.b32.xlu0 %v2436, 100
      %v2458 = vpop.permute.xlu0 %2457
      %2459 = vrot.lane.b32.xlu0 %v2437, 100
      %v2460 = vpop.permute.xlu0 %2459
      %2461 = vrot.lane.b32.xlu0 %v2438, 100
      %v2462 = vpop.permute.xlu0 %2461
      %v2464 = vsel %vm681, %v2431, 0
      %v2467 = vsel %vm681, %v2432, 0
      %v2470 = vsel %vm681, %v2433, 0
      %v2473 = vsel %vm681, %v2434, 0
      %v2476 = vsel %vm681, %v2435, 0
      %v2479 = vsel %vm681, %v2436, 0
      %v2482 = vsel %vm681, %v2437, 0
      %v2485 = vsel %vm681, %v2438, 0
      %v2488 = vsel %vm681, %v2448, 0
      %v2491 = vsel %vm681, %v2450, 0
      %v2494 = vsel %vm681, %v2452, 0
      %v2497 = vsel %vm681, %v2454, 0
      %v2500 = vsel %vm681, %v2456, 0
      %v2503 = vsel %vm681, %v2458, 0
      %v2506 = vsel %vm681, %v2460, 0
      %v2509 = vsel %vm681, %v2462, 0
      %2511 = vmatprep.subr.bf16.mxu0 0
      %2512 = vmatpush1.bf16.xpose.msra.mxu0 %v2488
      %2513 = vmatprep.subr.bf16.mxu0 0
      %2514 = vmatpush1.bf16.xpose.msra.mxu0 %v2491
      %2515 = vmatprep.subr.bf16.mxu0 0
      %2516 = vmatpush1.bf16.xpose.msra.mxu0 %v2494
      %2517 = vmatprep.subr.bf16.mxu0 0
      %2518 = vmatpush1.bf16.xpose.msra.mxu0 %v2497
      %2519 = vmatprep.subr.bf16.mxu0 0
      %2520 = vmatpush1.bf16.xpose.msra.mxu0 %v2500
      %2521 = vmatprep.subr.bf16.mxu0 0
      %2522 = vmatpush1.bf16.xpose.msra.mxu0 %v2503
      %2523 = vmatprep.subr.bf16.mxu0 0
      %2524 = vmatpush1.bf16.xpose.msra.mxu0 %v2506
      %2525 = vmatprep.subr.bf16.mxu0 0
      %2526 = vmatpush1.bf16.xpose.msra.mxu0 %v2509
      %2527 = vmatprep.subr.bf16.mxu0 0
      %2528 = vmatpush1.bf16.xpose.msra.mxu0 0
      %2529 = vmatprep.subr.bf16.mxu0 0
      %2530 = vmatpush1.bf16.xpose.msra.mxu0 0
      %2531 = vmatprep.subr.bf16.mxu0 0
      %2532 = vmatpush1.bf16.xpose.msra.mxu0 0
      %2533 = vmatprep.subr.bf16.mxu0 0
      %2534 = vmatpush1.bf16.xpose.msra.mxu0 0
      %2535 = vmatprep.subr.bf16.mxu0 0
      %2536 = vmatpush1.bf16.xpose.msra.mxu0 0
      %2537 = vmatprep.subr.bf16.mxu0 0
      %2538 = vmatpush1.bf16.xpose.msra.mxu0 0
      %2539 = vmatprep.subr.bf16.mxu0 0
      %2540 = vmatpush1.bf16.xpose.msra.mxu0 0
      %2541 = vmatprep.subr.bf16.mxu0 0
      %2542 = vmatpush1.bf16.xpose.msra.mxu0 0
      %2543 = vmatprep.mubr.bf16.mxu0 0
      %2544 = vmatmul.mubr.bf16.gmra.mrb[0].mxu0 %v2464
      %v2545 = vpop.f32.mrb[0].mxu0
      %v2546 = vadd.f32 %v635, %v2545
      %v2547 = vpop.f32.mrb[0].mxu0
      %v2548 = vpop.f32.mrb[0].mxu0
      %v2549 = vadd.f32 %v636, %v2548
      %v2550 = vpop.f32.mrb[0].mxu0
      %2551 = vmatprep.mubr.bf16.mxu0 0
      %2552 = vmatmul.mubr.bf16.gmra.mrb[0].mxu0 %v2467
      %v2553 = vpop.f32.mrb[0].mxu0
      %v2554 = vadd.f32 %v637, %v2553
      %v2555 = vpop.f32.mrb[0].mxu0
      %v2556 = vpop.f32.mrb[0].mxu0
      %v2557 = vadd.f32 %v638, %v2556
      %v2558 = vpop.f32.mrb[0].mxu0
      %2559 = vmatprep.mubr.bf16.mxu0 0
      %2560 = vmatmul.mubr.bf16.gmra.mrb[0].mxu0 %v2470
      %v2561 = vpop.f32.mrb[0].mxu0
      %v2562 = vadd.f32 %v639, %v2561
      %v2563 = vpop.f32.mrb[0].mxu0
      %v2564 = vpop.f32.mrb[0].mxu0
      %v2565 = vadd.f32 %v640, %v2564
      %v2566 = vpop.f32.mrb[0].mxu0
      %2567 = vmatprep.mubr.bf16.mxu0 0
      %2568 = vmatmul.mubr.bf16.gmra.mrb[0].mxu0 %v2473
      %v2569 = vpop.f32.mrb[0].mxu0
      %v2570 = vadd.f32 %v641, %v2569
      %v2571 = vpop.f32.mrb[0].mxu0
      %v2572 = vpop.f32.mrb[0].mxu0
      %v2573 = vadd.f32 %v642, %v2572
      %v2574 = vpop.f32.mrb[0].mxu0
      %2575 = vmatprep.mubr.bf16.mxu0 0
      %2576 = vmatmul.mubr.bf16.gmra.mrb[0].mxu0 %v2476
      %v2577 = vpop.f32.mrb[0].mxu0
      %v2578 = vadd.f32 %v643, %v2577
      %v2579 = vpop.f32.mrb[0].mxu0
      %v2580 = vpop.f32.mrb[0].mxu0
      %v2581 = vadd.f32 %v644, %v2580
      %v2582 = vpop.f32.mrb[0].mxu0
      %2583 = vmatprep.mubr.bf16.mxu0 0
      %2584 = vmatmul.mubr.bf16.gmra.mrb[0].mxu0 %v2479
      %v2585 = vpop.f32.mrb[0].mxu0
      %v2586 = vadd.f32 %v645, %v2585
      %v2587 = vpop.f32.mrb[0].mxu0
      %v2588 = vpop.f32.mrb[0].mxu0
      %v2589 = vadd.f32 %v646, %v2588
      %v2590 = vpop.f32.mrb[0].mxu0
      %2591 = vmatprep.mubr.bf16.mxu0 0
      %2592 = vmatmul.mubr.bf16.gmra.mrb[0].mxu0 %v2482
      %v2593 = vpop.f32.mrb[0].mxu0
      %v2594 = vadd.f32 %v647, %v2593
      %v2595 = vpop.f32.mrb[0].mxu0
      %v2596 = vpop.f32.mrb[0].mxu0
      %v2597 = vadd.f32 %v648, %v2596
      %v2598 = vpop.f32.mrb[0].mxu0
      %2599 = vmatprep.mubr.bf16.mxu0 0
      %2600 = vmatmul.mubr.bf16.gmra.mrb[0].mxu0 %v2485
      %v2601 = vpop.f32.mrb[0].mxu0
      %v2602 = vadd.f32 %v649, %v2601
      %v2603 = vpop.f32.mrb[0].mxu0
      %v2604 = vpop.f32.mrb[0].mxu0
      %v2605 = vadd.f32 %v650, %v2604
      %v2606 = vpop.f32.mrb[0].mxu0
      %2607 = vdwg.mxu0
      %2608 = vmax.xlane.f32.xlu0 %v2546
      %v2609 = vpop.xlane.xlu0 %2608
      %2610 = vmax.xlane.f32.xlu0 %v2549
      %v2611 = vpop.xlane.xlu0 %2610
      %2612 = vmax.xlane.f32.xlu0 %v2554
      %v2613 = vpop.xlane.xlu0 %2612
      %2614 = vmax.xlane.f32.xlu0 %v2557
      %v2615 = vpop.xlane.xlu0 %2614
      %2616 = vmax.xlane.f32.xlu0 %v2562
      %v2617 = vpop.xlane.xlu0 %2616
      %2618 = vmax.xlane.f32.xlu0 %v2565
      %v2619 = vpop.xlane.xlu0 %2618
      %2620 = vmax.xlane.f32.xlu0 %v2570
      %v2621 = vpop.xlane.xlu0 %2620
      %2622 = vmax.xlane.f32.xlu0 %v2573
      %v2623 = vpop.xlane.xlu0 %2622
      %2624 = vmax.xlane.f32.xlu0 %v2578
      %v2625 = vpop.xlane.xlu0 %2624
      %2626 = vmax.xlane.f32.xlu0 %v2581
      %v2627 = vpop.xlane.xlu0 %2626
      %2628 = vmax.xlane.f32.xlu0 %v2586
      %v2629 = vpop.xlane.xlu0 %2628
      %2630 = vmax.xlane.f32.xlu0 %v2589
      %v2631 = vpop.xlane.xlu0 %2630
      %2632 = vmax.xlane.f32.xlu0 %v2594
      %v2633 = vpop.xlane.xlu0 %2632
      %2634 = vmax.xlane.f32.xlu0 %v2597
      %v2635 = vpop.xlane.xlu0 %2634
      %2636 = vmax.xlane.f32.xlu0 %v2602
      %v2637 = vpop.xlane.xlu0 %2636
      %2638 = vmax.xlane.f32.xlu0 %v2605
      %v2639 = vpop.xlane.xlu0 %2638
      %v2640 = vsub.f32 %v2546, %v2609
      %v2641 = vsub.f32 %v2549, %v2611
      %v2642 = vsub.f32 %v2554, %v2613
      %v2643 = vsub.f32 %v2557, %v2615
      %v2644 = vsub.f32 %v2562, %v2617
      %v2645 = vsub.f32 %v2565, %v2619
      %v2646 = vsub.f32 %v2570, %v2621
      %v2647 = vsub.f32 %v2573, %v2623
      %v2648 = vsub.f32 %v2578, %v2625
      %v2649 = vsub.f32 %v2581, %v2627
      %v2650 = vsub.f32 %v2586, %v2629
      %v2651 = vsub.f32 %v2589, %v2631
      %v2652 = vsub.f32 %v2594, %v2633
      %v2653 = vsub.f32 %v2597, %v2635
      %v2654 = vsub.f32 %v2602, %v2637
      %v2655 = vsub.f32 %v2605, %v2639
      %v2656 = vmul.f32 %v2640, 1.442695
      %v2657 = vpow.pop %v2656
      %v2658 = vmul.f32 %v2641, 1.442695
      %v2659 = vpow.pop %v2658
      %v2660 = vmul.f32 %v2642, 1.442695
      %v2661 = vpow.pop %v2660
      %v2662 = vmul.f32 %v2643, 1.442695
      %v2663 = vpow.pop %v2662
      %v2664 = vmul.f32 %v2644, 1.442695
      %v2665 = vpow.pop %v2664
      %v2666 = vmul.f32 %v2645, 1.442695
      %v2667 = vpow.pop %v2666
      %v2668 = vmul.f32 %v2646, 1.442695
      %v2669 = vpow.pop %v2668
      %v2670 = vmul.f32 %v2647, 1.442695
      %v2671 = vpow.pop %v2670
      %v2672 = vmul.f32 %v2648, 1.442695
      %v2673 = vpow.pop %v2672
      %v2674 = vmul.f32 %v2649, 1.442695
      %v2675 = vpow.pop %v2674
      %v2676 = vmul.f32 %v2650, 1.442695
      %v2677 = vpow.pop %v2676
      %v2678 = vmul.f32 %v2651, 1.442695
      %v2679 = vpow.pop %v2678
      %v2680 = vmul.f32 %v2652, 1.442695
      %v2681 = vpow.pop %v2680
      %v2682 = vmul.f32 %v2653, 1.442695
      %v2683 = vpow.pop %v2682
      %v2684 = vmul.f32 %v2654, 1.442695
      %v2685 = vpow.pop %v2684
      %v2686 = vmul.f32 %v2655, 1.442695
      %v2687 = vpow.pop %v2686
      %2688 = vadd.xlane.f32.xlu0 %v2657
      %v2689 = vpop.xlane.xlu0 %2688
      %2690 = vadd.xlane.f32.xlu0 %v2659
      %v2691 = vpop.xlane.xlu0 %2690
      %2692 = vadd.xlane.f32.xlu0 %v2661
      %v2693 = vpop.xlane.xlu0 %2692
      %2694 = vadd.xlane.f32.xlu0 %v2663
      %v2695 = vpop.xlane.xlu0 %2694
      %2696 = vadd.xlane.f32.xlu0 %v2665
      %v2697 = vpop.xlane.xlu0 %2696
      %2698 = vadd.xlane.f32.xlu0 %v2667
      %v2699 = vpop.xlane.xlu0 %2698
      %2700 = vadd.xlane.f32.xlu0 %v2669
      %v2701 = vpop.xlane.xlu0 %2700
      %2702 = vadd.xlane.f32.xlu0 %v2671
      %v2703 = vpop.xlane.xlu0 %2702
      %2704 = vadd.xlane.f32.xlu0 %v2673
      %v2705 = vpop.xlane.xlu0 %2704
      %2706 = vadd.xlane.f32.xlu0 %v2675
      %v2707 = vpop.xlane.xlu0 %2706
      %2708 = vadd.xlane.f32.xlu0 %v2677
      %v2709 = vpop.xlane.xlu0 %2708
      %2710 = vadd.xlane.f32.xlu0 %v2679
      %v2711 = vpop.xlane.xlu0 %2710
      %2712 = vadd.xlane.f32.xlu0 %v2681
      %v2713 = vpop.xlane.xlu0 %2712
      %2714 = vadd.xlane.f32.xlu0 %v2683
      %v2715 = vpop.xlane.xlu0 %2714
      %2716 = vadd.xlane.f32.xlu0 %v2685
      %v2717 = vpop.xlane.xlu0 %2716
      %2718 = vadd.xlane.f32.xlu0 %v2687
      %v2719 = vpop.xlane.xlu0 %2718
      %v2720 = vrcp.pop %v2689
      %v2721 = vrcp.pop %v2691
      %v2722 = vrcp.pop %v2693
      %v2723 = vrcp.pop %v2695
      %v2724 = vrcp.pop %v2697
      %v2725 = vrcp.pop %v2699
      %v2726 = vrcp.pop %v2701
      %v2727 = vrcp.pop %v2703
      %v2728 = vrcp.pop %v2705
      %v2729 = vrcp.pop %v2707
      %v2730 = vrcp.pop %v2709
      %v2731 = vrcp.pop %v2711
      %v2732 = vrcp.pop %v2713
      %v2733 = vrcp.pop %v2715
      %v2734 = vrcp.pop %v2717
      %v2735 = vrcp.pop %v2719
      %v2736 = vmul.f32 %v2657, %v2720
      %v2737 = vmul.f32 %v2659, %v2721
      %v2738 = vmul.f32 %v2661, %v2722
      %v2739 = vmul.f32 %v2663, %v2723
      %v2740 = vmul.f32 %v2665, %v2724
      %v2741 = vmul.f32 %v2667, %v2725
      %v2742 = vmul.f32 %v2669, %v2726
      %v2743 = vmul.f32 %v2671, %v2727
      %v2744 = vmul.f32 %v2673, %v2728
      %v2745 = vmul.f32 %v2675, %v2729
      %v2746 = vmul.f32 %v2677, %v2730
      %v2747 = vmul.f32 %v2679, %v2731
      %v2748 = vmul.f32 %v2681, %v2732
      %v2749 = vmul.f32 %v2683, %v2733
      %v2750 = vmul.f32 %v2685, %v2734
      %v2751 = vmul.f32 %v2687, %v2735
      %v2752 = vpack.c.bf16 %v2737, %v2736
      %v2753 = vpack.c.bf16 %v2739, %v2738
      %v2754 = vpack.c.bf16 %v2741, %v2740
      %v2755 = vpack.c.bf16 %v2743, %v2742
      %v2756 = vpack.c.bf16 %v2745, %v2744
      %v2757 = vpack.c.bf16 %v2747, %v2746
      %v2758 = vpack.c.bf16 %v2749, %v2748
      %v2759 = vpack.c.bf16 %v2751, %v2750
      %2760 = vrot.lane.b32.xlu0 %v2431, 72
      %v2761 = vpop.permute.xlu0 %2760
      %2762 = vrot.lane.b32.xlu0 %v2432, 72
      %v2763 = vpop.permute.xlu0 %2762
      %2764 = vrot.lane.b32.xlu0 %v2433, 72
      %v2765 = vpop.permute.xlu0 %2764
      %2766 = vrot.lane.b32.xlu0 %v2434, 72
      %v2767 = vpop.permute.xlu0 %2766
      %2768 = vrot.lane.b32.xlu0 %v2435, 72
      %v2769 = vpop.permute.xlu0 %2768
      %2770 = vrot.lane.b32.xlu0 %v2436, 72
      %v2771 = vpop.permute.xlu0 %2770
      %2772 = vrot.lane.b32.xlu0 %v2437, 72
      %v2773 = vpop.permute.xlu0 %2772
      %2774 = vrot.lane.b32.xlu0 %v2438, 72
      %v2775 = vpop.permute.xlu0 %2774
      %2784 = vmatprep.subr.bf16.mxu0 0
      %2785 = vmatpush1.bf16.msra.mxu0 %v2761
      %2786 = vmatprep.subr.bf16.mxu0 0
      %2787 = vmatpush1.bf16.msra.mxu0 %v2763
      %2788 = vmatprep.subr.bf16.mxu0 0
      %2789 = vmatpush1.bf16.msra.mxu0 %v2765
      %2790 = vmatprep.subr.bf16.mxu0 0
      %2791 = vmatpush1.bf16.msra.mxu0 %v2767
      %2792 = vmatprep.subr.bf16.mxu0 0
      %2793 = vmatpush1.bf16.msra.mxu0 %v2769
      %2794 = vmatprep.subr.bf16.mxu0 0
      %2795 = vmatpush1.bf16.msra.mxu0 %v2771
      %2796 = vmatprep.subr.bf16.mxu0 0
      %2797 = vmatpush1.bf16.msra.mxu0 %v2773
      %2798 = vmatprep.subr.bf16.mxu0 0
      %2799 = vmatpush1.bf16.msra.mxu0 %v2775
      %2800 = vmatprep.subr.bf16.mxu0 0
      %2801 = vmatpush1.bf16.msra.mxu0 0
      %2802 = vmatprep.subr.bf16.mxu0 0
      %2803 = vmatpush1.bf16.msra.mxu0 0
      %2804 = vmatprep.subr.bf16.mxu0 0
      %2805 = vmatpush1.bf16.msra.mxu0 0
      %2806 = vmatprep.subr.bf16.mxu0 0
      %2807 = vmatpush1.bf16.msra.mxu0 0
      %2808 = vmatprep.subr.bf16.mxu0 0
      %2809 = vmatpush1.bf16.msra.mxu0 0
      %2810 = vmatprep.subr.bf16.mxu0 0
      %2811 = vmatpush1.bf16.msra.mxu0 0
      %2812 = vmatprep.subr.bf16.mxu0 0
      %2813 = vmatpush1.bf16.msra.mxu0 0
      %2814 = vmatprep.subr.bf16.mxu0 0
      %2815 = vmatpush1.bf16.msra.mxu0 0
      %2816 = vmatprep.mubr.bf16.mxu0 0
      %2817 = vmatmul.mubr.bf16.gmra.mrb[0].mxu0 %v2752
      %v2818 = vpop.f32.mrb[0].mxu0
      %v2819 = vadd.f32 0.0, %v2818
      %v2820 = vpop.f32.mrb[0].mxu0
      %v2821 = vpop.f32.mrb[0].mxu0
      %v2822 = vadd.f32 0.0, %v2821
      %v2823 = vpop.f32.mrb[0].mxu0
      %2824 = vmatprep.mubr.bf16.mxu0 0
      %2825 = vmatmul.mubr.bf16.gmra.mrb[0].mxu0 %v2753
      %v2826 = vpop.f32.mrb[0].mxu0
      %v2827 = vadd.f32 0.0, %v2826
      %v2828 = vpop.f32.mrb[0].mxu0
      %v2829 = vpop.f32.mrb[0].mxu0
      %v2830 = vadd.f32 0.0, %v2829
      %v2831 = vpop.f32.mrb[0].mxu0
      %2832 = vmatprep.mubr.bf16.mxu0 0
      %2833 = vmatmul.mubr.bf16.gmra.mrb[0].mxu0 %v2754
      %v2834 = vpop.f32.mrb[0].mxu0
      %v2835 = vadd.f32 0.0, %v2834
      %v2836 = vpop.f32.mrb[0].mxu0
      %v2837 = vpop.f32.mrb[0].mxu0
      %v2838 = vadd.f32 0.0, %v2837
      %v2839 = vpop.f32.mrb[0].mxu0
      %2840 = vmatprep.mubr.bf16.mxu0 0
      %2841 = vmatmul.mubr.bf16.gmra.mrb[0].mxu0 %v2755
      %v2842 = vpop.f32.mrb[0].mxu0
      %v2843 = vadd.f32 0.0, %v2842
      %v2844 = vpop.f32.mrb[0].mxu0
      %v2845 = vpop.f32.mrb[0].mxu0
      %v2846 = vadd.f32 0.0, %v2845
      %v2847 = vpop.f32.mrb[0].mxu0
      %2848 = vmatprep.mubr.bf16.mxu0 0
      %2849 = vmatmul.mubr.bf16.gmra.mrb[0].mxu0 %v2756
      %v2850 = vpop.f32.mrb[0].mxu0
      %v2851 = vadd.f32 0.0, %v2850
      %v2852 = vpop.f32.mrb[0].mxu0
      %v2853 = vpop.f32.mrb[0].mxu0
      %v2854 = vadd.f32 0.0, %v2853
      %v2855 = vpop.f32.mrb[0].mxu0
      %2856 = vmatprep.mubr.bf16.mxu0 0
      %2857 = vmatmul.mubr.bf16.gmra.mrb[0].mxu0 %v2757
      %v2858 = vpop.f32.mrb[0].mxu0
      %v2859 = vadd.f32 0.0, %v2858
      %v2860 = vpop.f32.mrb[0].mxu0
      %v2861 = vpop.f32.mrb[0].mxu0
      %v2862 = vadd.f32 0.0, %v2861
      %v2863 = vpop.f32.mrb[0].mxu0
      %2864 = vmatprep.mubr.bf16.mxu0 0
      %2865 = vmatmul.mubr.bf16.gmra.mrb[0].mxu0 %v2758
      %v2866 = vpop.f32.mrb[0].mxu0
      %v2867 = vadd.f32 0.0, %v2866
      %v2868 = vpop.f32.mrb[0].mxu0
      %v2869 = vpop.f32.mrb[0].mxu0
      %v2870 = vadd.f32 0.0, %v2869
      %v2871 = vpop.f32.mrb[0].mxu0
      %2872 = vmatprep.mubr.bf16.mxu0 0
      %2873 = vmatmul.mubr.bf16.gmra.mrb[0].mxu0 %v2759
      %v2874 = vpop.f32.mrb[0].mxu0
      %v2875 = vadd.f32 0.0, %v2874
      %v2876 = vpop.f32.mrb[0].mxu0
      %v2877 = vpop.f32.mrb[0].mxu0
      %v2878 = vadd.f32 0.0, %v2877
      %v2879 = vpop.f32.mrb[0].mxu0
      %2880 = vdwg.mxu0
      %v2881 = vpack.c.bf16 %v2822, %v2819
      %v2882 = vpack.c.bf16 %v2830, %v2827
      %v2883 = vpack.c.bf16 %v2838, %v2835
      %v2884 = vpack.c.bf16 %v2846, %v2843
      %v2885 = vpack.c.bf16 %v2854, %v2851
      %v2886 = vpack.c.bf16 %v2862, %v2859
      %v2887 = vpack.c.bf16 %v2870, %v2867
      %v2888 = vpack.c.bf16 %v2878, %v2875
      %s2889 = scalar_lea.vmem %s5, 16
      %v2890 = vld [vmem:[%s2889] sm:$0xf]
      %v2891 = vld [vmem:[%s2889 + $0x4] sm:$0xf]
      %v2892 = vld [vmem:[%s2889 + $0x8] sm:$0xf]
      %v2893 = vld [vmem:[%s2889 + $0xc] sm:$0x3]
      %s2894 = scalar_lea.vmem %s6, 1
      %v2895 = vld [vmem:[%s2894] sm:$0x1]
      %v2897 = vlaneseq
      %v2898 = vshrl.u32 %v2897, 7
      %v2899 = vsub.s32 0, %v2898
      %v2900 = vrot.slane %v2895, %v2899
      %v2906 = vunpack.c.l.b16 %v2890
      %v2907 = vunpack.c.l.b16 %v2891
      %v2908 = vunpack.c.l.b16 %v2892
      %v2909 = vunpack.c.l.b16 %v2893
      %v2910 = vpack.c.b16 %v2907, %v2906
      %v2911 = vpack.c.b16 %v2909, %v2908
      %v2914 = vsel %vm681, %v2881, 0
      %v2917 = vsel %vm681, %v2882, 0
      %v2920 = vsel %vm681, %v2883, 0
      %v2923 = vsel %vm681, %v2884, 0
      %v2926 = vsel %vm681, %v2885, 0
      %v2929 = vsel %vm681, %v2886, 0
      %v2932 = vsel %vm681, %v2887, 0
      %v2935 = vsel %vm681, %v2888, 0
      %v2938 = vsel %vm706, %v2911, 0
      %2940 = vmatprep.subr.bf16.mxu0 0
      %2941 = vmatpush1.bf16.msra.mxu0 %v2910
      %2942 = vmatprep.subr.bf16.mxu0 0
      %2943 = vmatpush1.bf16.msra.mxu0 %v2938
      %2944 = vmatprep.subr.bf16.mxu0 0
      %2945 = vmatpush1.bf16.msra.mxu0 0
      %2946 = vmatprep.subr.bf16.mxu0 0
      %2947 = vmatpush1.bf16.msra.mxu0 0
      %2948 = vmatprep.subr.bf16.mxu0 0
      %2949 = vmatpush1.bf16.msra.mxu0 0
      %2950 = vmatprep.subr.bf16.mxu0 0
      %2951 = vmatpush1.bf16.msra.mxu0 0
      %2952 = vmatprep.subr.bf16.mxu0 0
      %2953 = vmatpush1.bf16.msra.mxu0 0
      %2954 = vmatprep.subr.bf16.mxu0 0
      %2955 = vmatpush1.bf16.msra.mxu0 0
      %2956 = vmatprep.subr.bf16.mxu0 0
      %2957 = vmatpush1.bf16.msra.mxu0 0
      %2958 = vmatprep.subr.bf16.mxu0 0
      %2959 = vmatpush1.bf16.msra.mxu0 0
      %2960 = vmatprep.subr.bf16.mxu0 0
      %2961 = vmatpush1.bf16.msra.mxu0 0
      %2962 = vmatprep.subr.bf16.mxu0 0
      %2963 = vmatpush1.bf16.msra.mxu0 0
      %2964 = vmatprep.subr.bf16.mxu0 0
      %2965 = vmatpush1.bf16.msra.mxu0 0
      %2966 = vmatprep.subr.bf16.mxu0 0
      %2967 = vmatpush1.bf16.msra.mxu0 0
      %2968 = vmatprep.subr.bf16.mxu0 0
      %2969 = vmatpush1.bf16.msra.mxu0 0
      %2970 = vmatprep.subr.bf16.mxu0 0
      %2971 = vmatpush1.bf16.msra.mxu0 0
      %2972 = vmatprep.mubr.bf16.mxu0 0
      %2973 = vmatmul.mubr.bf16.gmra.mrb[0].mxu0 %v2914
      %v2974 = vpop.f32.mrb[0].mxu0
      %v2975 = vadd.f32 %v2900, %v2974
      %v2976 = vpop.f32.mrb[0].mxu0
      %v2977 = vpop.f32.mrb[0].mxu0
      %v2978 = vadd.f32 %v2900, %v2977
      %v2979 = vpop.f32.mrb[0].mxu0
      %2980 = vmatprep.mubr.bf16.mxu0 0
      %2981 = vmatmul.mubr.bf16.gmra.mrb[0].mxu0 %v2917
      %v2982 = vpop.f32.mrb[0].mxu0
      %v2983 = vadd.f32 %v2900, %v2982
      %v2984 = vpop.f32.mrb[0].mxu0
      %v2985 = vpop.f32.mrb[0].mxu0
      %v2986 = vadd.f32 %v2900, %v2985
      %v2987 = vpop.f32.mrb[0].mxu0
      %2988 = vmatprep.mubr.bf16.mxu0 0
      %2989 = vmatmul.mubr.bf16.gmra.mrb[0].mxu0 %v2920
      %v2990 = vpop.f32.mrb[0].mxu0
      %v2991 = vadd.f32 %v2900, %v2990
      %v2992 = vpop.f32.mrb[0].mxu0
      %v2993 = vpop.f32.mrb[0].mxu0
      %v2994 = vadd.f32 %v2900, %v2993
      %v2995 = vpop.f32.mrb[0].mxu0
      %2996 = vmatprep.mubr.bf16.mxu0 0
      %2997 = vmatmul.mubr.bf16.gmra.mrb[0].mxu0 %v2923
      %v2998 = vpop.f32.mrb[0].mxu0
      %v2999 = vadd.f32 %v2900, %v2998
      %v3000 = vpop.f32.mrb[0].mxu0
      %v3001 = vpop.f32.mrb[0].mxu0
      %v3002 = vadd.f32 %v2900, %v3001
      %v3003 = vpop.f32.mrb[0].mxu0
      %3004 = vmatprep.mubr.bf16.mxu0 0
      %3005 = vmatmul.mubr.bf16.gmra.mrb[0].mxu0 %v2926
      %v3006 = vpop.f32.mrb[0].mxu0
      %v3007 = vadd.f32 %v2900, %v3006
      %v3008 = vpop.f32.mrb[0].mxu0
      %v3009 = vpop.f32.mrb[0].mxu0
      %v3010 = vadd.f32 %v2900, %v3009
      %v3011 = vpop.f32.mrb[0].mxu0
      %3012 = vmatprep.mubr.bf16.mxu0 0
      %3013 = vmatmul.mubr.bf16.gmra.mrb[0].mxu0 %v2929
      %v3014 = vpop.f32.mrb[0].mxu0
      %v3015 = vadd.f32 %v2900, %v3014
      %v3016 = vpop.f32.mrb[0].mxu0
      %v3017 = vpop.f32.mrb[0].mxu0
      %v3018 = vadd.f32 %v2900, %v3017
      %v3019 = vpop.f32.mrb[0].mxu0
      %3020 = vmatprep.mubr.bf16.mxu0 0
      %3021 = vmatmul.mubr.bf16.gmra.mrb[0].mxu0 %v2932
      %v3022 = vpop.f32.mrb[0].mxu0
      %v3023 = vadd.f32 %v2900, %v3022
      %v3024 = vpop.f32.mrb[0].mxu0
      %v3025 = vpop.f32.mrb[0].mxu0
      %v3026 = vadd.f32 %v2900, %v3025
      %v3027 = vpop.f32.mrb[0].mxu0
      %3028 = vmatprep.mubr.bf16.mxu0 0
      %3029 = vmatmul.mubr.bf16.gmra.mrb[0].mxu0 %v2935
      %v3030 = vpop.f32.mrb[0].mxu0
      %v3031 = vadd.f32 %v2900, %v3030
      %v3032 = vpop.f32.mrb[0].mxu0
      %v3033 = vpop.f32.mrb[0].mxu0
      %v3034 = vadd.f32 %v2900, %v3033
      %v3035 = vpop.f32.mrb[0].mxu0
      %3036 = vdwg.mxu0
      %v3037 = vadd.f32 %v2259, %v2975
      %v3038 = vadd.f32 %v2260, %v2978
      %v3039 = vadd.f32 %v2261, %v2983
      %v3040 = vadd.f32 %v2262, %v2986
      %v3041 = vadd.f32 %v2263, %v2991
      %v3042 = vadd.f32 %v2264, %v2994
      %v3043 = vadd.f32 %v2265, %v2999
      %v3044 = vadd.f32 %v2266, %v3002
      %v3045 = vadd.f32 %v2267, %v3007
      %v3046 = vadd.f32 %v2268, %v3010
      %v3047 = vadd.f32 %v2269, %v3015
      %v3048 = vadd.f32 %v2270, %v3018
      %v3049 = vadd.f32 %v2271, %v3023
      %v3050 = vadd.f32 %v2272, %v3026
      %v3051 = vadd.f32 %v2273, %v3031
      %v3052 = vadd.f32 %v2274, %v3034
      %s3053 = scalar_lea.vmem %s7, 1
      %v3054 = vld [vmem:[%s3053] sm:$0x1]
      %s3055 = scalar_lea.vmem %s8, 1
      %v3056 = vld [vmem:[%s3055] sm:$0x1]
      %v3057 = vsel %vm681, %v3037, 0.0
      %3058 = vadd.xlane.f32.xlu0 %v3057
      %v3059 = vpop.xlane.xlu0 %3058
      %v3060 = vsel %vm681, %v3038, 0.0
      %3061 = vadd.xlane.f32.xlu0 %v3060
      %v3062 = vpop.xlane.xlu0 %3061
      %v3063 = vsel %vm681, %v3039, 0.0
      %3064 = vadd.xlane.f32.xlu0 %v3063
      %v3065 = vpop.xlane.xlu0 %3064
      %v3066 = vsel %vm681, %v3040, 0.0
      %3067 = vadd.xlane.f32.xlu0 %v3066
      %v3068 = vpop.xlane.xlu0 %3067
      %v3069 = vsel %vm681, %v3041, 0.0
      %3070 = vadd.xlane.f32.xlu0 %v3069
      %v3071 = vpop.xlane.xlu0 %3070
      %v3072 = vsel %vm681, %v3042, 0.0
      %3073 = vadd.xlane.f32.xlu0 %v3072
      %v3074 = vpop.xlane.xlu0 %3073
      %v3075 = vsel %vm681, %v3043, 0.0
      %3076 = vadd.xlane.f32.xlu0 %v3075
      %v3077 = vpop.xlane.xlu0 %3076
      %v3078 = vsel %vm681, %v3044, 0.0
      %3079 = vadd.xlane.f32.xlu0 %v3078
      %v3080 = vpop.xlane.xlu0 %3079
      %v3081 = vsel %vm681, %v3045, 0.0
      %3082 = vadd.xlane.f32.xlu0 %v3081
      %v3083 = vpop.xlane.xlu0 %3082
      %v3084 = vsel %vm681, %v3046, 0.0
      %3085 = vadd.xlane.f32.xlu0 %v3084
      %v3086 = vpop.xlane.xlu0 %3085
      %v3087 = vsel %vm681, %v3047, 0.0
      %3088 = vadd.xlane.f32.xlu0 %v3087
      %v3089 = vpop.xlane.xlu0 %3088
      %v3090 = vsel %vm681, %v3048, 0.0
      %3091 = vadd.xlane.f32.xlu0 %v3090
      %v3092 = vpop.xlane.xlu0 %3091
      %v3093 = vsel %vm681, %v3049, 0.0
      %3094 = vadd.xlane.f32.xlu0 %v3093
      %v3095 = vpop.xlane.xlu0 %3094
      %v3096 = vsel %vm681, %v3050, 0.0
      %3097 = vadd.xlane.f32.xlu0 %v3096
      %v3098 = vpop.xlane.xlu0 %3097
      %v3099 = vsel %vm681, %v3051, 0.0
      %3100 = vadd.xlane.f32.xlu0 %v3099
      %v3101 = vpop.xlane.xlu0 %3100
      %v3102 = vsel %vm681, %v3052, 0.0
      %3103 = vadd.xlane.f32.xlu0 %v3102
      %v3104 = vpop.xlane.xlu0 %3103
      %v3105 = vmul.f32 %v3059, %v1477
      %v3106 = vmul.f32 %v3062, %v1477
      %v3107 = vmul.f32 %v3065, %v1477
      %v3108 = vmul.f32 %v3068, %v1477
      %v3109 = vmul.f32 %v3071, %v1477
      %v3110 = vmul.f32 %v3074, %v1477
      %v3111 = vmul.f32 %v3077, %v1477
      %v3112 = vmul.f32 %v3080, %v1477
      %v3113 = vmul.f32 %v3083, %v1477
      %v3114 = vmul.f32 %v3086, %v1477
      %v3115 = vmul.f32 %v3089, %v1477
      %v3116 = vmul.f32 %v3092, %v1477
      %v3117 = vmul.f32 %v3095, %v1477
      %v3118 = vmul.f32 %v3098, %v1477
      %v3119 = vmul.f32 %v3101, %v1477
      %v3120 = vmul.f32 %v3104, %v1477
      %v3121 = vsub.f32 %v3037, %v3105
      %v3122 = vsub.f32 %v3038, %v3106
      %v3123 = vsub.f32 %v3039, %v3107
      %v3124 = vsub.f32 %v3040, %v3108
      %v3125 = vsub.f32 %v3041, %v3109
      %v3126 = vsub.f32 %v3042, %v3110
      %v3127 = vsub.f32 %v3043, %v3111
      %v3128 = vsub.f32 %v3044, %v3112
      %v3129 = vsub.f32 %v3045, %v3113
      %v3130 = vsub.f32 %v3046, %v3114
      %v3131 = vsub.f32 %v3047, %v3115
      %v3132 = vsub.f32 %v3048, %v3116
      %v3133 = vsub.f32 %v3049, %v3117
      %v3134 = vsub.f32 %v3050, %v3118
      %v3135 = vsub.f32 %v3051, %v3119
      %v3136 = vsub.f32 %v3052, %v3120
      %v3137 = vmul.f32 %v3121, %v3121
      %v3138 = vmul.f32 %v3122, %v3122
      %v3139 = vmul.f32 %v3123, %v3123
      %v3140 = vmul.f32 %v3124, %v3124
      %v3141 = vmul.f32 %v3125, %v3125
      %v3142 = vmul.f32 %v3126, %v3126
      %v3143 = vmul.f32 %v3127, %v3127
      %v3144 = vmul.f32 %v3128, %v3128
      %v3145 = vmul.f32 %v3129, %v3129
      %v3146 = vmul.f32 %v3130, %v3130
      %v3147 = vmul.f32 %v3131, %v3131
      %v3148 = vmul.f32 %v3132, %v3132
      %v3149 = vmul.f32 %v3133, %v3133
      %v3150 = vmul.f32 %v3134, %v3134
      %v3151 = vmul.f32 %v3135, %v3135
      %v3152 = vmul.f32 %v3136, %v3136
      %v3153 = vsel %vm681, %v3137, 0.0
      %3154 = vadd.xlane.f32.xlu0 %v3153
      %v3155 = vpop.xlane.xlu0 %3154
      %v3156 = vsel %vm681, %v3138, 0.0
      %3157 = vadd.xlane.f32.xlu0 %v3156
      %v3158 = vpop.xlane.xlu0 %3157
      %v3159 = vsel %vm681, %v3139, 0.0
      %3160 = vadd.xlane.f32.xlu0 %v3159
      %v3161 = vpop.xlane.xlu0 %3160
      %v3162 = vsel %vm681, %v3140, 0.0
      %3163 = vadd.xlane.f32.xlu0 %v3162
      %v3164 = vpop.xlane.xlu0 %3163
      %v3165 = vsel %vm681, %v3141, 0.0
      %3166 = vadd.xlane.f32.xlu0 %v3165
      %v3167 = vpop.xlane.xlu0 %3166
      %v3168 = vsel %vm681, %v3142, 0.0
      %3169 = vadd.xlane.f32.xlu0 %v3168
      %v3170 = vpop.xlane.xlu0 %3169
      %v3171 = vsel %vm681, %v3143, 0.0
      %3172 = vadd.xlane.f32.xlu0 %v3171
      %v3173 = vpop.xlane.xlu0 %3172
      %v3174 = vsel %vm681, %v3144, 0.0
      %3175 = vadd.xlane.f32.xlu0 %v3174
      %v3176 = vpop.xlane.xlu0 %3175
      %v3177 = vsel %vm681, %v3145, 0.0
      %3178 = vadd.xlane.f32.xlu0 %v3177
      %v3179 = vpop.xlane.xlu0 %3178
      %v3180 = vsel %vm681, %v3146, 0.0
      %3181 = vadd.xlane.f32.xlu0 %v3180
      %v3182 = vpop.xlane.xlu0 %3181
      %v3183 = vsel %vm681, %v3147, 0.0
      %3184 = vadd.xlane.f32.xlu0 %v3183
      %v3185 = vpop.xlane.xlu0 %3184
      %v3186 = vsel %vm681, %v3148, 0.0
      %3187 = vadd.xlane.f32.xlu0 %v3186
      %v3188 = vpop.xlane.xlu0 %3187
      %v3189 = vsel %vm681, %v3149, 0.0
      %3190 = vadd.xlane.f32.xlu0 %v3189
      %v3191 = vpop.xlane.xlu0 %3190
      %v3192 = vsel %vm681, %v3150, 0.0
      %3193 = vadd.xlane.f32.xlu0 %v3192
      %v3194 = vpop.xlane.xlu0 %3193
      %v3195 = vsel %vm681, %v3151, 0.0
      %3196 = vadd.xlane.f32.xlu0 %v3195
      %v3197 = vpop.xlane.xlu0 %3196
      %v3198 = vsel %vm681, %v3152, 0.0
      %3199 = vadd.xlane.f32.xlu0 %v3198
      %v3200 = vpop.xlane.xlu0 %3199
      %v3201 = vmul.f32 %v3155, %v1477
      %v3202 = vmul.f32 %v3158, %v1477
      %v3203 = vmul.f32 %v3161, %v1477
      %v3204 = vmul.f32 %v3164, %v1477
      %v3205 = vmul.f32 %v3167, %v1477
      %v3206 = vmul.f32 %v3170, %v1477
      %v3207 = vmul.f32 %v3173, %v1477
      %v3208 = vmul.f32 %v3176, %v1477
      %v3209 = vmul.f32 %v3179, %v1477
      %v3210 = vmul.f32 %v3182, %v1477
      %v3211 = vmul.f32 %v3185, %v1477
      %v3212 = vmul.f32 %v3188, %v1477
      %v3213 = vmul.f32 %v3191, %v1477
      %v3214 = vmul.f32 %v3194, %v1477
      %v3215 = vmul.f32 %v3197, %v1477
      %v3216 = vmul.f32 %v3200, %v1477
      %v3217 = vadd.f32 %v3201, 1e-05
      %v3218 = vadd.f32 %v3202, 1e-05
      %v3219 = vadd.f32 %v3203, 1e-05
      %v3220 = vadd.f32 %v3204, 1e-05
      %v3221 = vadd.f32 %v3205, 1e-05
      %v3222 = vadd.f32 %v3206, 1e-05
      %v3223 = vadd.f32 %v3207, 1e-05
      %v3224 = vadd.f32 %v3208, 1e-05
      %v3225 = vadd.f32 %v3209, 1e-05
      %v3226 = vadd.f32 %v3210, 1e-05
      %v3227 = vadd.f32 %v3211, 1e-05
      %v3228 = vadd.f32 %v3212, 1e-05
      %v3229 = vadd.f32 %v3213, 1e-05
      %v3230 = vadd.f32 %v3214, 1e-05
      %v3231 = vadd.f32 %v3215, 1e-05
      %v3232 = vadd.f32 %v3216, 1e-05
      %v3233 = vrsqrt.pop %v3217
      %v3234 = vrsqrt.pop %v3218
      %v3235 = vrsqrt.pop %v3219
      %v3236 = vrsqrt.pop %v3220
      %v3237 = vrsqrt.pop %v3221
      %v3238 = vrsqrt.pop %v3222
      %v3239 = vrsqrt.pop %v3223
      %v3240 = vrsqrt.pop %v3224
      %v3241 = vrsqrt.pop %v3225
      %v3242 = vrsqrt.pop %v3226
      %v3243 = vrsqrt.pop %v3227
      %v3244 = vrsqrt.pop %v3228
      %v3245 = vrsqrt.pop %v3229
      %v3246 = vrsqrt.pop %v3230
      %v3247 = vrsqrt.pop %v3231
      %v3248 = vrsqrt.pop %v3232
      %v3249 = vmul.f32 %v3121, %v3233
      %v3250 = vmul.f32 %v3122, %v3234
      %v3251 = vmul.f32 %v3123, %v3235
      %v3252 = vmul.f32 %v3124, %v3236
      %v3253 = vmul.f32 %v3125, %v3237
      %v3254 = vmul.f32 %v3126, %v3238
      %v3255 = vmul.f32 %v3127, %v3239
      %v3256 = vmul.f32 %v3128, %v3240
      %v3257 = vmul.f32 %v3129, %v3241
      %v3258 = vmul.f32 %v3130, %v3242
      %v3259 = vmul.f32 %v3131, %v3243
      %v3260 = vmul.f32 %v3132, %v3244
      %v3261 = vmul.f32 %v3133, %v3245
      %v3262 = vmul.f32 %v3134, %v3246
      %v3263 = vmul.f32 %v3135, %v3247
      %v3264 = vmul.f32 %v3136, %v3248
      %v3266 = vlaneseq
      %v3267 = vshrl.u32 %v3266, 7
      %v3268 = vsub.s32 0, %v3267
      %v3269 = vrot.slane %v3054, %v3268
      %v3271 = vmul.f32 %v3249, %v3269
      %v3272 = vmul.f32 %v3250, %v3269
      %v3273 = vmul.f32 %v3251, %v3269
      %v3274 = vmul.f32 %v3252, %v3269
      %v3275 = vmul.f32 %v3253, %v3269
      %v3276 = vmul.f32 %v3254, %v3269
      %v3277 = vmul.f32 %v3255, %v3269
      %v3278 = vmul.f32 %v3256, %v3269
      %v3279 = vmul.f32 %v3257, %v3269
      %v3280 = vmul.f32 %v3258, %v3269
      %v3281 = vmul.f32 %v3259, %v3269
      %v3282 = vmul.f32 %v3260, %v3269
      %v3283 = vmul.f32 %v3261, %v3269
      %v3284 = vmul.f32 %v3262, %v3269
      %v3285 = vmul.f32 %v3263, %v3269
      %v3286 = vmul.f32 %v3264, %v3269
      %v3288 = vlaneseq
      %v3289 = vshrl.u32 %v3288, 7
      %v3290 = vsub.s32 0, %v3289
      %v3291 = vrot.slane %v3056, %v3290
      %v3293 = vadd.f32 %v3271, %v3291
      %v3294 = vadd.f32 %v3272, %v3291
      %v3295 = vadd.f32 %v3273, %v3291
      %v3296 = vadd.f32 %v3274, %v3291
      %v3297 = vadd.f32 %v3275, %v3291
      %v3298 = vadd.f32 %v3276, %v3291
      %v3299 = vadd.f32 %v3277, %v3291
      %v3300 = vadd.f32 %v3278, %v3291
      %v3301 = vadd.f32 %v3279, %v3291
      %v3302 = vadd.f32 %v3280, %v3291
      %v3303 = vadd.f32 %v3281, %v3291
      %v3304 = vadd.f32 %v3282, %v3291
      %v3305 = vadd.f32 %v3283, %v3291
      %v3306 = vadd.f32 %v3284, %v3291
      %v3307 = vadd.f32 %v3285, %v3291
      %v3308 = vadd.f32 %v3286, %v3291
      %v3309 = vpack.c.bf16 %v3294, %v3293
      %v3310 = vpack.c.bf16 %v3296, %v3295
      %v3311 = vpack.c.bf16 %v3298, %v3297
      %v3312 = vpack.c.bf16 %v3300, %v3299
      %v3313 = vpack.c.bf16 %v3302, %v3301
      %v3314 = vpack.c.bf16 %v3304, %v3303
      %v3315 = vpack.c.bf16 %v3306, %v3305
      %v3316 = vpack.c.bf16 %v3308, %v3307
      %s3317 = scalar_lea.vmem %s9, 16
      %v3318 = vld [vmem:[%s3317] sm:$0xf]
      %v3319 = vld [vmem:[%s3317 + $0x4] sm:$0xf]
      %v3320 = vld [vmem:[%s3317 + $0x8] sm:$0xf]
      %v3321 = vld [vmem:[%s3317 + $0xc] sm:$0x3]
      %s3322 = scalar_lea.vmem %s10, 1
      %v3323 = vld [vmem:[%s3322] sm:$0x1]
      %v3325 = vlaneseq
      %v3326 = vshrl.u32 %v3325, 7
      %v3327 = vsub.s32 0, %v3326
      %v3328 = vrot.slane %v3323, %v3327
      %v3334 = vunpack.c.l.b16 %v3318
      %v3335 = vunpack.c.l.b16 %v3319
      %v3336 = vunpack.c.l.b16 %v3320
      %v3337 = vunpack.c.l.b16 %v3321
      %v3338 = vpack.c.b16 %v3335, %v3334
      %v3339 = vpack.c.b16 %v3337, %v3336
      %v3342 = vsel %vm681, %v3309, 0
      %v3345 = vsel %vm681, %v3310, 0
      %v3348 = vsel %vm681, %v3311, 0
      %v3351 = vsel %vm681, %v3312, 0
      %v3354 = vsel %vm681, %v3313, 0
      %v3357 = vsel %vm681, %v3314, 0
      %v3360 = vsel %vm681, %v3315, 0
      %v3363 = vsel %vm681, %v3316, 0
      %v3366 = vsel %vm706, %v3339, 0
      %3368 = vmatprep.subr.bf16.mxu0 0
      %3369 = vmatpush1.bf16.msra.mxu0 %v3338
      %3370 = vmatprep.subr.bf16.mxu0 0
      %3371 = vmatpush1.bf16.msra.mxu0 %v3366
      %3372 = vmatprep.subr.bf16.mxu0 0
      %3373 = vmatpush1.bf16.msra.mxu0 0
      %3374 = vmatprep.subr.bf16.mxu0 0
      %3375 = vmatpush1.bf16.msra.mxu0 0
      %3376 = vmatprep.subr.bf16.mxu0 0
      %3377 = vmatpush1.bf16.msra.mxu0 0
      %3378 = vmatprep.subr.bf16.mxu0 0
      %3379 = vmatpush1.bf16.msra.mxu0 0
      %3380 = vmatprep.subr.bf16.mxu0 0
      %3381 = vmatpush1.bf16.msra.mxu0 0
      %3382 = vmatprep.subr.bf16.mxu0 0
      %3383 = vmatpush1.bf16.msra.mxu0 0
      %3384 = vmatprep.subr.bf16.mxu0 0
      %3385 = vmatpush1.bf16.msra.mxu0 0
      %3386 = vmatprep.subr.bf16.mxu0 0
      %3387 = vmatpush1.bf16.msra.mxu0 0
      %3388 = vmatprep.subr.bf16.mxu0 0
      %3389 = vmatpush1.bf16.msra.mxu0 0
      %3390 = vmatprep.subr.bf16.mxu0 0
      %3391 = vmatpush1.bf16.msra.mxu0 0
      %3392 = vmatprep.subr.bf16.mxu0 0
      %3393 = vmatpush1.bf16.msra.mxu0 0
      %3394 = vmatprep.subr.bf16.mxu0 0
      %3395 = vmatpush1.bf16.msra.mxu0 0
      %3396 = vmatprep.subr.bf16.mxu0 0
      %3397 = vmatpush1.bf16.msra.mxu0 0
      %3398 = vmatprep.subr.bf16.mxu0 0
      %3399 = vmatpush1.bf16.msra.mxu0 0
      %3400 = vmatprep.mubr.bf16.mxu0 0
      %3401 = vmatmul.mubr.bf16.gmra.mrb[0].mxu0 %v3342
      %v3402 = vpop.f32.mrb[0].mxu0
      %v3403 = vadd.f32 %v3328, %v3402
      %v3404 = vpop.f32.mrb[0].mxu0
      %v3405 = vpop.f32.mrb[0].mxu0
      %v3406 = vadd.f32 %v3328, %v3405
      %v3407 = vpop.f32.mrb[0].mxu0
      %3408 = vmatprep.mubr.bf16.mxu0 0
      %3409 = vmatmul.mubr.bf16.gmra.mrb[0].mxu0 %v3345
      %v3410 = vpop.f32.mrb[0].mxu0
      %v3411 = vadd.f32 %v3328, %v3410
      %v3412 = vpop.f32.mrb[0].mxu0
      %v3413 = vpop.f32.mrb[0].mxu0
      %v3414 = vadd.f32 %v3328, %v3413
      %v3415 = vpop.f32.mrb[0].mxu0
      %3416 = vmatprep.mubr.bf16.mxu0 0
      %3417 = vmatmul.mubr.bf16.gmra.mrb[0].mxu0 %v3348
      %v3418 = vpop.f32.mrb[0].mxu0
      %v3419 = vadd.f32 %v3328, %v3418
      %v3420 = vpop.f32.mrb[0].mxu0
      %v3421 = vpop.f32.mrb[0].mxu0
      %v3422 = vadd.f32 %v3328, %v3421
      %v3423 = vpop.f32.mrb[0].mxu0
      %3424 = vmatprep.mubr.bf16.mxu0 0
      %3425 = vmatmul.mubr.bf16.gmra.mrb[0].mxu0 %v3351
      %v3426 = vpop.f32.mrb[0].mxu0
      %v3427 = vadd.f32 %v3328, %v3426
      %v3428 = vpop.f32.mrb[0].mxu0
      %v3429 = vpop.f32.mrb[0].mxu0
      %v3430 = vadd.f32 %v3328, %v3429
      %v3431 = vpop.f32.mrb[0].mxu0
      %3432 = vmatprep.mubr.bf16.mxu0 0
      %3433 = vmatmul.mubr.bf16.gmra.mrb[0].mxu0 %v3354
      %v3434 = vpop.f32.mrb[0].mxu0
      %v3435 = vadd.f32 %v3328, %v3434
      %v3436 = vpop.f32.mrb[0].mxu0
      %v3437 = vpop.f32.mrb[0].mxu0
      %v3438 = vadd.f32 %v3328, %v3437
      %v3439 = vpop.f32.mrb[0].mxu0
      %3440 = vmatprep.mubr.bf16.mxu0 0
      %3441 = vmatmul.mubr.bf16.gmra.mrb[0].mxu0 %v3357
      %v3442 = vpop.f32.mrb[0].mxu0
      %v3443 = vadd.f32 %v3328, %v3442
      %v3444 = vpop.f32.mrb[0].mxu0
      %v3445 = vpop.f32.mrb[0].mxu0
      %v3446 = vadd.f32 %v3328, %v3445
      %v3447 = vpop.f32.mrb[0].mxu0
      %3448 = vmatprep.mubr.bf16.mxu0 0
      %3449 = vmatmul.mubr.bf16.gmra.mrb[0].mxu0 %v3360
      %v3450 = vpop.f32.mrb[0].mxu0
      %v3451 = vadd.f32 %v3328, %v3450
      %v3452 = vpop.f32.mrb[0].mxu0
      %v3453 = vpop.f32.mrb[0].mxu0
      %v3454 = vadd.f32 %v3328, %v3453
      %v3455 = vpop.f32.mrb[0].mxu0
      %3456 = vmatprep.mubr.bf16.mxu0 0
      %3457 = vmatmul.mubr.bf16.gmra.mrb[0].mxu0 %v3363
      %v3458 = vpop.f32.mrb[0].mxu0
      %v3459 = vadd.f32 %v3328, %v3458
      %v3460 = vpop.f32.mrb[0].mxu0
      %v3461 = vpop.f32.mrb[0].mxu0
      %v3462 = vadd.f32 %v3328, %v3461
      %v3463 = vpop.f32.mrb[0].mxu0
      %3464 = vdwg.mxu0
      %v3465 = vmax.f32 %v3403, 0.0
      %v3466 = vmax.f32 %v3406, 0.0
      %v3467 = vmax.f32 %v3411, 0.0
      %v3468 = vmax.f32 %v3414, 0.0
      %v3469 = vmax.f32 %v3419, 0.0
      %v3470 = vmax.f32 %v3422, 0.0
      %v3471 = vmax.f32 %v3427, 0.0
      %v3472 = vmax.f32 %v3430, 0.0
      %v3473 = vmax.f32 %v3435, 0.0
      %v3474 = vmax.f32 %v3438, 0.0
      %v3475 = vmax.f32 %v3443, 0.0
      %v3476 = vmax.f32 %v3446, 0.0
      %v3477 = vmax.f32 %v3451, 0.0
      %v3478 = vmax.f32 %v3454, 0.0
      %v3479 = vmax.f32 %v3459, 0.0
      %v3480 = vmax.f32 %v3462, 0.0
      %v3481 = vpack.c.bf16 %v3466, %v3465
      %v3482 = vpack.c.bf16 %v3468, %v3467
      %v3483 = vpack.c.bf16 %v3470, %v3469
      %v3484 = vpack.c.bf16 %v3472, %v3471
      %v3485 = vpack.c.bf16 %v3474, %v3473
      %v3486 = vpack.c.bf16 %v3476, %v3475
      %v3487 = vpack.c.bf16 %v3478, %v3477
      %v3488 = vpack.c.bf16 %v3480, %v3479
      %s3489 = scalar_lea.vmem %s11, 16
      %v3490 = vld [vmem:[%s3489] sm:$0xf]
      %v3491 = vld [vmem:[%s3489 + $0x4] sm:$0xf]
      %v3492 = vld [vmem:[%s3489 + $0x8] sm:$0xf]
      %v3493 = vld [vmem:[%s3489 + $0xc] sm:$0xf]
      %s3494 = scalar_lea.vmem %s12, 1
      %v3495 = vld [vmem:[%s3494] sm:$0x1]
      %v3497 = vlaneseq
      %v3498 = vshrl.u32 %v3497, 7
      %v3499 = vsub.s32 0, %v3498
      %v3500 = vrot.slane %v3495, %v3499
      %v3506 = vunpack.c.l.b16 %v3490
      %v3507 = vunpack.c.l.b16 %v3491
      %v3508 = vunpack.c.l.b16 %v3492
      %v3509 = vunpack.c.l.b16 %v3493
      %v3510 = vpack.c.b16 %v3507, %v3506
      %v3511 = vpack.c.b16 %v3509, %v3508
      %v3515 = vsel %vm1883, %v3481, 0
      %v3518 = vsel %vm1883, %v3482, 0
      %v3521 = vsel %vm1883, %v3483, 0
      %v3524 = vsel %vm1883, %v3484, 0
      %v3527 = vsel %vm1883, %v3485, 0
      %v3530 = vsel %vm1883, %v3486, 0
      %v3533 = vsel %vm1883, %v3487, 0
      %v3536 = vsel %vm1883, %v3488, 0
      %3538 = vmatprep.subr.bf16.mxu0 0
      %3539 = vmatpush1.bf16.msra.mxu0 %v3510
      %3540 = vmatprep.subr.bf16.mxu0 0
      %3541 = vmatpush1.bf16.msra.mxu0 %v3511
      %3542 = vmatprep.subr.bf16.mxu0 0
      %3543 = vmatpush1.bf16.msra.mxu0 0
      %3544 = vmatprep.subr.bf16.mxu0 0
      %3545 = vmatpush1.bf16.msra.mxu0 0
      %3546 = vmatprep.subr.bf16.mxu0 0
      %3547 = vmatpush1.bf16.msra.mxu0 0
      %3548 = vmatprep.subr.bf16.mxu0 0
      %3549 = vmatpush1.bf16.msra.mxu0 0
      %3550 = vmatprep.subr.bf16.mxu0 0
      %3551 = vmatpush1.bf16.msra.mxu0 0
      %3552 = vmatprep.subr.bf16.mxu0 0
      %3553 = vmatpush1.bf16.msra.mxu0 0
      %3554 = vmatprep.subr.bf16.mxu0 0
      %3555 = vmatpush1.bf16.msra.mxu0 0
      %3556 = vmatprep.subr.bf16.mxu0 0
      %3557 = vmatpush1.bf16.msra.mxu0 0
      %3558 = vmatprep.subr.bf16.mxu0 0
      %3559 = vmatpush1.bf16.msra.mxu0 0
      %3560 = vmatprep.subr.bf16.mxu0 0
      %3561 = vmatpush1.bf16.msra.mxu0 0
      %3562 = vmatprep.subr.bf16.mxu0 0
      %3563 = vmatpush1.bf16.msra.mxu0 0
      %3564 = vmatprep.subr.bf16.mxu0 0
      %3565 = vmatpush1.bf16.msra.mxu0 0
      %3566 = vmatprep.subr.bf16.mxu0 0
      %3567 = vmatpush1.bf16.msra.mxu0 0
      %3568 = vmatprep.subr.bf16.mxu0 0
      %3569 = vmatpush1.bf16.msra.mxu0 0
      %3570 = vmatprep.mubr.bf16.mxu0 0
      %3571 = vmatmul.mubr.bf16.gmra.mrb[0].mxu0 %v3515
      %v3572 = vpop.f32.mrb[0].mxu0
      %v3573 = vadd.f32 %v3500, %v3572
      %v3574 = vpop.f32.mrb[0].mxu0
      %v3575 = vpop.f32.mrb[0].mxu0
      %v3576 = vadd.f32 %v3500, %v3575
      %v3577 = vpop.f32.mrb[0].mxu0
      %3578 = vmatprep.mubr.bf16.mxu0 0
      %3579 = vmatmul.mubr.bf16.gmra.mrb[0].mxu0 %v3518
      %v3580 = vpop.f32.mrb[0].mxu0
      %v3581 = vadd.f32 %v3500, %v3580
      %v3582 = vpop.f32.mrb[0].mxu0
      %v3583 = vpop.f32.mrb[0].mxu0
      %v3584 = vadd.f32 %v3500, %v3583
      %v3585 = vpop.f32.mrb[0].mxu0
      %3586 = vmatprep.mubr.bf16.mxu0 0
      %3587 = vmatmul.mubr.bf16.gmra.mrb[0].mxu0 %v3521
      %v3588 = vpop.f32.mrb[0].mxu0
      %v3589 = vadd.f32 %v3500, %v3588
      %v3590 = vpop.f32.mrb[0].mxu0
      %v3591 = vpop.f32.mrb[0].mxu0
      %v3592 = vadd.f32 %v3500, %v3591
      %v3593 = vpop.f32.mrb[0].mxu0
      %3594 = vmatprep.mubr.bf16.mxu0 0
      %3595 = vmatmul.mubr.bf16.gmra.mrb[0].mxu0 %v3524
      %v3596 = vpop.f32.mrb[0].mxu0
      %v3597 = vadd.f32 %v3500, %v3596
      %v3598 = vpop.f32.mrb[0].mxu0
      %v3599 = vpop.f32.mrb[0].mxu0
      %v3600 = vadd.f32 %v3500, %v3599
      %v3601 = vpop.f32.mrb[0].mxu0
      %3602 = vmatprep.mubr.bf16.mxu0 0
      %3603 = vmatmul.mubr.bf16.gmra.mrb[0].mxu0 %v3527
      %v3604 = vpop.f32.mrb[0].mxu0
      %v3605 = vadd.f32 %v3500, %v3604
      %v3606 = vpop.f32.mrb[0].mxu0
      %v3607 = vpop.f32.mrb[0].mxu0
      %v3608 = vadd.f32 %v3500, %v3607
      %v3609 = vpop.f32.mrb[0].mxu0
      %3610 = vmatprep.mubr.bf16.mxu0 0
      %3611 = vmatmul.mubr.bf16.gmra.mrb[0].mxu0 %v3530
      %v3612 = vpop.f32.mrb[0].mxu0
      %v3613 = vadd.f32 %v3500, %v3612
      %v3614 = vpop.f32.mrb[0].mxu0
      %v3615 = vpop.f32.mrb[0].mxu0
      %v3616 = vadd.f32 %v3500, %v3615
      %v3617 = vpop.f32.mrb[0].mxu0
      %3618 = vmatprep.mubr.bf16.mxu0 0
      %3619 = vmatmul.mubr.bf16.gmra.mrb[0].mxu0 %v3533
      %v3620 = vpop.f32.mrb[0].mxu0
      %v3621 = vadd.f32 %v3500, %v3620
      %v3622 = vpop.f32.mrb[0].mxu0
      %v3623 = vpop.f32.mrb[0].mxu0
      %v3624 = vadd.f32 %v3500, %v3623
      %v3625 = vpop.f32.mrb[0].mxu0
      %3626 = vmatprep.mubr.bf16.mxu0 0
      %3627 = vmatmul.mubr.bf16.gmra.mrb[0].mxu0 %v3536
      %v3628 = vpop.f32.mrb[0].mxu0
      %v3629 = vadd.f32 %v3500, %v3628
      %v3630 = vpop.f32.mrb[0].mxu0
      %v3631 = vpop.f32.mrb[0].mxu0
      %v3632 = vadd.f32 %v3500, %v3631
      %v3633 = vpop.f32.mrb[0].mxu0
      %3634 = vdwg.mxu0
      %v3635 = vadd.f32 %v3293, %v3573
      %v3636 = vadd.f32 %v3294, %v3576
      %v3637 = vadd.f32 %v3295, %v3581
      %v3638 = vadd.f32 %v3296, %v3584
      %v3639 = vadd.f32 %v3297, %v3589
      %v3640 = vadd.f32 %v3298, %v3592
      %v3641 = vadd.f32 %v3299, %v3597
      %v3642 = vadd.f32 %v3300, %v3600
      %v3643 = vadd.f32 %v3301, %v3605
      %v3644 = vadd.f32 %v3302, %v3608
      %v3645 = vadd.f32 %v3303, %v3613
      %v3646 = vadd.f32 %v3304, %v3616
      %v3647 = vadd.f32 %v3305, %v3621
      %v3648 = vadd.f32 %v3306, %v3624
      %v3649 = vadd.f32 %v3307, %v3629
      %v3650 = vadd.f32 %v3308, %v3632
      %s3651 = scalar_lea.vmem %s13, 1
      %v3652 = vld [vmem:[%s3651] sm:$0x1]
      %s3653 = scalar_lea.vmem %s14, 1
      %v3654 = vld [vmem:[%s3653] sm:$0x1]
      %v3655 = vsel %vm681, %v3635, 0.0
      %3656 = vadd.xlane.f32.xlu0 %v3655
      %v3657 = vpop.xlane.xlu0 %3656
      %v3658 = vsel %vm681, %v3636, 0.0
      %3659 = vadd.xlane.f32.xlu0 %v3658
      %v3660 = vpop.xlane.xlu0 %3659
      %v3661 = vsel %vm681, %v3637, 0.0
      %3662 = vadd.xlane.f32.xlu0 %v3661
      %v3663 = vpop.xlane.xlu0 %3662
      %v3664 = vsel %vm681, %v3638, 0.0
      %3665 = vadd.xlane.f32.xlu0 %v3664
      %v3666 = vpop.xlane.xlu0 %3665
      %v3667 = vsel %vm681, %v3639, 0.0
      %3668 = vadd.xlane.f32.xlu0 %v3667
      %v3669 = vpop.xlane.xlu0 %3668
      %v3670 = vsel %vm681, %v3640, 0.0
      %3671 = vadd.xlane.f32.xlu0 %v3670
      %v3672 = vpop.xlane.xlu0 %3671
      %v3673 = vsel %vm681, %v3641, 0.0
      %3674 = vadd.xlane.f32.xlu0 %v3673
      %v3675 = vpop.xlane.xlu0 %3674
      %v3676 = vsel %vm681, %v3642, 0.0
      %3677 = vadd.xlane.f32.xlu0 %v3676
      %v3678 = vpop.xlane.xlu0 %3677
      %v3679 = vsel %vm681, %v3643, 0.0
      %3680 = vadd.xlane.f32.xlu0 %v3679
      %v3681 = vpop.xlane.xlu0 %3680
      %v3682 = vsel %vm681, %v3644, 0.0
      %3683 = vadd.xlane.f32.xlu0 %v3682
      %v3684 = vpop.xlane.xlu0 %3683
      %v3685 = vsel %vm681, %v3645, 0.0
      %3686 = vadd.xlane.f32.xlu0 %v3685
      %v3687 = vpop.xlane.xlu0 %3686
      %v3688 = vsel %vm681, %v3646, 0.0
      %3689 = vadd.xlane.f32.xlu0 %v3688
      %v3690 = vpop.xlane.xlu0 %3689
      %v3691 = vsel %vm681, %v3647, 0.0
      %3692 = vadd.xlane.f32.xlu0 %v3691
      %v3693 = vpop.xlane.xlu0 %3692
      %v3694 = vsel %vm681, %v3648, 0.0
      %3695 = vadd.xlane.f32.xlu0 %v3694
      %v3696 = vpop.xlane.xlu0 %3695
      %v3697 = vsel %vm681, %v3649, 0.0
      %3698 = vadd.xlane.f32.xlu0 %v3697
      %v3699 = vpop.xlane.xlu0 %3698
      %v3700 = vsel %vm681, %v3650, 0.0
      %3701 = vadd.xlane.f32.xlu0 %v3700
      %v3702 = vpop.xlane.xlu0 %3701
      %v3703 = vmul.f32 %v3657, %v1477
      %v3704 = vmul.f32 %v3660, %v1477
      %v3705 = vmul.f32 %v3663, %v1477
      %v3706 = vmul.f32 %v3666, %v1477
      %v3707 = vmul.f32 %v3669, %v1477
      %v3708 = vmul.f32 %v3672, %v1477
      %v3709 = vmul.f32 %v3675, %v1477
      %v3710 = vmul.f32 %v3678, %v1477
      %v3711 = vmul.f32 %v3681, %v1477
      %v3712 = vmul.f32 %v3684, %v1477
      %v3713 = vmul.f32 %v3687, %v1477
      %v3714 = vmul.f32 %v3690, %v1477
      %v3715 = vmul.f32 %v3693, %v1477
      %v3716 = vmul.f32 %v3696, %v1477
      %v3717 = vmul.f32 %v3699, %v1477
      %v3718 = vmul.f32 %v3702, %v1477
      %v3719 = vsub.f32 %v3635, %v3703
      %v3720 = vsub.f32 %v3636, %v3704
      %v3721 = vsub.f32 %v3637, %v3705
      %v3722 = vsub.f32 %v3638, %v3706
      %v3723 = vsub.f32 %v3639, %v3707
      %v3724 = vsub.f32 %v3640, %v3708
      %v3725 = vsub.f32 %v3641, %v3709
      %v3726 = vsub.f32 %v3642, %v3710
      %v3727 = vsub.f32 %v3643, %v3711
      %v3728 = vsub.f32 %v3644, %v3712
      %v3729 = vsub.f32 %v3645, %v3713
      %v3730 = vsub.f32 %v3646, %v3714
      %v3731 = vsub.f32 %v3647, %v3715
      %v3732 = vsub.f32 %v3648, %v3716
      %v3733 = vsub.f32 %v3649, %v3717
      %v3734 = vsub.f32 %v3650, %v3718
      %v3735 = vmul.f32 %v3719, %v3719
      %v3736 = vmul.f32 %v3720, %v3720
      %v3737 = vmul.f32 %v3721, %v3721
      %v3738 = vmul.f32 %v3722, %v3722
      %v3739 = vmul.f32 %v3723, %v3723
      %v3740 = vmul.f32 %v3724, %v3724
      %v3741 = vmul.f32 %v3725, %v3725
      %v3742 = vmul.f32 %v3726, %v3726
      %v3743 = vmul.f32 %v3727, %v3727
      %v3744 = vmul.f32 %v3728, %v3728
      %v3745 = vmul.f32 %v3729, %v3729
      %v3746 = vmul.f32 %v3730, %v3730
      %v3747 = vmul.f32 %v3731, %v3731
      %v3748 = vmul.f32 %v3732, %v3732
      %v3749 = vmul.f32 %v3733, %v3733
      %v3750 = vmul.f32 %v3734, %v3734
      %v3751 = vsel %vm681, %v3735, 0.0
      %3752 = vadd.xlane.f32.xlu0 %v3751
      %v3753 = vpop.xlane.xlu0 %3752
      %v3754 = vsel %vm681, %v3736, 0.0
      %3755 = vadd.xlane.f32.xlu0 %v3754
      %v3756 = vpop.xlane.xlu0 %3755
      %v3757 = vsel %vm681, %v3737, 0.0
      %3758 = vadd.xlane.f32.xlu0 %v3757
      %v3759 = vpop.xlane.xlu0 %3758
      %v3760 = vsel %vm681, %v3738, 0.0
      %3761 = vadd.xlane.f32.xlu0 %v3760
      %v3762 = vpop.xlane.xlu0 %3761
      %v3763 = vsel %vm681, %v3739, 0.0
      %3764 = vadd.xlane.f32.xlu0 %v3763
      %v3765 = vpop.xlane.xlu0 %3764
      %v3766 = vsel %vm681, %v3740, 0.0
      %3767 = vadd.xlane.f32.xlu0 %v3766
      %v3768 = vpop.xlane.xlu0 %3767
      %v3769 = vsel %vm681, %v3741, 0.0
      %3770 = vadd.xlane.f32.xlu0 %v3769
      %v3771 = vpop.xlane.xlu0 %3770
      %v3772 = vsel %vm681, %v3742, 0.0
      %3773 = vadd.xlane.f32.xlu0 %v3772
      %v3774 = vpop.xlane.xlu0 %3773
      %v3775 = vsel %vm681, %v3743, 0.0
      %3776 = vadd.xlane.f32.xlu0 %v3775
      %v3777 = vpop.xlane.xlu0 %3776
      %v3778 = vsel %vm681, %v3744, 0.0
      %3779 = vadd.xlane.f32.xlu0 %v3778
      %v3780 = vpop.xlane.xlu0 %3779
      %v3781 = vsel %vm681, %v3745, 0.0
      %3782 = vadd.xlane.f32.xlu0 %v3781
      %v3783 = vpop.xlane.xlu0 %3782
      %v3784 = vsel %vm681, %v3746, 0.0
      %3785 = vadd.xlane.f32.xlu0 %v3784
      %v3786 = vpop.xlane.xlu0 %3785
      %v3787 = vsel %vm681, %v3747, 0.0
      %3788 = vadd.xlane.f32.xlu0 %v3787
      %v3789 = vpop.xlane.xlu0 %3788
      %v3790 = vsel %vm681, %v3748, 0.0
      %3791 = vadd.xlane.f32.xlu0 %v3790
      %v3792 = vpop.xlane.xlu0 %3791
      %v3793 = vsel %vm681, %v3749, 0.0
      %3794 = vadd.xlane.f32.xlu0 %v3793
      %v3795 = vpop.xlane.xlu0 %3794
      %v3796 = vsel %vm681, %v3750, 0.0
      %3797 = vadd.xlane.f32.xlu0 %v3796
      %v3798 = vpop.xlane.xlu0 %3797
      %v3799 = vmul.f32 %v3753, %v1477
      %v3800 = vmul.f32 %v3756, %v1477
      %v3801 = vmul.f32 %v3759, %v1477
      %v3802 = vmul.f32 %v3762, %v1477
      %v3803 = vmul.f32 %v3765, %v1477
      %v3804 = vmul.f32 %v3768, %v1477
      %v3805 = vmul.f32 %v3771, %v1477
      %v3806 = vmul.f32 %v3774, %v1477
      %v3807 = vmul.f32 %v3777, %v1477
      %v3808 = vmul.f32 %v3780, %v1477
      %v3809 = vmul.f32 %v3783, %v1477
      %v3810 = vmul.f32 %v3786, %v1477
      %v3811 = vmul.f32 %v3789, %v1477
      %v3812 = vmul.f32 %v3792, %v1477
      %v3813 = vmul.f32 %v3795, %v1477
      %v3814 = vmul.f32 %v3798, %v1477
      %v3815 = vadd.f32 %v3799, 1e-05
      %v3816 = vadd.f32 %v3800, 1e-05
      %v3817 = vadd.f32 %v3801, 1e-05
      %v3818 = vadd.f32 %v3802, 1e-05
      %v3819 = vadd.f32 %v3803, 1e-05
      %v3820 = vadd.f32 %v3804, 1e-05
      %v3821 = vadd.f32 %v3805, 1e-05
      %v3822 = vadd.f32 %v3806, 1e-05
      %v3823 = vadd.f32 %v3807, 1e-05
      %v3824 = vadd.f32 %v3808, 1e-05
      %v3825 = vadd.f32 %v3809, 1e-05
      %v3826 = vadd.f32 %v3810, 1e-05
      %v3827 = vadd.f32 %v3811, 1e-05
      %v3828 = vadd.f32 %v3812, 1e-05
      %v3829 = vadd.f32 %v3813, 1e-05
      %v3830 = vadd.f32 %v3814, 1e-05
      %v3831 = vrsqrt.pop %v3815
      %v3832 = vrsqrt.pop %v3816
      %v3833 = vrsqrt.pop %v3817
      %v3834 = vrsqrt.pop %v3818
      %v3835 = vrsqrt.pop %v3819
      %v3836 = vrsqrt.pop %v3820
      %v3837 = vrsqrt.pop %v3821
      %v3838 = vrsqrt.pop %v3822
      %v3839 = vrsqrt.pop %v3823
      %v3840 = vrsqrt.pop %v3824
      %v3841 = vrsqrt.pop %v3825
      %v3842 = vrsqrt.pop %v3826
      %v3843 = vrsqrt.pop %v3827
      %v3844 = vrsqrt.pop %v3828
      %v3845 = vrsqrt.pop %v3829
      %v3846 = vrsqrt.pop %v3830
      %v3847 = vmul.f32 %v3719, %v3831
      %v3848 = vmul.f32 %v3720, %v3832
      %v3849 = vmul.f32 %v3721, %v3833
      %v3850 = vmul.f32 %v3722, %v3834
      %v3851 = vmul.f32 %v3723, %v3835
      %v3852 = vmul.f32 %v3724, %v3836
      %v3853 = vmul.f32 %v3725, %v3837
      %v3854 = vmul.f32 %v3726, %v3838
      %v3855 = vmul.f32 %v3727, %v3839
      %v3856 = vmul.f32 %v3728, %v3840
      %v3857 = vmul.f32 %v3729, %v3841
      %v3858 = vmul.f32 %v3730, %v3842
      %v3859 = vmul.f32 %v3731, %v3843
      %v3860 = vmul.f32 %v3732, %v3844
      %v3861 = vmul.f32 %v3733, %v3845
      %v3862 = vmul.f32 %v3734, %v3846
      %v3864 = vlaneseq
      %v3865 = vshrl.u32 %v3864, 7
      %v3866 = vsub.s32 0, %v3865
      %v3867 = vrot.slane %v3652, %v3866
      %v3869 = vmul.f32 %v3847, %v3867
      %v3870 = vmul.f32 %v3848, %v3867
      %v3871 = vmul.f32 %v3849, %v3867
      %v3872 = vmul.f32 %v3850, %v3867
      %v3873 = vmul.f32 %v3851, %v3867
      %v3874 = vmul.f32 %v3852, %v3867
      %v3875 = vmul.f32 %v3853, %v3867
      %v3876 = vmul.f32 %v3854, %v3867
      %v3877 = vmul.f32 %v3855, %v3867
      %v3878 = vmul.f32 %v3856, %v3867
      %v3879 = vmul.f32 %v3857, %v3867
      %v3880 = vmul.f32 %v3858, %v3867
      %v3881 = vmul.f32 %v3859, %v3867
      %v3882 = vmul.f32 %v3860, %v3867
      %v3883 = vmul.f32 %v3861, %v3867
      %v3884 = vmul.f32 %v3862, %v3867
      %v3886 = vlaneseq
      %v3887 = vshrl.u32 %v3886, 7
      %v3888 = vsub.s32 0, %v3887
      %v3889 = vrot.slane %v3654, %v3888
      %v3891 = vadd.f32 %v3869, %v3889
      %v3892 = vadd.f32 %v3870, %v3889
      %v3893 = vadd.f32 %v3871, %v3889
      %v3894 = vadd.f32 %v3872, %v3889
      %v3895 = vadd.f32 %v3873, %v3889
      %v3896 = vadd.f32 %v3874, %v3889
      %v3897 = vadd.f32 %v3875, %v3889
      %v3898 = vadd.f32 %v3876, %v3889
      %v3899 = vadd.f32 %v3877, %v3889
      %v3900 = vadd.f32 %v3878, %v3889
      %v3901 = vadd.f32 %v3879, %v3889
      %v3902 = vadd.f32 %v3880, %v3889
      %v3903 = vadd.f32 %v3881, %v3889
      %v3904 = vadd.f32 %v3882, %v3889
      %v3905 = vadd.f32 %v3883, %v3889
      %v3906 = vadd.f32 %v3884, %v3889
      %v3907 = vpack.c.bf16 %v3892, %v3891
      %v3908 = vpack.c.bf16 %v3894, %v3893
      %v3909 = vpack.c.bf16 %v3896, %v3895
      %v3910 = vpack.c.bf16 %v3898, %v3897
      %v3911 = vpack.c.bf16 %v3900, %v3899
      %v3912 = vpack.c.bf16 %v3902, %v3901
      %v3913 = vpack.c.bf16 %v3904, %v3903
      %v3914 = vpack.c.bf16 %v3906, %v3905
      %v3915 = vld [vmem:[%s15] sm:$0xf]
      %v3916 = vld [vmem:[%s15 + $0x4] sm:$0xf]
      %v3917 = vld [vmem:[%s15 + $0x8] sm:$0xf]
      %v3918 = vld [vmem:[%s15 + $0xc] sm:$0x3]
      %v3919 = vld [vmem:[%s16] sm:$0x1]
      %v3921 = vlaneseq
      %v3922 = vshrl.u32 %v3921, 7
      %v3923 = vsub.s32 0, %v3922
      %v3924 = vrot.slane %v3919, %v3923
      %v3930 = vunpack.c.l.b16 %v3915
      %v3931 = vunpack.c.l.b16 %v3916
      %v3932 = vunpack.c.l.b16 %v3917
      %v3933 = vunpack.c.l.b16 %v3918
      %v3934 = vpack.c.b16 %v3931, %v3930
      %v3935 = vpack.c.b16 %v3933, %v3932
      %v3938 = vsel %vm681, %v3907, 0
      %v3941 = vsel %vm681, %v3908, 0
      %v3944 = vsel %vm681, %v3909, 0
      %v3947 = vsel %vm681, %v3910, 0
      %v3950 = vsel %vm681, %v3911, 0
      %v3953 = vsel %vm681, %v3912, 0
      %v3956 = vsel %vm681, %v3913, 0
      %v3959 = vsel %vm681, %v3914, 0
      %v3962 = vsel %vm706, %v3935, 0
      %3964 = vmatprep.subr.bf16.mxu0 0
      %3965 = vmatpush1.bf16.msra.mxu0 %v3934
      %3966 = vmatprep.subr.bf16.mxu0 0
      %3967 = vmatpush1.bf16.msra.mxu0 %v3962
      %3968 = vmatprep.subr.bf16.mxu0 0
      %3969 = vmatpush1.bf16.msra.mxu0 0
      %3970 = vmatprep.subr.bf16.mxu0 0
      %3971 = vmatpush1.bf16.msra.mxu0 0
      %3972 = vmatprep.subr.bf16.mxu0 0
      %3973 = vmatpush1.bf16.msra.mxu0 0
      %3974 = vmatprep.subr.bf16.mxu0 0
      %3975 = vmatpush1.bf16.msra.mxu0 0
      %3976 = vmatprep.subr.bf16.mxu0 0
      %3977 = vmatpush1.bf16.msra.mxu0 0
      %3978 = vmatprep.subr.bf16.mxu0 0
      %3979 = vmatpush1.bf16.msra.mxu0 0
      %3980 = vmatprep.subr.bf16.mxu0 0
      %3981 = vmatpush1.bf16.msra.mxu0 0
      %3982 = vmatprep.subr.bf16.mxu0 0
      %3983 = vmatpush1.bf16.msra.mxu0 0
      %3984 = vmatprep.subr.bf16.mxu0 0
      %3985 = vmatpush1.bf16.msra.mxu0 0
      %3986 = vmatprep.subr.bf16.mxu0 0
      %3987 = vmatpush1.bf16.msra.mxu0 0
      %3988 = vmatprep.subr.bf16.mxu0 0
      %3989 = vmatpush1.bf16.msra.mxu0 0
      %3990 = vmatprep.subr.bf16.mxu0 0
      %3991 = vmatpush1.bf16.msra.mxu0 0
      %3992 = vmatprep.subr.bf16.mxu0 0
      %3993 = vmatpush1.bf16.msra.mxu0 0
      %3994 = vmatprep.subr.bf16.mxu0 0
      %3995 = vmatpush1.bf16.msra.mxu0 0
      %3996 = vmatprep.mubr.bf16.mxu0 0
      %3997 = vmatmul.mubr.bf16.gmra.mrb[0].mxu0 %v3938
      %v3998 = vpop.f32.mrb[0].mxu0
      %v3999 = vadd.f32 %v3924, %v3998
      %v4000 = vpop.f32.mrb[0].mxu0
      %v4001 = vpop.f32.mrb[0].mxu0
      %v4002 = vadd.f32 %v3924, %v4001
      %v4003 = vpop.f32.mrb[0].mxu0
      %4004 = vmatprep.mubr.bf16.mxu0 0
      %4005 = vmatmul.mubr.bf16.gmra.mrb[0].mxu0 %v3941
      %v4006 = vpop.f32.mrb[0].mxu0
      %v4007 = vadd.f32 %v3924, %v4006
      %v4008 = vpop.f32.mrb[0].mxu0
      %v4009 = vpop.f32.mrb[0].mxu0
      %v4010 = vadd.f32 %v3924, %v4009
      %v4011 = vpop.f32.mrb[0].mxu0
      %4012 = vmatprep.mubr.bf16.mxu0 0
      %4013 = vmatmul.mubr.bf16.gmra.mrb[0].mxu0 %v3944
      %v4014 = vpop.f32.mrb[0].mxu0
      %v4015 = vadd.f32 %v3924, %v4014
      %v4016 = vpop.f32.mrb[0].mxu0
      %v4017 = vpop.f32.mrb[0].mxu0
      %v4018 = vadd.f32 %v3924, %v4017
      %v4019 = vpop.f32.mrb[0].mxu0
      %4020 = vmatprep.mubr.bf16.mxu0 0
      %4021 = vmatmul.mubr.bf16.gmra.mrb[0].mxu0 %v3947
      %v4022 = vpop.f32.mrb[0].mxu0
      %v4023 = vadd.f32 %v3924, %v4022
      %v4024 = vpop.f32.mrb[0].mxu0
      %v4025 = vpop.f32.mrb[0].mxu0
      %v4026 = vadd.f32 %v3924, %v4025
      %v4027 = vpop.f32.mrb[0].mxu0
      %4028 = vmatprep.mubr.bf16.mxu0 0
      %4029 = vmatmul.mubr.bf16.gmra.mrb[0].mxu0 %v3950
      %v4030 = vpop.f32.mrb[0].mxu0
      %v4031 = vadd.f32 %v3924, %v4030
      %v4032 = vpop.f32.mrb[0].mxu0
      %v4033 = vpop.f32.mrb[0].mxu0
      %v4034 = vadd.f32 %v3924, %v4033
      %v4035 = vpop.f32.mrb[0].mxu0
      %4036 = vmatprep.mubr.bf16.mxu0 0
      %4037 = vmatmul.mubr.bf16.gmra.mrb[0].mxu0 %v3953
      %v4038 = vpop.f32.mrb[0].mxu0
      %v4039 = vadd.f32 %v3924, %v4038
      %v4040 = vpop.f32.mrb[0].mxu0
      %v4041 = vpop.f32.mrb[0].mxu0
      %v4042 = vadd.f32 %v3924, %v4041
      %v4043 = vpop.f32.mrb[0].mxu0
      %4044 = vmatprep.mubr.bf16.mxu0 0
      %4045 = vmatmul.mubr.bf16.gmra.mrb[0].mxu0 %v3956
      %v4046 = vpop.f32.mrb[0].mxu0
      %v4047 = vadd.f32 %v3924, %v4046
      %v4048 = vpop.f32.mrb[0].mxu0
      %v4049 = vpop.f32.mrb[0].mxu0
      %v4050 = vadd.f32 %v3924, %v4049
      %v4051 = vpop.f32.mrb[0].mxu0
      %4052 = vmatprep.mubr.bf16.mxu0 0
      %4053 = vmatmul.mubr.bf16.gmra.mrb[0].mxu0 %v3959
      %v4054 = vpop.f32.mrb[0].mxu0
      %v4055 = vadd.f32 %v3924, %v4054
      %v4056 = vpop.f32.mrb[0].mxu0
      %v4057 = vpop.f32.mrb[0].mxu0
      %v4058 = vadd.f32 %v3924, %v4057
      %v4059 = vpop.f32.mrb[0].mxu0
      %4060 = vdwg.mxu0
      %vm4061 = vcmp.gt.f32.partialorder %v3999, 0.0
      %vm4062 = vcmp.gt.f32.partialorder %v4002, 0.0
      %vm4063 = vcmp.gt.f32.partialorder %v4007, 0.0
      %vm4064 = vcmp.gt.f32.partialorder %v4010, 0.0
      %vm4065 = vcmp.gt.f32.partialorder %v4015, 0.0
      %vm4066 = vcmp.gt.f32.partialorder %v4018, 0.0
      %vm4067 = vcmp.gt.f32.partialorder %v4023, 0.0
      %vm4068 = vcmp.gt.f32.partialorder %v4026, 0.0
      %vm4069 = vcmp.gt.f32.partialorder %v4031, 0.0
      %vm4070 = vcmp.gt.f32.partialorder %v4034, 0.0
      %vm4071 = vcmp.gt.f32.partialorder %v4039, 0.0
      %vm4072 = vcmp.gt.f32.partialorder %v4042, 0.0
      %vm4073 = vcmp.gt.f32.partialorder %v4047, 0.0
      %vm4074 = vcmp.gt.f32.partialorder %v4050, 0.0
      %vm4075 = vcmp.gt.f32.partialorder %v4055, 0.0
      %vm4076 = vcmp.gt.f32.partialorder %v4058, 0.0
      %v4077 = vmul.f32 %v3999, 1.442695
      %v4078 = vpow.pop %v4077
      %v4079 = vmul.f32 %v4002, 1.442695
      %v4080 = vpow.pop %v4079
      %v4081 = vmul.f32 %v4007, 1.442695
      %v4082 = vpow.pop %v4081
      %v4083 = vmul.f32 %v4010, 1.442695
      %v4084 = vpow.pop %v4083
      %v4085 = vmul.f32 %v4015, 1.442695
      %v4086 = vpow.pop %v4085
      %v4087 = vmul.f32 %v4018, 1.442695
      %v4088 = vpow.pop %v4087
      %v4089 = vmul.f32 %v4023, 1.442695
      %v4090 = vpow.pop %v4089
      %v4091 = vmul.f32 %v4026, 1.442695
      %v4092 = vpow.pop %v4091
      %v4093 = vmul.f32 %v4031, 1.442695
      %v4094 = vpow.pop %v4093
      %v4095 = vmul.f32 %v4034, 1.442695
      %v4096 = vpow.pop %v4095
      %v4097 = vmul.f32 %v4039, 1.442695
      %v4098 = vpow.pop %v4097
      %v4099 = vmul.f32 %v4042, 1.442695
      %v4100 = vpow.pop %v4099
      %v4101 = vmul.f32 %v4047, 1.442695
      %v4102 = vpow.pop %v4101
      %v4103 = vmul.f32 %v4050, 1.442695
      %v4104 = vpow.pop %v4103
      %v4105 = vmul.f32 %v4055, 1.442695
      %v4106 = vpow.pop %v4105
      %v4107 = vmul.f32 %v4058, 1.442695
      %v4108 = vpow.pop %v4107
      %v4109 = vsub.f32 %v4078, 1.0
      %v4110 = vsub.f32 %v4080, 1.0
      %v4111 = vsub.f32 %v4082, 1.0
      %v4112 = vsub.f32 %v4084, 1.0
      %v4113 = vsub.f32 %v4086, 1.0
      %v4114 = vsub.f32 %v4088, 1.0
      %v4115 = vsub.f32 %v4090, 1.0
      %v4116 = vsub.f32 %v4092, 1.0
      %v4117 = vsub.f32 %v4094, 1.0
      %v4118 = vsub.f32 %v4096, 1.0
      %v4119 = vsub.f32 %v4098, 1.0
      %v4120 = vsub.f32 %v4100, 1.0
      %v4121 = vsub.f32 %v4102, 1.0
      %v4122 = vsub.f32 %v4104, 1.0
      %v4123 = vsub.f32 %v4106, 1.0
      %v4124 = vsub.f32 %v4108, 1.0
      %v4125 = vsel %vm4061, %v3999, %v4109
      %v4126 = vsel %vm4062, %v4002, %v4110
      %v4127 = vsel %vm4063, %v4007, %v4111
      %v4128 = vsel %vm4064, %v4010, %v4112
      %v4129 = vsel %vm4065, %v4015, %v4113
      %v4130 = vsel %vm4066, %v4018, %v4114
      %v4131 = vsel %vm4067, %v4023, %v4115
      %v4132 = vsel %vm4068, %v4026, %v4116
      %v4133 = vsel %vm4069, %v4031, %v4117
      %v4134 = vsel %vm4070, %v4034, %v4118
      %v4135 = vsel %vm4071, %v4039, %v4119
      %v4136 = vsel %vm4072, %v4042, %v4120
      %v4137 = vsel %vm4073, %v4047, %v4121
      %v4138 = vsel %vm4074, %v4050, %v4122
      %v4139 = vsel %vm4075, %v4055, %v4123
      %v4140 = vsel %vm4076, %v4058, %v4124
      %v4141 = vld [vmem:[%s17] sm:$0x3]
      %v4142 = vpack.c.bf16 %v4126, %v4125
      %v4143 = vpack.c.bf16 %v4128, %v4127
      %v4144 = vpack.c.bf16 %v4130, %v4129
      %v4145 = vpack.c.bf16 %v4132, %v4131
      %v4146 = vpack.c.bf16 %v4134, %v4133
      %v4147 = vpack.c.bf16 %v4136, %v4135
      %v4148 = vpack.c.bf16 %v4138, %v4137
      %v4149 = vpack.c.bf16 %v4140, %v4139
      %v4150 = vld [vmem:[%s18] sm:$0xf]
      %4152 = vset.pattern.permute.xlu0 0
      %4153 = vperm.xlu0 %4152, %v4150
      %v4154 = vpop.permute.xlu0 %4153
      %vm4156 = vcmask 113664
      %v4158 = vsel %vm4156, %v4141, 0
      %v4161 = vsel %vm4156, %v4142, 0
      %v4164 = vsel %vm4156, %v4143, 0
      %v4167 = vsel %vm4156, %v4144, 0
      %v4170 = vsel %vm4156, %v4145, 0
      %v4173 = vsel %vm4156, %v4146, 0
      %v4176 = vsel %vm4156, %v4147, 0
      %v4179 = vsel %vm4156, %v4148, 0
      %v4182 = vsel %vm4156, %v4149, 0
      %4184 = vmatprep.subr.bf16.mxu0 0
      %4185 = vmatpush1.bf16.xpose.msra.mxu0 %v4161
      %4186 = vmatprep.subr.bf16.mxu0 0
      %4187 = vmatpush1.bf16.xpose.msra.mxu0 %v4164
      %4188 = vmatprep.subr.bf16.mxu0 0
      %4189 = vmatpush1.bf16.xpose.msra.mxu0 %v4167
      %4190 = vmatprep.subr.bf16.mxu0 0
      %4191 = vmatpush1.bf16.xpose.msra.mxu0 %v4170
      %4192 = vmatprep.subr.bf16.mxu0 0
      %4193 = vmatpush1.bf16.xpose.msra.mxu0 %v4173
      %4194 = vmatprep.subr.bf16.mxu0 0
      %4195 = vmatpush1.bf16.xpose.msra.mxu0 %v4176
      %4196 = vmatprep.subr.bf16.mxu0 0
      %4197 = vmatpush1.bf16.xpose.msra.mxu0 %v4179
      %4198 = vmatprep.subr.bf16.mxu0 0
      %4199 = vmatpush1.bf16.xpose.msra.mxu0 %v4182
      %4200 = vmatprep.subr.bf16.mxu0 0
      %4201 = vmatpush1.bf16.xpose.msra.mxu0 0
      %4202 = vmatprep.subr.bf16.mxu0 0
      %4203 = vmatpush1.bf16.xpose.msra.mxu0 0
      %4204 = vmatprep.subr.bf16.mxu0 0
      %4205 = vmatpush1.bf16.xpose.msra.mxu0 0
      %4206 = vmatprep.subr.bf16.mxu0 0
      %4207 = vmatpush1.bf16.xpose.msra.mxu0 0
      %4208 = vmatprep.subr.bf16.mxu0 0
      %4209 = vmatpush1.bf16.xpose.msra.mxu0 0
      %4210 = vmatprep.subr.bf16.mxu0 0
      %4211 = vmatpush1.bf16.xpose.msra.mxu0 0
      %4212 = vmatprep.subr.bf16.mxu0 0
      %4213 = vmatpush1.bf16.xpose.msra.mxu0 0
      %4214 = vmatprep.subr.bf16.mxu0 0
      %4215 = vmatpush1.bf16.xpose.msra.mxu0 0
      %4216 = vmatprep.mubr.bf16.mxu0 0
      %4217 = vmatmul.mubr.bf16.gmra.mrb[0].mxu0 %v4158
      %v4218 = vpop.f32.mrb[0].mxu0
      %v4219 = vadd.f32 %v4154, %v4218
      %v4220 = vpop.f32.mrb[0].mxu0
      %v4221 = vpop.f32.mrb[0].mxu0
      %v4222 = vpop.f32.mrb[0].mxu0
      %4223 = vdwg.mxu0
      %vm4224 = vcmp.gt.f32.partialorder %v4219, 0.0
      %v4225 = vmul.f32 %v4219, 1.442695
      %v4226 = vpow.pop %v4225
      %v4227 = vsub.f32 %v4226, 1.0
      %v4228 = vsel %vm4224, %v4219, %v4227
      %v4229 = vld [vmem:[%s613] sm:$0xf]
      %v4230 = vsub.f32 %v4228, %v4229
      %v4231 = vand.u32 2147483647, %v4230
      %v4233 = vrot.slane %v4231, 4
      %vm4235 = vcmask 1043456
      %v4236 = vsel %vm4235, %v4228, %v4233
      %4237 = vst [vmem:[%s617] sm:$0xff] %v4236
      %p4238 = scmp.lt.s32.totalorder %s30, 1
      %s4239 = scalar_select %p4238, %s30, 1
      %s4240 = smul.addr %s4239, 8
      %s4241 = scalar_lea.vmem %s19, %s4240
      // Predicated region
      $region97: #{spatio_temporal_discriminator_forward.1} parent=95 // pred_check
        %p4242 = pneg %p457
      $region98: #{spatio_temporal_discriminator_forward.1} parent=95 // pred_check_branch
        %4244 = sbr.rel (%p4242) target = $region100
      $region99: #{spatio_temporal_discriminator_forward.1} parent=95 // pred_region
        _
      $region100: #{spatio_temporal_discriminator_forward.1} parent=95 // pred_fallthru
        _
    $region96: #{spatio_temporal_discriminator_forward.1} parent=5 // pred_fallthru
      _
    %p4245 = scmp.le.s32.totalorder 2, %s25
    // Predicated region
    $region101: #{spatio_temporal_discriminator_forward.1} parent=5 // pred_check
      %p4246 = pneg %p4245
    $region102: #{spatio_temporal_discriminator_forward.1} parent=5 // pred_check_branch
      %4248 = sbr.rel (%p4246) target = $region104
    $region103: #{spatio_temporal_discriminator_forward.1} parent=5 // pred_region
      %s4249 = ssub.s32 %s25, 2
      // Predicated region
      $region105: #{spatio_temporal_discriminator_forward.1} parent=103 // pred_check
        %p4250 = pneg %p463
      $region106: #{spatio_temporal_discriminator_forward.1} parent=103 // pred_check_branch
        %4252 = sbr.rel (%p4250) target = $region108
      $region107: #{spatio_temporal_discriminator_forward.1} parent=103 // pred_region
        %p4253 = scmp.lt.s32.totalorder %s31, 1
        %s4254 = scalar_select %p4253, %s31, 1
        %s4255 = smul.addr %s4254, 8
        %s4256 = scalar_lea.vmem %s19, %s4255
      $region108: #{spatio_temporal_discriminator_forward.1} parent=103 // pred_fallthru
        _
    $region104: #{spatio_temporal_discriminator_forward.1} parent=5 // pred_fallthru
      _
  $region6: #{spatio_temporal_discriminator_forward.1} parent=0 // loop_footer
    %s29 = sadd.s32 1, %s25
  $region7: #{spatio_temporal_discriminator_forward.1} parent=0 // loop_footer_branch
    %24 = sbr.rel target = $region3
  $region8: #{spatio_temporal_discriminator_forward.1} parent=0 // loop_exit
    _

</llo_original>
